<compile_context>
chip_gen: v6e
topology: v6e:2x2x1
jax: 0.10.0
libtpu: 0.0.40
codegen_flags: <defaults>
</compile_context>

<pallas_src>
import functools

import jax
import jax.numpy as jnp
import numpy as np
from jax import lax
from jax.experimental import pallas as pl
from jax.experimental.pallas import tpu as pltpu


# ----------------------------------------------------------------------------
# Fused whole-network kernel (one grid step == B_blk batch elements)
# ----------------------------------------------------------------------------
def ms_tcn_kernel(
    x_ref,
    pw_in_ref, pb_in_ref, pwd_ref, pbd_ref, pwf_ref, pbf_ref, pw_out_ref, pb_out_ref,
    rw_in_ref, rb_in_ref, rwd_ref, rbd_ref, rw1_ref, rb1_ref, rw_out_ref, rb_out_ref,
    o_ref,
    stack_ref,                      # (5H, B_blk*t_pad) VMEM scratch, compute dtype
    *, n_pred, n_ref_layers, n_ref_stages, hid, t_valid, t_pad, b_blk, cdt,
):
    f32 = jnp.float32
    H = hid
    TW = b_blk * t_pad

    # Per-segment time index (each batch element owns one t_pad-wide lane segment).
    t_seg = lax.broadcasted_iota(jnp.int32, (1, t_pad), 1)
    t_loc = jnp.concatenate([t_seg] * b_blk, axis=1) if b_blk > 1 else t_seg
    out_mask = (t_loc < t_valid) if t_valid < t_pad else None

    mask_cache = {}

    def tap_masks(d):
        # t_valid is folded into the right-tap mask: valid columns never read
        # padded/garbage columns, so no per-layer output masking is needed.
        if d not in mask_cache:
            mask_cache[d] = (t_loc >= d, t_loc < (t_valid - d))
        return mask_cache[d]

    def taps(h_c, d):
        lm, rm = tap_masks(d)
        left = jnp.where(lm, pltpu.roll(h_c, d, 1), 0.0)        # reads h[:, t-d]
        right = jnp.where(rm, pltpu.roll(h_c, TW - d, 1), 0.0)  # reads h[:, t+d]
        return left, right

    def mask_out(a):
        return jnp.where(out_mask, a, 0.0) if out_mask is not None else a

    def mdot(w, a):
        return jnp.dot(w, a, preferred_element_type=f32)

    def store(s, val):
        v = val.astype(o_ref.dtype)
        for b in range(b_blk):
            o_ref[s, b] = v[:, b * t_pad:(b + 1) * t_pad]

    # ---- lay the time axes of the batch block side by side: (C_in, B_blk*t_pad)
    if b_blk > 1:
        x2d = jnp.concatenate([x_ref[b] for b in range(b_blk)], axis=1)
    else:
        x2d = x_ref[0]
    x2d = x2d.astype(cdt)

    # ---------------- prediction generation stage ----------------
    h = mdot(pw_in_ref[...], x2d) + pb_in_ref[...]               # (H, TW), f32
    for i in range(n_pred):
        d1 = 2 ** (n_pred - 1 - i)
        d2 = 2 ** i
        h_c = h.astype(cdt)                                      # cast once per layer
        l1, r1 = taps(h_c, d1)
        l2, r2 = taps(h_c, d2)
        # fused dual-branch tap stack, written straight into the VMEM scratch
        stack_ref[0 * H:1 * H, :] = l1
        stack_ref[1 * H:2 * H, :] = l2
        stack_ref[2 * H:3 * H, :] = h_c
        stack_ref[3 * H:4 * H, :] = r1
        stack_ref[4 * H:5 * H, :] = r2
        y12 = mdot(pwd_ref[i], stack_ref[...]) + pbd_ref[i]      # (2H, TW) = [y1; y2]
        z = mdot(pwf_ref[i], y12.astype(cdt)) + pbf_ref[i]       # 1x1 fusion conv
        z = jnp.maximum(z, 0.0)
        # TODO(synk): dropout is identity in eval mode.
        h = h + z                                                # residual in f32
    out = mask_out(mdot(pw_out_ref[...], h.astype(cdt)) + pb_out_ref[...])
    store(0, out)

    # ---------------- refinement stages ----------------
    for s in range(n_ref_stages):
        # channel softmax of the previous stage output
        p = out - jnp.max(out, axis=0, keepdims=True)
        e = jnp.exp(p)
        denom = jnp.sum(e, axis=0, keepdims=True)
        if cdt == jnp.float32:
            p = e / denom                      # exact for the f32 reference path
        else:
            p = e * pl.reciprocal(denom, approx=True)

        h = mdot(rw_in_ref[s], p.astype(cdt)) + rb_in_ref[s]
        for l in range(n_ref_layers):
            li = s * n_ref_layers + l
            d = 2 ** l
            h_c = h.astype(cdt)
            lft, rgt = taps(h_c, d)
            stack_ref[0:H, :] = lft
            stack_ref[H:2 * H, :] = h_c
            stack_ref[2 * H:3 * H, :] = rgt
            y = jnp.maximum(mdot(rwd_ref[li], stack_ref[0:3 * H, :]) + rbd_ref[li], 0.0)
            z = mdot(rw1_ref[li], y.astype(cdt)) + rb1_ref[li]
            # TODO(synk): dropout is identity in eval mode.
            h = h + z                                            # residual in f32
        out = mask_out(mdot(rw_out_ref[s], h.astype(cdt)) + rb_out_ref[s])
        store(s + 1, out)


# ----------------------------------------------------------------------------
# BlockSpec / packing helpers
# ----------------------------------------------------------------------------
def _full_spec(arr):
    zeros = (0,) * arr.ndim
    return pl.BlockSpec(arr.shape, lambda nb, _z=zeros: _z)


def _pack_k3(w3):
    """(3, C_out, C_in) -> (C_out, 3*C_in): columns ordered [left | center | right]."""
    k, cout, cin = w3.shape
    return jnp.transpose(w3, (1, 0, 2)).reshape(cout, k * cin)


def _pack_dual(wd1, wd2):
    """Two (3, H, H) dilated-conv weights -> one (2H, 5H) weight matching the
    stack layout [left_d1 | left_d2 | center | right_d1 | right_d2]."""
    h = wd1.shape[1]
    z = jnp.zeros((h, h), wd1.dtype)
    top = jnp.concatenate([wd1[0], z, wd1[1], wd1[2], z], axis=1)   # y1 rows
    bot = jnp.concatenate([z, wd2[0], wd2[1], z, wd2[2]], axis=1)   # y2 rows
    return jnp.concatenate([top, bot], axis=0)


def _stack(lst, trailing_shape):
    if lst:
        return jnp.stack(lst)
    # dummy (never indexed) so zero-layer / zero-stage configs still compile
    return jnp.zeros((1,) + tuple(trailing_shape), jnp.float32)


# ----------------------------------------------------------------------------
# Deterministic parameter initialization (PyTorch Conv1d-like uniform init)
# ----------------------------------------------------------------------------
def _conv_init(key, cout, cin, ksize):
    kw, kb = jax.random.split(key)
    bound = 1.0 / np.sqrt(cin * ksize)
    if ksize == 1:
        w = jax.random.uniform(kw, (cout, cin), jnp.float32, -bound, bound)
    else:
        w = jax.random.uniform(kw, (ksize, cout, cin), jnp.float32, -bound, bound)
    b = jax.random.uniform(kb, (cout, 1), jnp.float32, -bound, bound)
    return w, b


def init_params(key, in_ch, hid, out_ch, n_pred, n_ref_layers, n_ref_stages):
    n_keys = 2 + 3 * n_pred + n_ref_stages * (2 + 2 * n_ref_layers)
    keys = iter(jax.random.split(key, max(n_keys, 2)))

    pg = {}
    pg["w_in"], pg["b_in"] = _conv_init(next(keys), hid, in_ch, 1)
    pg["dual"] = []
    for _ in range(n_pred):
        lp = {}
        lp["wd1"], lp["bd1"] = _conv_init(next(keys), hid, hid, 3)
        lp["wd2"], lp["bd2"] = _conv_init(next(keys), hid, hid, 3)
        lp["wf"], lp["bf"] = _conv_init(next(keys), hid, 2 * hid, 1)
        pg["dual"].append(lp)
    pg["w_out"], pg["b_out"] = _conv_init(next(keys), out_ch, hid, 1)

    ref = []
    for _ in range(n_ref_stages):
        sp = {}
        sp["w_in"], sp["b_in"] = _conv_init(next(keys), hid, out_ch, 1)
        sp["layers"] = []
        for _ in range(n_ref_layers):
            lp = {}
            lp["wd"], lp["bd"] = _conv_init(next(keys), hid, hid, 3)
            lp["w1"], lp["b1"] = _conv_init(next(keys), hid, hid, 1)
            sp["layers"].append(lp)
        sp["w_out"], sp["b_out"] = _conv_init(next(keys), out_ch, hid, 1)
        ref.append(sp)

    return {"pg": pg, "ref": ref}


# ----------------------------------------------------------------------------
# Full forward pass
# ----------------------------------------------------------------------------
@functools.partial(jax.jit, static_argnames=("compute_dtype",))
def multi_stage_refined_tcn(params, x, *, compute_dtype=jnp.float32):
    N, in_ch, T = x.shape
    pg, ref = params["pg"], params["ref"]
    n_pred = len(pg["dual"])
    n_stages = len(ref)
    n_ref_layers = len(ref[0]["layers"]) if n_stages else 0
    hid = pg["w_in"].shape[0]
    out_ch = pg["w_out"].shape[0]

    # Lane-dense time axis (multiple of 128) + batch blocking for short T:
    # B_blk batch elements per grid step, their time axes laid side by side so
    # every matmul sees B_blk*t_pad lanes.
    t_pad = ((T + 127) // 128) * 128
    b_blk = max(1, min(N, 512 // t_pad))
    n_pad = ((N + b_blk - 1) // b_blk) * b_blk
    x_p = jnp.pad(x, ((0, n_pad - N), (0, 0), (0, t_pad - T)))

    wc = lambda w: w.astype(compute_dtype)   # weights in compute dtype; biases f32

    weights = [
        # prediction generation stage
        wc(pg["w_in"]), pg["b_in"],
        wc(_stack([_pack_dual(lp["wd1"], lp["wd2"]) for lp in pg["dual"]],
                  (2 * hid, 5 * hid))),
        _stack([jnp.concatenate([lp["bd1"], lp["bd2"]], axis=0) for lp in pg["dual"]],
               (2 * hid, 1)),
        wc(_stack([lp["wf"] for lp in pg["dual"]], (hid, 2 * hid))),
        _stack([lp["bf"] for lp in pg["dual"]], (hid, 1)),
        wc(pg["w_out"]), pg["b_out"],
        # refinement stages (stage axis / stage*layer axis stacked)
        wc(_stack([sp["w_in"] for sp in ref], (hid, out_ch))),
        _stack([sp["b_in"] for sp in ref], (hid, 1)),
        wc(_stack([_pack_k3(lp["wd"]) for sp in ref for lp in sp["layers"]],
                  (hid, 3 * hid))),
        _stack([lp["bd"] for sp in ref for lp in sp["layers"]], (hid, 1)),
        wc(_stack([lp["w1"] for sp in ref for lp in sp["layers"]], (hid, hid))),
        _stack([lp["b1"] for sp in ref for lp in sp["layers"]], (hid, 1)),
        wc(_stack([sp["w_out"] for sp in ref], (out_ch, hid))),
        _stack([sp["b_out"] for sp in ref], (out_ch, 1)),
    ]

    tw = b_blk * t_pad
    cdt_size = jnp.dtype(compute_dtype).itemsize
    # VMEM budget: 2x input block + 2x output block + 2x weights (double-buffered)
    # + tap-stack scratch + margin for live per-layer temporaries.
    vmem_est = (
        2 * b_blk * in_ch * t_pad * x.dtype.itemsize
        + 2 * (n_stages + 1) * b_blk * out_ch * t_pad * x.dtype.itemsize
        + 2 * sum(int(w.size) * w.dtype.itemsize for w in weights)
        + 5 * hid * tw * cdt_size
        + 16 * hid * tw * 4
        + (2 << 20))
    vmem_limit = int(min(max(vmem_est, 16 << 20), 64 << 20))

    kern = functools.partial(
        ms_tcn_kernel, n_pred=n_pred, n_ref_layers=n_ref_layers,
        n_ref_stages=n_stages, hid=hid, t_valid=T, t_pad=t_pad,
        b_blk=b_blk, cdt=compute_dtype)

    out = pl.pallas_call(
        kern,
        out_shape=jax.ShapeDtypeStruct((n_stages + 1, n_pad, out_ch, t_pad), x.dtype),
        grid=(n_pad // b_blk,),
        in_specs=[pl.BlockSpec((b_blk, in_ch, t_pad), lambda nb: (nb, 0, 0))]
                 + [_full_spec(w) for w in weights],
        out_specs=pl.BlockSpec((n_stages + 1, b_blk, out_ch, t_pad),
                               lambda nb: (0, nb, 0, 0)),
        scratch_shapes=[pltpu.VMEM((5 * hid, tw), compute_dtype)],
        compiler_params=pltpu.CompilerParams(
            dimension_semantics=("parallel",),
            vmem_limit_bytes=vmem_limit),
    )(x_p, *weights)

    # kernel already wrote the stage-major layout; just strip batch/time padding
    return out[:, :N, :, :T]


# ----------------------------------------------------------------------------
if __name__ == "__main__":
    batch = 2
    in_channels = 16
    hidden_channels = 32
    out_channels = 8
    n_prediction_layers = 3
    n_refinement_layers = 2
    n_refinement_stages = 2
    T = 16

    key = jax.random.PRNGKey(0)
    kx, kp = jax.random.split(key)
    x = jax.random.normal(kx, (batch, in_channels, T), jnp.float32)

    params = init_params(kp, in_channels, hidden_channels, out_channels,
                         n_prediction_layers, n_refinement_layers, n_refinement_stages)

    # f32 path (reference-accurate, exact softmax divide)
    outs = jax.block_until_ready(multi_stage_refined_tcn(params, x))
    expected = (n_refinement_stages + 1, batch, out_channels, T)
    assert outs.shape == expected, (outs.shape, expected)
    assert bool(jnp.all(jnp.isfinite(outs)))

    # bf16 MXU path (v6e / v7x performance path) — loose agreement with f32
    outs_bf16 = jax.block_until_ready(
        multi_stage_refined_tcn(params, x, compute_dtype=jnp.bfloat16))
    assert outs_bf16.shape == expected
    assert bool(jnp.all(jnp.isfinite(outs_bf16)))
    max_err = float(jnp.max(jnp.abs(outs_bf16 - outs)))
    assert max_err < 1.0, max_err

    print("KERNEL_OK")
</pallas_src>

<mosaic_0001>
module attributes {stable_mosaic.version = 11 : i64} {
  func.func @ms_tcn_kernel(%arg0: i32, %arg1: memref<2x16x128xf32, #tpu.memory_space<vmem>>, %arg2: memref<32x16xf32, #tpu.memory_space<vmem>>, %arg3: memref<32x1xf32, #tpu.memory_space<vmem>>, %arg4: memref<3x64x160xf32, #tpu.memory_space<vmem>>, %arg5: memref<3x64x1xf32, #tpu.memory_space<vmem>>, %arg6: memref<3x32x64xf32, #tpu.memory_space<vmem>>, %arg7: memref<3x32x1xf32, #tpu.memory_space<vmem>>, %arg8: memref<8x32xf32, #tpu.memory_space<vmem>>, %arg9: memref<8x1xf32, #tpu.memory_space<vmem>>, %arg10: memref<2x32x8xf32, #tpu.memory_space<vmem>>, %arg11: memref<2x32x1xf32, #tpu.memory_space<vmem>>, %arg12: memref<4x32x96xf32, #tpu.memory_space<vmem>>, %arg13: memref<4x32x1xf32, #tpu.memory_space<vmem>>, %arg14: memref<4x32x32xf32, #tpu.memory_space<vmem>>, %arg15: memref<4x32x1xf32, #tpu.memory_space<vmem>>, %arg16: memref<2x8x32xf32, #tpu.memory_space<vmem>>, %arg17: memref<2x8x1xf32, #tpu.memory_space<vmem>>, %arg18: memref<3x2x8x128xf32, #tpu.memory_space<vmem>>, %arg19: memref<160x256xf32, #tpu.memory_space<vmem>>) attributes {dimension_semantics = [#tpu.dimension_semantics<parallel>], iteration_bounds = array<i64: 1>, scalar_prefetch = 0 : i64, scratch_operands = 1 : i64, tpu.core_type = #tpu.core_type<tc>, window_params = [{transform_indices = @transform_0, window_bounds = array<i64: 2, 16, 128>}, {pipeline_mode = #tpu.pipeline_mode<synchronous>, transform_indices = @transform_1, window_bounds = array<i64: 32, 16>}, {pipeline_mode = #tpu.pipeline_mode<synchronous>, transform_indices = @transform_2, window_bounds = array<i64: 32, 1>}, {pipeline_mode = #tpu.pipeline_mode<synchronous>, transform_indices = @transform_3, window_bounds = array<i64: 3, 64, 160>}, {pipeline_mode = #tpu.pipeline_mode<synchronous>, transform_indices = @transform_4, window_bounds = array<i64: 3, 64, 1>}, {pipeline_mode = #tpu.pipeline_mode<synchronous>, transform_indices = @transform_5, window_bounds = array<i64: 3, 32, 64>}, {pipeline_mode = #tpu.pipeline_mode<synchronous>, transform_indices = @transform_6, window_bounds = array<i64: 3, 32, 1>}, {pipeline_mode = #tpu.pipeline_mode<synchronous>, transform_indices = @transform_7, window_bounds = array<i64: 8, 32>}, {pipeline_mode = #tpu.pipeline_mode<synchronous>, transform_indices = @transform_8, window_bounds = array<i64: 8, 1>}, {pipeline_mode = #tpu.pipeline_mode<synchronous>, transform_indices = @transform_9, window_bounds = array<i64: 2, 32, 8>}, {pipeline_mode = #tpu.pipeline_mode<synchronous>, transform_indices = @transform_10, window_bounds = array<i64: 2, 32, 1>}, {pipeline_mode = #tpu.pipeline_mode<synchronous>, transform_indices = @transform_11, window_bounds = array<i64: 4, 32, 96>}, {pipeline_mode = #tpu.pipeline_mode<synchronous>, transform_indices = @transform_12, window_bounds = array<i64: 4, 32, 1>}, {pipeline_mode = #tpu.pipeline_mode<synchronous>, transform_indices = @transform_13, window_bounds = array<i64: 4, 32, 32>}, {pipeline_mode = #tpu.pipeline_mode<synchronous>, transform_indices = @transform_14, window_bounds = array<i64: 4, 32, 1>}, {pipeline_mode = #tpu.pipeline_mode<synchronous>, transform_indices = @transform_15, window_bounds = array<i64: 2, 8, 32>}, {pipeline_mode = #tpu.pipeline_mode<synchronous>, transform_indices = @transform_16, window_bounds = array<i64: 2, 8, 1>}, {transform_indices = @transform_17, window_bounds = array<i64: 3, 2, 8, 128>}]} {
    %0 = tpu.iota {dimensions = array<i32: 1>} : vector<1x128xi32>
    %1 = tpu.concatenate %0, %0 in 1 : vector<1x128xi32>, vector<1x128xi32> -> vector<1x256xi32>
    %c16_i32 = arith.constant 16 : i32
    %2 = vector.broadcast %c16_i32 : i32 to vector<1x256xi32>
    %3 = arith.cmpi slt, %1, %2 : vector<1x256xi32>
    %c0 = arith.constant 0 : index
    %c0_0 = arith.constant 0 : index
    %c0_1 = arith.constant 0 : index
    %4 = vector.load %arg1[%c0, %c0_0, %c0_1] : memref<2x16x128xf32, #tpu.memory_space<vmem>>, vector<1x16x128xf32>
    %5 = vector.shape_cast %4 : vector<1x16x128xf32> to vector<16x128xf32>
    %c1 = arith.constant 1 : index
    %c0_2 = arith.constant 0 : index
    %c0_3 = arith.constant 0 : index
    %6 = vector.load %arg1[%c1, %c0_2, %c0_3] : memref<2x16x128xf32, #tpu.memory_space<vmem>>, vector<1x16x128xf32>
    %7 = vector.shape_cast %6 : vector<1x16x128xf32> to vector<16x128xf32>
    %8 = tpu.concatenate %5, %7 in 1 : vector<16x128xf32>, vector<16x128xf32> -> vector<16x256xf32>
    %c0_4 = arith.constant 0 : index
    %c0_5 = arith.constant 0 : index
    %9 = vector.load %arg2[%c0_4, %c0_5] : memref<32x16xf32, #tpu.memory_space<vmem>>, vector<32x16xf32>
    %cst = arith.constant dense<0.000000e+00> : vector<32x256xf32>
    %10 = tpu.matmul %9, %8, %cst {dimension_numbers = #tpu.dot_dimension_numbers<[1], [0], [0], [1], [0, 0, 1, 1], [], []>} : vector<32x16xf32>, vector<16x256xf32>, vector<32x256xf32> -> vector<32x256xf32>
    %c0_6 = arith.constant 0 : index
    %c0_7 = arith.constant 0 : index
    %11 = vector.load %arg3[%c0_6, %c0_7] : memref<32x1xf32, #tpu.memory_space<vmem>>, vector<32x1xf32>
    %12 = vector.broadcast %11 : vector<32x1xf32> to vector<32x256xf32>
    %13 = arith.addf %10, %12 : vector<32x256xf32>
    %c4_i32 = arith.constant 4 : i32
    %14 = vector.broadcast %c4_i32 : i32 to vector<1x256xi32>
    %15 = arith.cmpi sge, %1, %14 : vector<1x256xi32>
    %c12_i32 = arith.constant 12 : i32
    %16 = vector.broadcast %c12_i32 : i32 to vector<1x256xi32>
    %17 = arith.cmpi slt, %1, %16 : vector<1x256xi32>
    %c4_i32_8 = arith.constant 4 : i32
    %18 = tpu.dynamic_rotate %13 by %c4_i32_8 dim 1 : vector<32x256xf32>, i32 -> vector<32x256xf32>
    %cst_9 = arith.constant 0.000000e+00 : f32
    %19 = vector.shape_cast %15 : vector<1x256xi1> to vector<1x256xi1>
    %20 = vector.broadcast %19 : vector<1x256xi1> to vector<32x256xi1>
    %21 = vector.broadcast %cst_9 : f32 to vector<32x256xf32>
    %22 = arith.select %20, %18, %21 : vector<32x256xi1>, vector<32x256xf32>
    %c252_i32 = arith.constant 252 : i32
    %23 = tpu.dynamic_rotate %13 by %c252_i32 dim 1 : vector<32x256xf32>, i32 -> vector<32x256xf32>
    %cst_10 = arith.constant 0.000000e+00 : f32
    %24 = vector.shape_cast %17 : vector<1x256xi1> to vector<1x256xi1>
    %25 = vector.broadcast %24 : vector<1x256xi1> to vector<32x256xi1>
    %26 = vector.broadcast %cst_10 : f32 to vector<32x256xf32>
    %27 = arith.select %25, %23, %26 : vector<32x256xi1>, vector<32x256xf32>
    %c1_i32 = arith.constant 1 : i32
    %28 = vector.broadcast %c1_i32 : i32 to vector<1x256xi32>
    %29 = arith.cmpi sge, %1, %28 : vector<1x256xi32>
    %c15_i32 = arith.constant 15 : i32
    %30 = vector.broadcast %c15_i32 : i32 to vector<1x256xi32>
    %31 = arith.cmpi slt, %1, %30 : vector<1x256xi32>
    %c1_i32_11 = arith.constant 1 : i32
    %32 = tpu.dynamic_rotate %13 by %c1_i32_11 dim 1 : vector<32x256xf32>, i32 -> vector<32x256xf32>
    %cst_12 = arith.constant 0.000000e+00 : f32
    %33 = vector.shape_cast %29 : vector<1x256xi1> to vector<1x256xi1>
    %34 = vector.broadcast %33 : vector<1x256xi1> to vector<32x256xi1>
    %35 = vector.broadcast %cst_12 : f32 to vector<32x256xf32>
    %36 = arith.select %34, %32, %35 : vector<32x256xi1>, vector<32x256xf32>
    %c255_i32 = arith.constant 255 : i32
    %37 = tpu.dynamic_rotate %13 by %c255_i32 dim 1 : vector<32x256xf32>, i32 -> vector<32x256xf32>
    %cst_13 = arith.constant 0.000000e+00 : f32
    %38 = vector.shape_cast %31 : vector<1x256xi1> to vector<1x256xi1>
    %39 = vector.broadcast %38 : vector<1x256xi1> to vector<32x256xi1>
    %40 = vector.broadcast %cst_13 : f32 to vector<32x256xf32>
    %41 = arith.select %39, %37, %40 : vector<32x256xi1>, vector<32x256xf32>
    %c0_14 = arith.constant 0 : index
    %c0_15 = arith.constant 0 : index
    %42 = vector.load %arg19[%c0_14, %c0_15] : memref<160x256xf32, #tpu.memory_space<vmem>>, vector<32x256xf32>
    tpu.vector_store %arg19[%c0_14, %c0_15], %22 {strides = array<i32>} : memref<160x256xf32, #tpu.memory_space<vmem>>, vector<32x256xf32>,
    %c32 = arith.constant 32 : index
    %c0_16 = arith.constant 0 : index
    %43 = vector.load %arg19[%c32, %c0_16] : memref<160x256xf32, #tpu.memory_space<vmem>>, vector<32x256xf32>
    tpu.vector_store %arg19[%c32, %c0_16], %36 {strides = array<i32>} : memref<160x256xf32, #tpu.memory_space<vmem>>, vector<32x256xf32>,
    %c64 = arith.constant 64 : index
    %c0_17 = arith.constant 0 : index
    %44 = vector.load %arg19[%c64, %c0_17] : memref<160x256xf32, #tpu.memory_space<vmem>>, vector<32x256xf32>
    tpu.vector_store %arg19[%c64, %c0_17], %13 {strides = array<i32>} : memref<160x256xf32, #tpu.memory_space<vmem>>, vector<32x256xf32>,
    %c96 = arith.constant 96 : index
    %c0_18 = arith.constant 0 : index
    %45 = vector.load %arg19[%c96, %c0_18] : memref<160x256xf32, #tpu.memory_space<vmem>>, vector<32x256xf32>
    tpu.vector_store %arg19[%c96, %c0_18], %27 {strides = array<i32>} : memref<160x256xf32, #tpu.memory_space<vmem>>, vector<32x256xf32>,
    %c128 = arith.constant 128 : index
    %c0_19 = arith.constant 0 : index
    %46 = vector.load %arg19[%c128, %c0_19] : memref<160x256xf32, #tpu.memory_space<vmem>>, vector<32x256xf32>
    tpu.vector_store %arg19[%c128, %c0_19], %41 {strides = array<i32>} : memref<160x256xf32, #tpu.memory_space<vmem>>, vector<32x256xf32>,
    %c0_20 = arith.constant 0 : index
    %c0_21 = arith.constant 0 : index
    %c0_22 = arith.constant 0 : index
    %47 = vector.load %arg4[%c0_20, %c0_21, %c0_22] : memref<3x64x160xf32, #tpu.memory_space<vmem>>, vector<1x64x160xf32>
    %48 = vector.shape_cast %47 : vector<1x64x160xf32> to vector<64x160xf32>
    %c0_23 = arith.constant 0 : index
    %c0_24 = arith.constant 0 : index
    %49 = vector.load %arg19[%c0_23, %c0_24] : memref<160x256xf32, #tpu.memory_space<vmem>>, vector<160x256xf32>
    %cst_25 = arith.constant dense<0.000000e+00> : vector<64x256xf32>
    %50 = tpu.matmul %48, %49, %cst_25 {dimension_numbers = #tpu.dot_dimension_numbers<[1], [0], [0], [1], [0, 0, 1, 1], [], []>} : vector<64x160xf32>, vector<160x256xf32>, vector<64x256xf32> -> vector<64x256xf32>
    %c0_26 = arith.constant 0 : index
    %c0_27 = arith.constant 0 : index
    %c0_28 = arith.constant 0 : index
    %51 = vector.load %arg5[%c0_26, %c0_27, %c0_28] : memref<3x64x1xf32, #tpu.memory_space<vmem>>, vector<1x64x1xf32>
    %52 = vector.shape_cast %51 : vector<1x64x1xf32> to vector<64x1xf32>
    %53 = vector.broadcast %52 : vector<64x1xf32> to vector<64x256xf32>
    %54 = arith.addf %50, %53 : vector<64x256xf32>
    %c0_29 = arith.constant 0 : index
    %c0_30 = arith.constant 0 : index
    %c0_31 = arith.constant 0 : index
    %55 = vector.load %arg6[%c0_29, %c0_30, %c0_31] : memref<3x32x64xf32, #tpu.memory_space<vmem>>, vector<1x32x64xf32>
    %56 = vector.shape_cast %55 : vector<1x32x64xf32> to vector<32x64xf32>
    %cst_32 = arith.constant dense<0.000000e+00> : vector<32x256xf32>
    %57 = tpu.matmul %56, %54, %cst_32 {dimension_numbers = #tpu.dot_dimension_numbers<[1], [0], [0], [1], [0, 0, 1, 1], [], []>} : vector<32x64xf32>, vector<64x256xf32>, vector<32x256xf32> -> vector<32x256xf32>
    %c0_33 = arith.constant 0 : index
    %c0_34 = arith.constant 0 : index
    %c0_35 = arith.constant 0 : index
    %58 = vector.load %arg7[%c0_33, %c0_34, %c0_35] : memref<3x32x1xf32, #tpu.memory_space<vmem>>, vector<1x32x1xf32>
    %59 = vector.shape_cast %58 : vector<1x32x1xf32> to vector<32x1xf32>
    %60 = vector.broadcast %59 : vector<32x1xf32> to vector<32x256xf32>
    %61 = arith.addf %57, %60 : vector<32x256xf32>
    %cst_36 = arith.constant 0.000000e+00 : f32
    %62 = vector.broadcast %cst_36 : f32 to vector<32x256xf32>
    %63 = arith.maximumf %61, %62 : vector<32x256xf32>
    %64 = arith.addf %13, %63 : vector<32x256xf32>
    %c2_i32 = arith.constant 2 : i32
    %65 = vector.broadcast %c2_i32 : i32 to vector<1x256xi32>
    %66 = arith.cmpi sge, %1, %65 : vector<1x256xi32>
    %c14_i32 = arith.constant 14 : i32
    %67 = vector.broadcast %c14_i32 : i32 to vector<1x256xi32>
    %68 = arith.cmpi slt, %1, %67 : vector<1x256xi32>
    %c2_i32_37 = arith.constant 2 : i32
    %69 = tpu.dynamic_rotate %64 by %c2_i32_37 dim 1 : vector<32x256xf32>, i32 -> vector<32x256xf32>
    %cst_38 = arith.constant 0.000000e+00 : f32
    %70 = vector.shape_cast %66 : vector<1x256xi1> to vector<1x256xi1>
    %71 = vector.broadcast %70 : vector<1x256xi1> to vector<32x256xi1>
    %72 = vector.broadcast %cst_38 : f32 to vector<32x256xf32>
    %73 = arith.select %71, %69, %72 : vector<32x256xi1>, vector<32x256xf32>
    %c254_i32 = arith.constant 254 : i32
    %74 = tpu.dynamic_rotate %64 by %c254_i32 dim 1 : vector<32x256xf32>, i32 -> vector<32x256xf32>
    %cst_39 = arith.constant 0.000000e+00 : f32
    %75 = vector.shape_cast %68 : vector<1x256xi1> to vector<1x256xi1>
    %76 = vector.broadcast %75 : vector<1x256xi1> to vector<32x256xi1>
    %77 = vector.broadcast %cst_39 : f32 to vector<32x256xf32>
    %78 = arith.select %76, %74, %77 : vector<32x256xi1>, vector<32x256xf32>
    %c2_i32_40 = arith.constant 2 : i32
    %79 = tpu.dynamic_rotate %64 by %c2_i32_40 dim 1 : vector<32x256xf32>, i32 -> vector<32x256xf32>
    %cst_41 = arith.constant 0.000000e+00 : f32
    %80 = vector.shape_cast %66 : vector<1x256xi1> to vector<1x256xi1>
    %81 = vector.broadcast %80 : vector<1x256xi1> to vector<32x256xi1>
    %82 = vector.broadcast %cst_41 : f32 to vector<32x256xf32>
    %83 = arith.select %81, %79, %82 : vector<32x256xi1>, vector<32x256xf32>
    %c254_i32_42 = arith.constant 254 : i32
    %84 = tpu.dynamic_rotate %64 by %c254_i32_42 dim 1 : vector<32x256xf32>, i32 -> vector<32x256xf32>
    %cst_43 = arith.constant 0.000000e+00 : f32
    %85 = vector.shape_cast %68 : vector<1x256xi1> to vector<1x256xi1>
    %86 = vector.broadcast %85 : vector<1x256xi1> to vector<32x256xi1>
    %87 = vector.broadcast %cst_43 : f32 to vector<32x256xf32>
    %88 = arith.select %86, %84, %87 : vector<32x256xi1>, vector<32x256xf32>
    %c0_44 = arith.constant 0 : index
    %c0_45 = arith.constant 0 : index
    %89 = vector.load %arg19[%c0_44, %c0_45] : memref<160x256xf32, #tpu.memory_space<vmem>>, vector<32x256xf32>
    tpu.vector_store %arg19[%c0_44, %c0_45], %73 {strides = array<i32>} : memref<160x256xf32, #tpu.memory_space<vmem>>, vector<32x256xf32>,
    %c32_46 = arith.constant 32 : index
    %c0_47 = arith.constant 0 : index
    %90 = vector.load %arg19[%c32_46, %c0_47] : memref<160x256xf32, #tpu.memory_space<vmem>>, vector<32x256xf32>
    tpu.vector_store %arg19[%c32_46, %c0_47], %83 {strides = array<i32>} : memref<160x256xf32, #tpu.memory_space<vmem>>, vector<32x256xf32>,
    %c64_48 = arith.constant 64 : index
    %c0_49 = arith.constant 0 : index
    %91 = vector.load %arg19[%c64_48, %c0_49] : memref<160x256xf32, #tpu.memory_space<vmem>>, vector<32x256xf32>
    tpu.vector_store %arg19[%c64_48, %c0_49], %64 {strides = array<i32>} : memref<160x256xf32, #tpu.memory_space<vmem>>, vector<32x256xf32>,
    %c96_50 = arith.constant 96 : index
    %c0_51 = arith.constant 0 : index
    %92 = vector.load %arg19[%c96_50, %c0_51] : memref<160x256xf32, #tpu.memory_space<vmem>>, vector<32x256xf32>
    tpu.vector_store %arg19[%c96_50, %c0_51], %78 {strides = array<i32>} : memref<160x256xf32, #tpu.memory_space<vmem>>, vector<32x256xf32>,
    %c128_52 = arith.constant 128 : index
    %c0_53 = arith.constant 0 : index
    %93 = vector.load %arg19[%c128_52, %c0_53] : memref<160x256xf32, #tpu.memory_space<vmem>>, vector<32x256xf32>
    tpu.vector_store %arg19[%c128_52, %c0_53], %88 {strides = array<i32>} : memref<160x256xf32, #tpu.memory_space<vmem>>, vector<32x256xf32>,
    %c1_54 = arith.constant 1 : index
    %c0_55 = arith.constant 0 : index
    %c0_56 = arith.constant 0 : index
    %94 = vector.load %arg4[%c1_54, %c0_55, %c0_56] : memref<3x64x160xf32, #tpu.memory_space<vmem>>, vector<1x64x160xf32>
    %95 = vector.shape_cast %94 : vector<1x64x160xf32> to vector<64x160xf32>
    %c0_57 = arith.constant 0 : index
    %c0_58 = arith.constant 0 : index
    %96 = vector.load %arg19[%c0_57, %c0_58] : memref<160x256xf32, #tpu.memory_space<vmem>>, vector<160x256xf32>
    %cst_59 = arith.constant dense<0.000000e+00> : vector<64x256xf32>
    %97 = tpu.matmul %95, %96, %cst_59 {dimension_numbers = #tpu.dot_dimension_numbers<[1], [0], [0], [1], [0, 0, 1, 1], [], []>} : vector<64x160xf32>, vector<160x256xf32>, vector<64x256xf32> -> vector<64x256xf32>
    %c1_60 = arith.constant 1 : index
    %c0_61 = arith.constant 0 : index
    %c0_62 = arith.constant 0 : index
    %98 = vector.load %arg5[%c1_60, %c0_61, %c0_62] : memref<3x64x1xf32, #tpu.memory_space<vmem>>, vector<1x64x1xf32>
    %99 = vector.shape_cast %98 : vector<1x64x1xf32> to vector<64x1xf32>
    %100 = vector.broadcast %99 : vector<64x1xf32> to vector<64x256xf32>
    %101 = arith.addf %97, %100 : vector<64x256xf32>
    %c1_63 = arith.constant 1 : index
    %c0_64 = arith.constant 0 : index
    %c0_65 = arith.constant 0 : index
    %102 = vector.load %arg6[%c1_63, %c0_64, %c0_65] : memref<3x32x64xf32, #tpu.memory_space<vmem>>, vector<1x32x64xf32>
    %103 = vector.shape_cast %102 : vector<1x32x64xf32> to vector<32x64xf32>
    %cst_66 = arith.constant dense<0.000000e+00> : vector<32x256xf32>
    %104 = tpu.matmul %103, %101, %cst_66 {dimension_numbers = #tpu.dot_dimension_numbers<[1], [0], [0], [1], [0, 0, 1, 1], [], []>} : vector<32x64xf32>, vector<64x256xf32>, vector<32x256xf32> -> vector<32x256xf32>
    %c1_67 = arith.constant 1 : index
    %c0_68 = arith.constant 0 : index
    %c0_69 = arith.constant 0 : index
    %105 = vector.load %arg7[%c1_67, %c0_68, %c0_69] : memref<3x32x1xf32, #tpu.memory_space<vmem>>, vector<1x32x1xf32>
    %106 = vector.shape_cast %105 : vector<1x32x1xf32> to vector<32x1xf32>
    %107 = vector.broadcast %106 : vector<32x1xf32> to vector<32x256xf32>
    %108 = arith.addf %104, %107 : vector<32x256xf32>
    %cst_70 = arith.constant 0.000000e+00 : f32
    %109 = vector.broadcast %cst_70 : f32 to vector<32x256xf32>
    %110 = arith.maximumf %108, %109 : vector<32x256xf32>
    %111 = arith.addf %64, %110 : vector<32x256xf32>
    %c1_i32_71 = arith.constant 1 : i32
    %112 = tpu.dynamic_rotate %111 by %c1_i32_71 dim 1 : vector<32x256xf32>, i32 -> vector<32x256xf32>
    %cst_72 = arith.constant 0.000000e+00 : f32
    %113 = vector.shape_cast %29 : vector<1x256xi1> to vector<1x256xi1>
    %114 = vector.broadcast %113 : vector<1x256xi1> to vector<32x256xi1>
    %115 = vector.broadcast %cst_72 : f32 to vector<32x256xf32>
    %116 = arith.select %114, %112, %115 : vector<32x256xi1>, vector<32x256xf32>
    %c255_i32_73 = arith.constant 255 : i32
    %117 = tpu.dynamic_rotate %111 by %c255_i32_73 dim 1 : vector<32x256xf32>, i32 -> vector<32x256xf32>
    %cst_74 = arith.constant 0.000000e+00 : f32
    %118 = vector.shape_cast %31 : vector<1x256xi1> to vector<1x256xi1>
    %119 = vector.broadcast %118 : vector<1x256xi1> to vector<32x256xi1>
    %120 = vector.broadcast %cst_74 : f32 to vector<32x256xf32>
    %121 = arith.select %119, %117, %120 : vector<32x256xi1>, vector<32x256xf32>
    %c4_i32_75 = arith.constant 4 : i32
    %122 = tpu.dynamic_rotate %111 by %c4_i32_75 dim 1 : vector<32x256xf32>, i32 -> vector<32x256xf32>
    %cst_76 = arith.constant 0.000000e+00 : f32
    %123 = vector.shape_cast %15 : vector<1x256xi1> to vector<1x256xi1>
    %124 = vector.broadcast %123 : vector<1x256xi1> to vector<32x256xi1>
    %125 = vector.broadcast %cst_76 : f32 to vector<32x256xf32>
    %126 = arith.select %124, %122, %125 : vector<32x256xi1>, vector<32x256xf32>
    %c252_i32_77 = arith.constant 252 : i32
    %127 = tpu.dynamic_rotate %111 by %c252_i32_77 dim 1 : vector<32x256xf32>, i32 -> vector<32x256xf32>
    %cst_78 = arith.constant 0.000000e+00 : f32
    %128 = vector.shape_cast %17 : vector<1x256xi1> to vector<1x256xi1>
    %129 = vector.broadcast %128 : vector<1x256xi1> to vector<32x256xi1>
    %130 = vector.broadcast %cst_78 : f32 to vector<32x256xf32>
    %131 = arith.select %129, %127, %130 : vector<32x256xi1>, vector<32x256xf32>
    %c0_79 = arith.constant 0 : index
    %c0_80 = arith.constant 0 : index
    %132 = vector.load %arg19[%c0_79, %c0_80] : memref<160x256xf32, #tpu.memory_space<vmem>>, vector<32x256xf32>
    tpu.vector_store %arg19[%c0_79, %c0_80], %116 {strides = array<i32>} : memref<160x256xf32, #tpu.memory_space<vmem>>, vector<32x256xf32>,
    %c32_81 = arith.constant 32 : index
    %c0_82 = arith.constant 0 : index
    %133 = vector.load %arg19[%c32_81, %c0_82] : memref<160x256xf32, #tpu.memory_space<vmem>>, vector<32x256xf32>
    tpu.vector_store %arg19[%c32_81, %c0_82], %126 {strides = array<i32>} : memref<160x256xf32, #tpu.memory_space<vmem>>, vector<32x256xf32>,
    %c64_83 = arith.constant 64 : index
    %c0_84 = arith.constant 0 : index
    %134 = vector.load %arg19[%c64_83, %c0_84] : memref<160x256xf32, #tpu.memory_space<vmem>>, vector<32x256xf32>
    tpu.vector_store %arg19[%c64_83, %c0_84], %111 {strides = array<i32>} : memref<160x256xf32, #tpu.memory_space<vmem>>, vector<32x256xf32>,
    %c96_85 = arith.constant 96 : index
    %c0_86 = arith.constant 0 : index
    %135 = vector.load %arg19[%c96_85, %c0_86] : memref<160x256xf32, #tpu.memory_space<vmem>>, vector<32x256xf32>
    tpu.vector_store %arg19[%c96_85, %c0_86], %121 {strides = array<i32>} : memref<160x256xf32, #tpu.memory_space<vmem>>, vector<32x256xf32>,
    %c128_87 = arith.constant 128 : index
    %c0_88 = arith.constant 0 : index
    %136 = vector.load %arg19[%c128_87, %c0_88] : memref<160x256xf32, #tpu.memory_space<vmem>>, vector<32x256xf32>
    tpu.vector_store %arg19[%c128_87, %c0_88], %131 {strides = array<i32>} : memref<160x256xf32, #tpu.memory_space<vmem>>, vector<32x256xf32>,
    %c2 = arith.constant 2 : index
    %c0_89 = arith.constant 0 : index
    %c0_90 = arith.constant 0 : index
    %137 = vector.load %arg4[%c2, %c0_89, %c0_90] : memref<3x64x160xf32, #tpu.memory_space<vmem>>, vector<1x64x160xf32>
    %138 = vector.shape_cast %137 : vector<1x64x160xf32> to vector<64x160xf32>
    %c0_91 = arith.constant 0 : index
    %c0_92 = arith.constant 0 : index
    %139 = vector.load %arg19[%c0_91, %c0_92] : memref<160x256xf32, #tpu.memory_space<vmem>>, vector<160x256xf32>
    %cst_93 = arith.constant dense<0.000000e+00> : vector<64x256xf32>
    %140 = tpu.matmul %138, %139, %cst_93 {dimension_numbers = #tpu.dot_dimension_numbers<[1], [0], [0], [1], [0, 0, 1, 1], [], []>} : vector<64x160xf32>, vector<160x256xf32>, vector<64x256xf32> -> vector<64x256xf32>
    %c2_94 = arith.constant 2 : index
    %c0_95 = arith.constant 0 : index
    %c0_96 = arith.constant 0 : index
    %141 = vector.load %arg5[%c2_94, %c0_95, %c0_96] : memref<3x64x1xf32, #tpu.memory_space<vmem>>, vector<1x64x1xf32>
    %142 = vector.shape_cast %141 : vector<1x64x1xf32> to vector<64x1xf32>
    %143 = vector.broadcast %142 : vector<64x1xf32> to vector<64x256xf32>
    %144 = arith.addf %140, %143 : vector<64x256xf32>
    %c2_97 = arith.constant 2 : index
    %c0_98 = arith.constant 0 : index
    %c0_99 = arith.constant 0 : index
    %145 = vector.load %arg6[%c2_97, %c0_98, %c0_99] : memref<3x32x64xf32, #tpu.memory_space<vmem>>, vector<1x32x64xf32>
    %146 = vector.shape_cast %145 : vector<1x32x64xf32> to vector<32x64xf32>
    %cst_100 = arith.constant dense<0.000000e+00> : vector<32x256xf32>
    %147 = tpu.matmul %146, %144, %cst_100 {dimension_numbers = #tpu.dot_dimension_numbers<[1], [0], [0], [1], [0, 0, 1, 1], [], []>} : vector<32x64xf32>, vector<64x256xf32>, vector<32x256xf32> -> vector<32x256xf32>
    %c2_101 = arith.constant 2 : index
    %c0_102 = arith.constant 0 : index
    %c0_103 = arith.constant 0 : index
    %148 = vector.load %arg7[%c2_101, %c0_102, %c0_103] : memref<3x32x1xf32, #tpu.memory_space<vmem>>, vector<1x32x1xf32>
    %149 = vector.shape_cast %148 : vector<1x32x1xf32> to vector<32x1xf32>
    %150 = vector.broadcast %149 : vector<32x1xf32> to vector<32x256xf32>
    %151 = arith.addf %147, %150 : vector<32x256xf32>
    %cst_104 = arith.constant 0.000000e+00 : f32
    %152 = vector.broadcast %cst_104 : f32 to vector<32x256xf32>
    %153 = arith.maximumf %151, %152 : vector<32x256xf32>
    %154 = arith.addf %111, %153 : vector<32x256xf32>
    %c0_105 = arith.constant 0 : index
    %c0_106 = arith.constant 0 : index
    %155 = vector.load %arg8[%c0_105, %c0_106] : memref<8x32xf32, #tpu.memory_space<vmem>>, vector<8x32xf32>
    %cst_107 = arith.constant dense<0.000000e+00> : vector<8x256xf32>
    %156 = tpu.matmul %155, %154, %cst_107 {dimension_numbers = #tpu.dot_dimension_numbers<[1], [0], [0], [1], [0, 0, 1, 1], [], []>} : vector<8x32xf32>, vector<32x256xf32>, vector<8x256xf32> -> vector<8x256xf32>
    %c0_108 = arith.constant 0 : index
    %c0_109 = arith.constant 0 : index
    %157 = vector.load %arg9[%c0_108, %c0_109] : memref<8x1xf32, #tpu.memory_space<vmem>>, vector<8x1xf32>
    %158 = vector.broadcast %157 : vector<8x1xf32> to vector<8x256xf32>
    %159 = arith.addf %156, %158 : vector<8x256xf32>
    %cst_110 = arith.constant 0.000000e+00 : f32
    %160 = vector.shape_cast %3 : vector<1x256xi1> to vector<1x256xi1>
    %161 = vector.broadcast %160 : vector<1x256xi1> to vector<8x256xi1>
    %162 = vector.broadcast %cst_110 : f32 to vector<8x256xf32>
    %163 = arith.select %161, %159, %162 : vector<8x256xi1>, vector<8x256xf32>
    %164 = vector.extract_strided_slice %163 {offsets = [0, 0], sizes = [8, 128], strides = [1, 1]} : vector<8x256xf32> to vector<8x128xf32>
    %c0_111 = arith.constant 0 : index
    %c0_112 = arith.constant 0 : index
    %c0_113 = arith.constant 0 : index
    %c0_114 = arith.constant 0 : index
    %165 = vector.load %arg18[%c0_111, %c0_112, %c0_113, %c0_114] : memref<3x2x8x128xf32, #tpu.memory_space<vmem>>, vector<1x1x8x128xf32>
    %166 = vector.shape_cast %165 : vector<1x1x8x128xf32> to vector<8x128xf32>
    %167 = vector.shape_cast %164 : vector<8x128xf32> to vector<1x1x8x128xf32>
    tpu.vector_store %arg18[%c0_111, %c0_112, %c0_113, %c0_114], %167 {strides = array<i32>} : memref<3x2x8x128xf32, #tpu.memory_space<vmem>>, vector<1x1x8x128xf32>,
    %168 = vector.extract_strided_slice %163 {offsets = [0, 128], sizes = [8, 128], strides = [1, 1]} : vector<8x256xf32> to vector<8x128xf32>
    %c0_115 = arith.constant 0 : index
    %c1_116 = arith.constant 1 : index
    %c0_117 = arith.constant 0 : index
    %c0_118 = arith.constant 0 : index
    %169 = vector.load %arg18[%c0_115, %c1_116, %c0_117, %c0_118] : memref<3x2x8x128xf32, #tpu.memory_space<vmem>>, vector<1x1x8x128xf32>
    %170 = vector.shape_cast %169 : vector<1x1x8x128xf32> to vector<8x128xf32>
    %171 = vector.shape_cast %168 : vector<8x128xf32> to vector<1x1x8x128xf32>
    tpu.vector_store %arg18[%c0_115, %c1_116, %c0_117, %c0_118], %171 {strides = array<i32>} : memref<3x2x8x128xf32, #tpu.memory_space<vmem>>, vector<1x1x8x128xf32>,
    %cst_119 = arith.constant dense<0xFF800000> : vector<256xf32>
    %172 = vector.multi_reduction <maximumf>, %163, %cst_119 [0] : vector<8x256xf32> to vector<256xf32>
    %173 = vector.shape_cast %172 : vector<256xf32> to vector<1x256xf32>
    %174 = vector.broadcast %173 : vector<1x256xf32> to vector<8x256xf32>
    %175 = arith.subf %163, %174 : vector<8x256xf32>
    %176 = math.exp %175 : vector<8x256xf32>
    %cst_120 = arith.constant dense<0.000000e+00> : vector<256xf32>
    %177 = vector.multi_reduction <add>, %176, %cst_120 [0] : vector<8x256xf32> to vector<256xf32>
    %178 = vector.shape_cast %177 : vector<256xf32> to vector<1x256xf32>
    %179 = vector.broadcast %178 : vector<1x256xf32> to vector<8x256xf32>
    %180 = arith.divf %176, %179 : vector<8x256xf32>
    %c0_121 = arith.constant 0 : index
    %c0_122 = arith.constant 0 : index
    %c0_123 = arith.constant 0 : index
    %181 = vector.load %arg10[%c0_121, %c0_122, %c0_123] : memref<2x32x8xf32, #tpu.memory_space<vmem>>, vector<1x32x8xf32>
    %182 = vector.shape_cast %181 : vector<1x32x8xf32> to vector<32x8xf32>
    %cst_124 = arith.constant dense<0.000000e+00> : vector<32x256xf32>
    %183 = tpu.matmul %182, %180, %cst_124 {dimension_numbers = #tpu.dot_dimension_numbers<[1], [0], [0], [1], [0, 0, 1, 1], [], []>} : vector<32x8xf32>, vector<8x256xf32>, vector<32x256xf32> -> vector<32x256xf32>
    %c0_125 = arith.constant 0 : index
    %c0_126 = arith.constant 0 : index
    %c0_127 = arith.constant 0 : index
    %184 = vector.load %arg11[%c0_125, %c0_126, %c0_127] : memref<2x32x1xf32, #tpu.memory_space<vmem>>, vector<1x32x1xf32>
    %185 = vector.shape_cast %184 : vector<1x32x1xf32> to vector<32x1xf32>
    %186 = vector.broadcast %185 : vector<32x1xf32> to vector<32x256xf32>
    %187 = arith.addf %183, %186 : vector<32x256xf32>
    %c1_i32_128 = arith.constant 1 : i32
    %188 = tpu.dynamic_rotate %187 by %c1_i32_128 dim 1 : vector<32x256xf32>, i32 -> vector<32x256xf32>
    %cst_129 = arith.constant 0.000000e+00 : f32
    %189 = vector.shape_cast %29 : vector<1x256xi1> to vector<1x256xi1>
    %190 = vector.broadcast %189 : vector<1x256xi1> to vector<32x256xi1>
    %191 = vector.broadcast %cst_129 : f32 to vector<32x256xf32>
    %192 = arith.select %190, %188, %191 : vector<32x256xi1>, vector<32x256xf32>
    %c255_i32_130 = arith.constant 255 : i32
    %193 = tpu.dynamic_rotate %187 by %c255_i32_130 dim 1 : vector<32x256xf32>, i32 -> vector<32x256xf32>
    %cst_131 = arith.constant 0.000000e+00 : f32
    %194 = vector.shape_cast %31 : vector<1x256xi1> to vector<1x256xi1>
    %195 = vector.broadcast %194 : vector<1x256xi1> to vector<32x256xi1>
    %196 = vector.broadcast %cst_131 : f32 to vector<32x256xf32>
    %197 = arith.select %195, %193, %196 : vector<32x256xi1>, vector<32x256xf32>
    %c0_132 = arith.constant 0 : index
    %c0_133 = arith.constant 0 : index
    %198 = vector.load %arg19[%c0_132, %c0_133] : memref<160x256xf32, #tpu.memory_space<vmem>>, vector<32x256xf32>
    tpu.vector_store %arg19[%c0_132, %c0_133], %192 {strides = array<i32>} : memref<160x256xf32, #tpu.memory_space<vmem>>, vector<32x256xf32>,
    %c32_134 = arith.constant 32 : index
    %c0_135 = arith.constant 0 : index
    %199 = vector.load %arg19[%c32_134, %c0_135] : memref<160x256xf32, #tpu.memory_space<vmem>>, vector<32x256xf32>
    tpu.vector_store %arg19[%c32_134, %c0_135], %187 {strides = array<i32>} : memref<160x256xf32, #tpu.memory_space<vmem>>, vector<32x256xf32>,
    %c64_136 = arith.constant 64 : index
    %c0_137 = arith.constant 0 : index
    %200 = vector.load %arg19[%c64_136, %c0_137] : memref<160x256xf32, #tpu.memory_space<vmem>>, vector<32x256xf32>
    tpu.vector_store %arg19[%c64_136, %c0_137], %197 {strides = array<i32>} : memref<160x256xf32, #tpu.memory_space<vmem>>, vector<32x256xf32>,
    %c0_138 = arith.constant 0 : index
    %c0_139 = arith.constant 0 : index
    %c0_140 = arith.constant 0 : index
    %201 = vector.load %arg12[%c0_138, %c0_139, %c0_140] : memref<4x32x96xf32, #tpu.memory_space<vmem>>, vector<1x32x96xf32>
    %202 = vector.shape_cast %201 : vector<1x32x96xf32> to vector<32x96xf32>
    %c0_141 = arith.constant 0 : index
    %c0_142 = arith.constant 0 : index
    %203 = vector.load %arg19[%c0_141, %c0_142] : memref<160x256xf32, #tpu.memory_space<vmem>>, vector<96x256xf32>
    %cst_143 = arith.constant dense<0.000000e+00> : vector<32x256xf32>
    %204 = tpu.matmul %202, %203, %cst_143 {dimension_numbers = #tpu.dot_dimension_numbers<[1], [0], [0], [1], [0, 0, 1, 1], [], []>} : vector<32x96xf32>, vector<96x256xf32>, vector<32x256xf32> -> vector<32x256xf32>
    %c0_144 = arith.constant 0 : index
    %c0_145 = arith.constant 0 : index
    %c0_146 = arith.constant 0 : index
    %205 = vector.load %arg13[%c0_144, %c0_145, %c0_146] : memref<4x32x1xf32, #tpu.memory_space<vmem>>, vector<1x32x1xf32>
    %206 = vector.shape_cast %205 : vector<1x32x1xf32> to vector<32x1xf32>
    %207 = vector.broadcast %206 : vector<32x1xf32> to vector<32x256xf32>
    %208 = arith.addf %204, %207 : vector<32x256xf32>
    %cst_147 = arith.constant 0.000000e+00 : f32
    %209 = vector.broadcast %cst_147 : f32 to vector<32x256xf32>
    %210 = arith.maximumf %208, %209 : vector<32x256xf32>
    %c0_148 = arith.constant 0 : index
    %c0_149 = arith.constant 0 : index
    %c0_150 = arith.constant 0 : index
    %211 = vector.load %arg14[%c0_148, %c0_149, %c0_150] : memref<4x32x32xf32, #tpu.memory_space<vmem>>, vector<1x32x32xf32>
    %212 = vector.shape_cast %211 : vector<1x32x32xf32> to vector<32x32xf32>
    %cst_151 = arith.constant dense<0.000000e+00> : vector<32x256xf32>
    %213 = tpu.matmul %212, %210, %cst_151 {dimension_numbers = #tpu.dot_dimension_numbers<[1], [0], [0], [1], [0, 0, 1, 1], [], []>} : vector<32x32xf32>, vector<32x256xf32>, vector<32x256xf32> -> vector<32x256xf32>
    %c0_152 = arith.constant 0 : index
    %c0_153 = arith.constant 0 : index
    %c0_154 = arith.constant 0 : index
    %214 = vector.load %arg15[%c0_152, %c0_153, %c0_154] : memref<4x32x1xf32, #tpu.memory_space<vmem>>, vector<1x32x1xf32>
    %215 = vector.shape_cast %214 : vector<1x32x1xf32> to vector<32x1xf32>
    %216 = vector.broadcast %215 : vector<32x1xf32> to vector<32x256xf32>
    %217 = arith.addf %213, %216 : vector<32x256xf32>
    %218 = arith.addf %187, %217 : vector<32x256xf32>
    %c2_i32_155 = arith.constant 2 : i32
    %219 = tpu.dynamic_rotate %218 by %c2_i32_155 dim 1 : vector<32x256xf32>, i32 -> vector<32x256xf32>
    %cst_156 = arith.constant 0.000000e+00 : f32
    %220 = vector.shape_cast %66 : vector<1x256xi1> to vector<1x256xi1>
    %221 = vector.broadcast %220 : vector<1x256xi1> to vector<32x256xi1>
    %222 = vector.broadcast %cst_156 : f32 to vector<32x256xf32>
    %223 = arith.select %221, %219, %222 : vector<32x256xi1>, vector<32x256xf32>
    %c254_i32_157 = arith.constant 254 : i32
    %224 = tpu.dynamic_rotate %218 by %c254_i32_157 dim 1 : vector<32x256xf32>, i32 -> vector<32x256xf32>
    %cst_158 = arith.constant 0.000000e+00 : f32
    %225 = vector.shape_cast %68 : vector<1x256xi1> to vector<1x256xi1>
    %226 = vector.broadcast %225 : vector<1x256xi1> to vector<32x256xi1>
    %227 = vector.broadcast %cst_158 : f32 to vector<32x256xf32>
    %228 = arith.select %226, %224, %227 : vector<32x256xi1>, vector<32x256xf32>
    %c0_159 = arith.constant 0 : index
    %c0_160 = arith.constant 0 : index
    %229 = vector.load %arg19[%c0_159, %c0_160] : memref<160x256xf32, #tpu.memory_space<vmem>>, vector<32x256xf32>
    tpu.vector_store %arg19[%c0_159, %c0_160], %223 {strides = array<i32>} : memref<160x256xf32, #tpu.memory_space<vmem>>, vector<32x256xf32>,
    %c32_161 = arith.constant 32 : index
    %c0_162 = arith.constant 0 : index
    %230 = vector.load %arg19[%c32_161, %c0_162] : memref<160x256xf32, #tpu.memory_space<vmem>>, vector<32x256xf32>
    tpu.vector_store %arg19[%c32_161, %c0_162], %218 {strides = array<i32>} : memref<160x256xf32, #tpu.memory_space<vmem>>, vector<32x256xf32>,
    %c64_163 = arith.constant 64 : index
    %c0_164 = arith.constant 0 : index
    %231 = vector.load %arg19[%c64_163, %c0_164] : memref<160x256xf32, #tpu.memory_space<vmem>>, vector<32x256xf32>
    tpu.vector_store %arg19[%c64_163, %c0_164], %228 {strides = array<i32>} : memref<160x256xf32, #tpu.memory_space<vmem>>, vector<32x256xf32>,
    %c1_165 = arith.constant 1 : index
    %c0_166 = arith.constant 0 : index
    %c0_167 = arith.constant 0 : index
    %232 = vector.load %arg12[%c1_165, %c0_166, %c0_167] : memref<4x32x96xf32, #tpu.memory_space<vmem>>, vector<1x32x96xf32>
    %233 = vector.shape_cast %232 : vector<1x32x96xf32> to vector<32x96xf32>
    %c0_168 = arith.constant 0 : index
    %c0_169 = arith.constant 0 : index
    %234 = vector.load %arg19[%c0_168, %c0_169] : memref<160x256xf32, #tpu.memory_space<vmem>>, vector<96x256xf32>
    %cst_170 = arith.constant dense<0.000000e+00> : vector<32x256xf32>
    %235 = tpu.matmul %233, %234, %cst_170 {dimension_numbers = #tpu.dot_dimension_numbers<[1], [0], [0], [1], [0, 0, 1, 1], [], []>} : vector<32x96xf32>, vector<96x256xf32>, vector<32x256xf32> -> vector<32x256xf32>
    %c1_171 = arith.constant 1 : index
    %c0_172 = arith.constant 0 : index
    %c0_173 = arith.constant 0 : index
    %236 = vector.load %arg13[%c1_171, %c0_172, %c0_173] : memref<4x32x1xf32, #tpu.memory_space<vmem>>, vector<1x32x1xf32>
    %237 = vector.shape_cast %236 : vector<1x32x1xf32> to vector<32x1xf32>
    %238 = vector.broadcast %237 : vector<32x1xf32> to vector<32x256xf32>
    %239 = arith.addf %235, %238 : vector<32x256xf32>
    %cst_174 = arith.constant 0.000000e+00 : f32
    %240 = vector.broadcast %cst_174 : f32 to vector<32x256xf32>
    %241 = arith.maximumf %239, %240 : vector<32x256xf32>
    %c1_175 = arith.constant 1 : index
    %c0_176 = arith.constant 0 : index
    %c0_177 = arith.constant 0 : index
    %242 = vector.load %arg14[%c1_175, %c0_176, %c0_177] : memref<4x32x32xf32, #tpu.memory_space<vmem>>, vector<1x32x32xf32>
    %243 = vector.shape_cast %242 : vector<1x32x32xf32> to vector<32x32xf32>
    %cst_178 = arith.constant dense<0.000000e+00> : vector<32x256xf32>
    %244 = tpu.matmul %243, %241, %cst_178 {dimension_numbers = #tpu.dot_dimension_numbers<[1], [0], [0], [1], [0, 0, 1, 1], [], []>} : vector<32x32xf32>, vector<32x256xf32>, vector<32x256xf32> -> vector<32x256xf32>
    %c1_179 = arith.constant 1 : index
    %c0_180 = arith.constant 0 : index
    %c0_181 = arith.constant 0 : index
    %245 = vector.load %arg15[%c1_179, %c0_180, %c0_181] : memref<4x32x1xf32, #tpu.memory_space<vmem>>, vector<1x32x1xf32>
    %246 = vector.shape_cast %245 : vector<1x32x1xf32> to vector<32x1xf32>
    %247 = vector.broadcast %246 : vector<32x1xf32> to vector<32x256xf32>
    %248 = arith.addf %244, %247 : vector<32x256xf32>
    %249 = arith.addf %218, %248 : vector<32x256xf32>
    %c0_182 = arith.constant 0 : index
    %c0_183 = arith.constant 0 : index
    %c0_184 = arith.constant 0 : index
    %250 = vector.load %arg16[%c0_182, %c0_183, %c0_184] : memref<2x8x32xf32, #tpu.memory_space<vmem>>, vector<1x8x32xf32>
    %251 = vector.shape_cast %250 : vector<1x8x32xf32> to vector<8x32xf32>
    %cst_185 = arith.constant dense<0.000000e+00> : vector<8x256xf32>
    %252 = tpu.matmul %251, %249, %cst_185 {dimension_numbers = #tpu.dot_dimension_numbers<[1], [0], [0], [1], [0, 0, 1, 1], [], []>} : vector<8x32xf32>, vector<32x256xf32>, vector<8x256xf32> -> vector<8x256xf32>
    %c0_186 = arith.constant 0 : index
    %c0_187 = arith.constant 0 : index
    %c0_188 = arith.constant 0 : index
    %253 = vector.load %arg17[%c0_186, %c0_187, %c0_188] : memref<2x8x1xf32, #tpu.memory_space<vmem>>, vector<1x8x1xf32>
    %254 = vector.shape_cast %253 : vector<1x8x1xf32> to vector<8x1xf32>
    %255 = vector.broadcast %254 : vector<8x1xf32> to vector<8x256xf32>
    %256 = arith.addf %252, %255 : vector<8x256xf32>
    %cst_189 = arith.constant 0.000000e+00 : f32
    %257 = vector.shape_cast %3 : vector<1x256xi1> to vector<1x256xi1>
    %258 = vector.broadcast %257 : vector<1x256xi1> to vector<8x256xi1>
    %259 = vector.broadcast %cst_189 : f32 to vector<8x256xf32>
    %260 = arith.select %258, %256, %259 : vector<8x256xi1>, vector<8x256xf32>
    %261 = vector.extract_strided_slice %260 {offsets = [0, 0], sizes = [8, 128], strides = [1, 1]} : vector<8x256xf32> to vector<8x128xf32>
    %c1_190 = arith.constant 1 : index
    %c0_191 = arith.constant 0 : index
    %c0_192 = arith.constant 0 : index
    %c0_193 = arith.constant 0 : index
    %262 = vector.load %arg18[%c1_190, %c0_191, %c0_192, %c0_193] : memref<3x2x8x128xf32, #tpu.memory_space<vmem>>, vector<1x1x8x128xf32>
    %263 = vector.shape_cast %262 : vector<1x1x8x128xf32> to vector<8x128xf32>
    %264 = vector.shape_cast %261 : vector<8x128xf32> to vector<1x1x8x128xf32>
    tpu.vector_store %arg18[%c1_190, %c0_191, %c0_192, %c0_193], %264 {strides = array<i32>} : memref<3x2x8x128xf32, #tpu.memory_space<vmem>>, vector<1x1x8x128xf32>,
    %265 = vector.extract_strided_slice %260 {offsets = [0, 128], sizes = [8, 128], strides = [1, 1]} : vector<8x256xf32> to vector<8x128xf32>
    %c1_194 = arith.constant 1 : index
    %c1_195 = arith.constant 1 : index
    %c0_196 = arith.constant 0 : index
    %c0_197 = arith.constant 0 : index
    %266 = vector.load %arg18[%c1_194, %c1_195, %c0_196, %c0_197] : memref<3x2x8x128xf32, #tpu.memory_space<vmem>>, vector<1x1x8x128xf32>
    %267 = vector.shape_cast %266 : vector<1x1x8x128xf32> to vector<8x128xf32>
    %268 = vector.shape_cast %265 : vector<8x128xf32> to vector<1x1x8x128xf32>
    tpu.vector_store %arg18[%c1_194, %c1_195, %c0_196, %c0_197], %268 {strides = array<i32>} : memref<3x2x8x128xf32, #tpu.memory_space<vmem>>, vector<1x1x8x128xf32>,
    %cst_198 = arith.constant dense<0xFF800000> : vector<256xf32>
    %269 = vector.multi_reduction <maximumf>, %260, %cst_198 [0] : vector<8x256xf32> to vector<256xf32>
    %270 = vector.shape_cast %269 : vector<256xf32> to vector<1x256xf32>
    %271 = vector.broadcast %270 : vector<1x256xf32> to vector<8x256xf32>
    %272 = arith.subf %260, %271 : vector<8x256xf32>
    %273 = math.exp %272 : vector<8x256xf32>
    %cst_199 = arith.constant dense<0.000000e+00> : vector<256xf32>
    %274 = vector.multi_reduction <add>, %273, %cst_199 [0] : vector<8x256xf32> to vector<256xf32>
    %275 = vector.shape_cast %274 : vector<256xf32> to vector<1x256xf32>
    %276 = vector.broadcast %275 : vector<1x256xf32> to vector<8x256xf32>
    %277 = arith.divf %273, %276 : vector<8x256xf32>
    %c1_200 = arith.constant 1 : index
    %c0_201 = arith.constant 0 : index
    %c0_202 = arith.constant 0 : index
    %278 = vector.load %arg10[%c1_200, %c0_201, %c0_202] : memref<2x32x8xf32, #tpu.memory_space<vmem>>, vector<1x32x8xf32>
    %279 = vector.shape_cast %278 : vector<1x32x8xf32> to vector<32x8xf32>
    %cst_203 = arith.constant dense<0.000000e+00> : vector<32x256xf32>
    %280 = tpu.matmul %279, %277, %cst_203 {dimension_numbers = #tpu.dot_dimension_numbers<[1], [0], [0], [1], [0, 0, 1, 1], [], []>} : vector<32x8xf32>, vector<8x256xf32>, vector<32x256xf32> -> vector<32x256xf32>
    %c1_204 = arith.constant 1 : index
    %c0_205 = arith.constant 0 : index
    %c0_206 = arith.constant 0 : index
    %281 = vector.load %arg11[%c1_204, %c0_205, %c0_206] : memref<2x32x1xf32, #tpu.memory_space<vmem>>, vector<1x32x1xf32>
    %282 = vector.shape_cast %281 : vector<1x32x1xf32> to vector<32x1xf32>
    %283 = vector.broadcast %282 : vector<32x1xf32> to vector<32x256xf32>
    %284 = arith.addf %280, %283 : vector<32x256xf32>
    %c1_i32_207 = arith.constant 1 : i32
    %285 = tpu.dynamic_rotate %284 by %c1_i32_207 dim 1 : vector<32x256xf32>, i32 -> vector<32x256xf32>
    %cst_208 = arith.constant 0.000000e+00 : f32
    %286 = vector.shape_cast %29 : vector<1x256xi1> to vector<1x256xi1>
    %287 = vector.broadcast %286 : vector<1x256xi1> to vector<32x256xi1>
    %288 = vector.broadcast %cst_208 : f32 to vector<32x256xf32>
    %289 = arith.select %287, %285, %288 : vector<32x256xi1>, vector<32x256xf32>
    %c255_i32_209 = arith.constant 255 : i32
    %290 = tpu.dynamic_rotate %284 by %c255_i32_209 dim 1 : vector<32x256xf32>, i32 -> vector<32x256xf32>
    %cst_210 = arith.constant 0.000000e+00 : f32
    %291 = vector.shape_cast %31 : vector<1x256xi1> to vector<1x256xi1>
    %292 = vector.broadcast %291 : vector<1x256xi1> to vector<32x256xi1>
    %293 = vector.broadcast %cst_210 : f32 to vector<32x256xf32>
    %294 = arith.select %292, %290, %293 : vector<32x256xi1>, vector<32x256xf32>
    %c0_211 = arith.constant 0 : index
    %c0_212 = arith.constant 0 : index
    %295 = vector.load %arg19[%c0_211, %c0_212] : memref<160x256xf32, #tpu.memory_space<vmem>>, vector<32x256xf32>
    tpu.vector_store %arg19[%c0_211, %c0_212], %289 {strides = array<i32>} : memref<160x256xf32, #tpu.memory_space<vmem>>, vector<32x256xf32>,
    %c32_213 = arith.constant 32 : index
    %c0_214 = arith.constant 0 : index
    %296 = vector.load %arg19[%c32_213, %c0_214] : memref<160x256xf32, #tpu.memory_space<vmem>>, vector<32x256xf32>
    tpu.vector_store %arg19[%c32_213, %c0_214], %284 {strides = array<i32>} : memref<160x256xf32, #tpu.memory_space<vmem>>, vector<32x256xf32>,
    %c64_215 = arith.constant 64 : index
    %c0_216 = arith.constant 0 : index
    %297 = vector.load %arg19[%c64_215, %c0_216] : memref<160x256xf32, #tpu.memory_space<vmem>>, vector<32x256xf32>
    tpu.vector_store %arg19[%c64_215, %c0_216], %294 {strides = array<i32>} : memref<160x256xf32, #tpu.memory_space<vmem>>, vector<32x256xf32>,
    %c2_217 = arith.constant 2 : index
    %c0_218 = arith.constant 0 : index
    %c0_219 = arith.constant 0 : index
    %298 = vector.load %arg12[%c2_217, %c0_218, %c0_219] : memref<4x32x96xf32, #tpu.memory_space<vmem>>, vector<1x32x96xf32>
    %299 = vector.shape_cast %298 : vector<1x32x96xf32> to vector<32x96xf32>
    %c0_220 = arith.constant 0 : index
    %c0_221 = arith.constant 0 : index
    %300 = vector.load %arg19[%c0_220, %c0_221] : memref<160x256xf32, #tpu.memory_space<vmem>>, vector<96x256xf32>
    %cst_222 = arith.constant dense<0.000000e+00> : vector<32x256xf32>
    %301 = tpu.matmul %299, %300, %cst_222 {dimension_numbers = #tpu.dot_dimension_numbers<[1], [0], [0], [1], [0, 0, 1, 1], [], []>} : vector<32x96xf32>, vector<96x256xf32>, vector<32x256xf32> -> vector<32x256xf32>
    %c2_223 = arith.constant 2 : index
    %c0_224 = arith.constant 0 : index
    %c0_225 = arith.constant 0 : index
    %302 = vector.load %arg13[%c2_223, %c0_224, %c0_225] : memref<4x32x1xf32, #tpu.memory_space<vmem>>, vector<1x32x1xf32>
    %303 = vector.shape_cast %302 : vector<1x32x1xf32> to vector<32x1xf32>
    %304 = vector.broadcast %303 : vector<32x1xf32> to vector<32x256xf32>
    %305 = arith.addf %301, %304 : vector<32x256xf32>
    %cst_226 = arith.constant 0.000000e+00 : f32
    %306 = vector.broadcast %cst_226 : f32 to vector<32x256xf32>
    %307 = arith.maximumf %305, %306 : vector<32x256xf32>
    %c2_227 = arith.constant 2 : index
    %c0_228 = arith.constant 0 : index
    %c0_229 = arith.constant 0 : index
    %308 = vector.load %arg14[%c2_227, %c0_228, %c0_229] : memref<4x32x32xf32, #tpu.memory_space<vmem>>, vector<1x32x32xf32>
    %309 = vector.shape_cast %308 : vector<1x32x32xf32> to vector<32x32xf32>
    %cst_230 = arith.constant dense<0.000000e+00> : vector<32x256xf32>
    %310 = tpu.matmul %309, %307, %cst_230 {dimension_numbers = #tpu.dot_dimension_numbers<[1], [0], [0], [1], [0, 0, 1, 1], [], []>} : vector<32x32xf32>, vector<32x256xf32>, vector<32x256xf32> -> vector<32x256xf32>
    %c2_231 = arith.constant 2 : index
    %c0_232 = arith.constant 0 : index
    %c0_233 = arith.constant 0 : index
    %311 = vector.load %arg15[%c2_231, %c0_232, %c0_233] : memref<4x32x1xf32, #tpu.memory_space<vmem>>, vector<1x32x1xf32>
    %312 = vector.shape_cast %311 : vector<1x32x1xf32> to vector<32x1xf32>
    %313 = vector.broadcast %312 : vector<32x1xf32> to vector<32x256xf32>
    %314 = arith.addf %310, %313 : vector<32x256xf32>
    %315 = arith.addf %284, %314 : vector<32x256xf32>
    %c2_i32_234 = arith.constant 2 : i32
    %316 = tpu.dynamic_rotate %315 by %c2_i32_234 dim 1 : vector<32x256xf32>, i32 -> vector<32x256xf32>
    %cst_235 = arith.constant 0.000000e+00 : f32
    %317 = vector.shape_cast %66 : vector<1x256xi1> to vector<1x256xi1>
    %318 = vector.broadcast %317 : vector<1x256xi1> to vector<32x256xi1>
    %319 = vector.broadcast %cst_235 : f32 to vector<32x256xf32>
    %320 = arith.select %318, %316, %319 : vector<32x256xi1>, vector<32x256xf32>
    %c254_i32_236 = arith.constant 254 : i32
    %321 = tpu.dynamic_rotate %315 by %c254_i32_236 dim 1 : vector<32x256xf32>, i32 -> vector<32x256xf32>
    %cst_237 = arith.constant 0.000000e+00 : f32
    %322 = vector.shape_cast %68 : vector<1x256xi1> to vector<1x256xi1>
    %323 = vector.broadcast %322 : vector<1x256xi1> to vector<32x256xi1>
    %324 = vector.broadcast %cst_237 : f32 to vector<32x256xf32>
    %325 = arith.select %323, %321, %324 : vector<32x256xi1>, vector<32x256xf32>
    %c0_238 = arith.constant 0 : index
    %c0_239 = arith.constant 0 : index
    %326 = vector.load %arg19[%c0_238, %c0_239] : memref<160x256xf32, #tpu.memory_space<vmem>>, vector<32x256xf32>
    tpu.vector_store %arg19[%c0_238, %c0_239], %320 {strides = array<i32>} : memref<160x256xf32, #tpu.memory_space<vmem>>, vector<32x256xf32>,
    %c32_240 = arith.constant 32 : index
    %c0_241 = arith.constant 0 : index
    %327 = vector.load %arg19[%c32_240, %c0_241] : memref<160x256xf32, #tpu.memory_space<vmem>>, vector<32x256xf32>
    tpu.vector_store %arg19[%c32_240, %c0_241], %315 {strides = array<i32>} : memref<160x256xf32, #tpu.memory_space<vmem>>, vector<32x256xf32>,
    %c64_242 = arith.constant 64 : index
    %c0_243 = arith.constant 0 : index
    %328 = vector.load %arg19[%c64_242, %c0_243] : memref<160x256xf32, #tpu.memory_space<vmem>>, vector<32x256xf32>
    tpu.vector_store %arg19[%c64_242, %c0_243], %325 {strides = array<i32>} : memref<160x256xf32, #tpu.memory_space<vmem>>, vector<32x256xf32>,
    %c3 = arith.constant 3 : index
    %c0_244 = arith.constant 0 : index
    %c0_245 = arith.constant 0 : index
    %329 = vector.load %arg12[%c3, %c0_244, %c0_245] : memref<4x32x96xf32, #tpu.memory_space<vmem>>, vector<1x32x96xf32>
    %330 = vector.shape_cast %329 : vector<1x32x96xf32> to vector<32x96xf32>
    %c0_246 = arith.constant 0 : index
    %c0_247 = arith.constant 0 : index
    %331 = vector.load %arg19[%c0_246, %c0_247] : memref<160x256xf32, #tpu.memory_space<vmem>>, vector<96x256xf32>
    %cst_248 = arith.constant dense<0.000000e+00> : vector<32x256xf32>
    %332 = tpu.matmul %330, %331, %cst_248 {dimension_numbers = #tpu.dot_dimension_numbers<[1], [0], [0], [1], [0, 0, 1, 1], [], []>} : vector<32x96xf32>, vector<96x256xf32>, vector<32x256xf32> -> vector<32x256xf32>
    %c3_249 = arith.constant 3 : index
    %c0_250 = arith.constant 0 : index
    %c0_251 = arith.constant 0 : index
    %333 = vector.load %arg13[%c3_249, %c0_250, %c0_251] : memref<4x32x1xf32, #tpu.memory_space<vmem>>, vector<1x32x1xf32>
    %334 = vector.shape_cast %333 : vector<1x32x1xf32> to vector<32x1xf32>
    %335 = vector.broadcast %334 : vector<32x1xf32> to vector<32x256xf32>
    %336 = arith.addf %332, %335 : vector<32x256xf32>
    %cst_252 = arith.constant 0.000000e+00 : f32
    %337 = vector.broadcast %cst_252 : f32 to vector<32x256xf32>
    %338 = arith.maximumf %336, %337 : vector<32x256xf32>
    %c3_253 = arith.constant 3 : index
    %c0_254 = arith.constant 0 : index
    %c0_255 = arith.constant 0 : index
    %339 = vector.load %arg14[%c3_253, %c0_254, %c0_255] : memref<4x32x32xf32, #tpu.memory_space<vmem>>, vector<1x32x32xf32>
    %340 = vector.shape_cast %339 : vector<1x32x32xf32> to vector<32x32xf32>
    %cst_256 = arith.constant dense<0.000000e+00> : vector<32x256xf32>
    %341 = tpu.matmul %340, %338, %cst_256 {dimension_numbers = #tpu.dot_dimension_numbers<[1], [0], [0], [1], [0, 0, 1, 1], [], []>} : vector<32x32xf32>, vector<32x256xf32>, vector<32x256xf32> -> vector<32x256xf32>
    %c3_257 = arith.constant 3 : index
    %c0_258 = arith.constant 0 : index
    %c0_259 = arith.constant 0 : index
    %342 = vector.load %arg15[%c3_257, %c0_258, %c0_259] : memref<4x32x1xf32, #tpu.memory_space<vmem>>, vector<1x32x1xf32>
    %343 = vector.shape_cast %342 : vector<1x32x1xf32> to vector<32x1xf32>
    %344 = vector.broadcast %343 : vector<32x1xf32> to vector<32x256xf32>
    %345 = arith.addf %341, %344 : vector<32x256xf32>
    %346 = arith.addf %315, %345 : vector<32x256xf32>
    %c1_260 = arith.constant 1 : index
    %c0_261 = arith.constant 0 : index
    %c0_262 = arith.constant 0 : index
    %347 = vector.load %arg16[%c1_260, %c0_261, %c0_262] : memref<2x8x32xf32, #tpu.memory_space<vmem>>, vector<1x8x32xf32>
    %348 = vector.shape_cast %347 : vector<1x8x32xf32> to vector<8x32xf32>
    %cst_263 = arith.constant dense<0.000000e+00> : vector<8x256xf32>
    %349 = tpu.matmul %348, %346, %cst_263 {dimension_numbers = #tpu.dot_dimension_numbers<[1], [0], [0], [1], [0, 0, 1, 1], [], []>} : vector<8x32xf32>, vector<32x256xf32>, vector<8x256xf32> -> vector<8x256xf32>
    %c1_264 = arith.constant 1 : index
    %c0_265 = arith.constant 0 : index
    %c0_266 = arith.constant 0 : index
    %350 = vector.load %arg17[%c1_264, %c0_265, %c0_266] : memref<2x8x1xf32, #tpu.memory_space<vmem>>, vector<1x8x1xf32>
    %351 = vector.shape_cast %350 : vector<1x8x1xf32> to vector<8x1xf32>
    %352 = vector.broadcast %351 : vector<8x1xf32> to vector<8x256xf32>
    %353 = arith.addf %349, %352 : vector<8x256xf32>
    %cst_267 = arith.constant 0.000000e+00 : f32
    %354 = vector.shape_cast %3 : vector<1x256xi1> to vector<1x256xi1>
    %355 = vector.broadcast %354 : vector<1x256xi1> to vector<8x256xi1>
    %356 = vector.broadcast %cst_267 : f32 to vector<8x256xf32>
    %357 = arith.select %355, %353, %356 : vector<8x256xi1>, vector<8x256xf32>
    %358 = vector.extract_strided_slice %357 {offsets = [0, 0], sizes = [8, 128], strides = [1, 1]} : vector<8x256xf32> to vector<8x128xf32>
    %c2_268 = arith.constant 2 : index
    %c0_269 = arith.constant 0 : index
    %c0_270 = arith.constant 0 : index
    %c0_271 = arith.constant 0 : index
    %359 = vector.load %arg18[%c2_268, %c0_269, %c0_270, %c0_271] : memref<3x2x8x128xf32, #tpu.memory_space<vmem>>, vector<1x1x8x128xf32>
    %360 = vector.shape_cast %359 : vector<1x1x8x128xf32> to vector<8x128xf32>
    %361 = vector.shape_cast %358 : vector<8x128xf32> to vector<1x1x8x128xf32>
    tpu.vector_store %arg18[%c2_268, %c0_269, %c0_270, %c0_271], %361 {strides = array<i32>} : memref<3x2x8x128xf32, #tpu.memory_space<vmem>>, vector<1x1x8x128xf32>,
    %362 = vector.extract_strided_slice %357 {offsets = [0, 128], sizes = [8, 128], strides = [1, 1]} : vector<8x256xf32> to vector<8x128xf32>
    %c2_272 = arith.constant 2 : index
    %c1_273 = arith.constant 1 : index
    %c0_274 = arith.constant 0 : index
    %c0_275 = arith.constant 0 : index
    %363 = vector.load %arg18[%c2_272, %c1_273, %c0_274, %c0_275] : memref<3x2x8x128xf32, #tpu.memory_space<vmem>>, vector<1x1x8x128xf32>
    %364 = vector.shape_cast %363 : vector<1x1x8x128xf32> to vector<8x128xf32>
    %365 = vector.shape_cast %362 : vector<8x128xf32> to vector<1x1x8x128xf32>
    tpu.vector_store %arg18[%c2_272, %c1_273, %c0_274, %c0_275], %365 {strides = array<i32>} : memref<3x2x8x128xf32, #tpu.memory_space<vmem>>, vector<1x1x8x128xf32>,
    return
  }
  func.func @transform_0(%arg0: i32) -> (i32, i32, i32) {
    %c0_i32 = arith.constant 0 : i32
    %c0_i32_0 = arith.constant 0 : i32
    %c0_i32_1 = arith.constant 0 : i32
    return %arg0, %c0_i32, %c0_i32_0 : i32, i32, i32
  }
  func.func @transform_1(%arg0: i32) -> (i32, i32) {
    %c0_i32 = arith.constant 0 : i32
    %c0_i32_0 = arith.constant 0 : i32
    %c0_i32_1 = arith.constant 0 : i32
    return %c0_i32, %c0_i32_0 : i32, i32
  }
  func.func @transform_2(%arg0: i32) -> (i32, i32) {
    %c0_i32 = arith.constant 0 : i32
    %c0_i32_0 = arith.constant 0 : i32
    %c0_i32_1 = arith.constant 0 : i32
    return %c0_i32, %c0_i32_0 : i32, i32
  }
  func.func @transform_3(%arg0: i32) -> (i32, i32, i32) {
    %c0_i32 = arith.constant 0 : i32
    %c0_i32_0 = arith.constant 0 : i32
    %c0_i32_1 = arith.constant 0 : i32
    %c0_i32_2 = arith.constant 0 : i32
    return %c0_i32, %c0_i32_0, %c0_i32_1 : i32, i32, i32
  }
  func.func @transform_4(%arg0: i32) -> (i32, i32, i32) {
    %c0_i32 = arith.constant 0 : i32
    %c0_i32_0 = arith.constant 0 : i32
    %c0_i32_1 = arith.constant 0 : i32
    %c0_i32_2 = arith.constant 0 : i32
    return %c0_i32, %c0_i32_0, %c0_i32_1 : i32, i32, i32
  }
  func.func @transform_5(%arg0: i32) -> (i32, i32, i32) {
    %c0_i32 = arith.constant 0 : i32
    %c0_i32_0 = arith.constant 0 : i32
    %c0_i32_1 = arith.constant 0 : i32
    %c0_i32_2 = arith.constant 0 : i32
    return %c0_i32, %c0_i32_0, %c0_i32_1 : i32, i32, i32
  }
  func.func @transform_6(%arg0: i32) -> (i32, i32, i32) {
    %c0_i32 = arith.constant 0 : i32
    %c0_i32_0 = arith.constant 0 : i32
    %c0_i32_1 = arith.constant 0 : i32
    %c0_i32_2 = arith.constant 0 : i32
    return %c0_i32, %c0_i32_0, %c0_i32_1 : i32, i32, i32
  }
  func.func @transform_7(%arg0: i32) -> (i32, i32) {
    %c0_i32 = arith.constant 0 : i32
    %c0_i32_0 = arith.constant 0 : i32
    %c0_i32_1 = arith.constant 0 : i32
    return %c0_i32, %c0_i32_0 : i32, i32
  }
  func.func @transform_8(%arg0: i32) -> (i32, i32) {
    %c0_i32 = arith.constant 0 : i32
    %c0_i32_0 = arith.constant 0 : i32
    %c0_i32_1 = arith.constant 0 : i32
    return %c0_i32, %c0_i32_0 : i32, i32
  }
  func.func @transform_9(%arg0: i32) -> (i32, i32, i32) {
    %c0_i32 = arith.constant 0 : i32
    %c0_i32_0 = arith.constant 0 : i32
    %c0_i32_1 = arith.constant 0 : i32
    %c0_i32_2 = arith.constant 0 : i32
    return %c0_i32, %c0_i32_0, %c0_i32_1 : i32, i32, i32
  }
  func.func @transform_10(%arg0: i32) -> (i32, i32, i32) {
    %c0_i32 = arith.constant 0 : i32
    %c0_i32_0 = arith.constant 0 : i32
    %c0_i32_1 = arith.constant 0 : i32
    %c0_i32_2 = arith.constant 0 : i32
    return %c0_i32, %c0_i32_0, %c0_i32_1 : i32, i32, i32
  }
  func.func @transform_11(%arg0: i32) -> (i32, i32, i32) {
    %c0_i32 = arith.constant 0 : i32
    %c0_i32_0 = arith.constant 0 : i32
    %c0_i32_1 = arith.constant 0 : i32
    %c0_i32_2 = arith.constant 0 : i32
    return %c0_i32, %c0_i32_0, %c0_i32_1 : i32, i32, i32
  }
  func.func @transform_12(%arg0: i32) -> (i32, i32, i32) {
    %c0_i32 = arith.constant 0 : i32
    %c0_i32_0 = arith.constant 0 : i32
    %c0_i32_1 = arith.constant 0 : i32
    %c0_i32_2 = arith.constant 0 : i32
    return %c0_i32, %c0_i32_0, %c0_i32_1 : i32, i32, i32
  }
  func.func @transform_13(%arg0: i32) -> (i32, i32, i32) {
    %c0_i32 = arith.constant 0 : i32
    %c0_i32_0 = arith.constant 0 : i32
    %c0_i32_1 = arith.constant 0 : i32
    %c0_i32_2 = arith.constant 0 : i32
    return %c0_i32, %c0_i32_0, %c0_i32_1 : i32, i32, i32
  }
  func.func @transform_14(%arg0: i32) -> (i32, i32, i32) {
    %c0_i32 = arith.constant 0 : i32
    %c0_i32_0 = arith.constant 0 : i32
    %c0_i32_1 = arith.constant 0 : i32
    %c0_i32_2 = arith.constant 0 : i32
    return %c0_i32, %c0_i32_0, %c0_i32_1 : i32, i32, i32
  }
  func.func @transform_15(%arg0: i32) -> (i32, i32, i32) {
    %c0_i32 = arith.constant 0 : i32
    %c0_i32_0 = arith.constant 0 : i32
    %c0_i32_1 = arith.constant 0 : i32
    %c0_i32_2 = arith.constant 0 : i32
    return %c0_i32, %c0_i32_0, %c0_i32_1 : i32, i32, i32
  }
  func.func @transform_16(%arg0: i32) -> (i32, i32, i32) {
    %c0_i32 = arith.constant 0 : i32
    %c0_i32_0 = arith.constant 0 : i32
    %c0_i32_1 = arith.constant 0 : i32
    %c0_i32_2 = arith.constant 0 : i32
    return %c0_i32, %c0_i32_0, %c0_i32_1 : i32, i32, i32
  }
  func.func @transform_17(%arg0: i32) -> (i32, i32, i32, i32) {
    %c0_i32 = arith.constant 0 : i32
    %c0_i32_0 = arith.constant 0 : i32
    %c0_i32_1 = arith.constant 0 : i32
    %c0_i32_2 = arith.constant 0 : i32
    return %c0_i32, %arg0, %c0_i32_0, %c0_i32_1 : i32, i32, i32, i32
  }
}

</mosaic_0001>

<llo_original>
// kernel: multi_stage_refined_tcn.1
$region0: #{multi_stage_refined_tcn.1}
  #allocation0 [shape = 'u32[]', space=smem, size = 0x4, offset = 0x4, fixed_abs, tag = 'smem constant byte address 0x4 - core index']
  #allocation1 [shape = 'u32[144,128]{1,0:T(1,128)}', space=vmem, size = 0x12000, scoped, tag = 'internal scratch']
  #allocation2 [shape = 'f32[160,256]{1,0:T(8,128)}', space=vmem, size = 0x28000, scoped, tag = 'scratch operand']
  %s0 = inlined_call_operand.vmem [shape: f32[2,16,128], index: 0, kind: input, shape index: {}]
  %s1 = inlined_call_operand.vmem [shape: f32[32,16], index: 1, kind: input, shape index: {}]
  %s2 = inlined_call_operand.vmem [shape: f32[32,1], index: 2, kind: input, shape index: {}]
  %s3 = inlined_call_operand.vmem [shape: f32[3,64,160], index: 3, kind: input, shape index: {}]
  %s4 = inlined_call_operand.vmem [shape: f32[3,64,1], index: 4, kind: input, shape index: {}]
  %s5 = inlined_call_operand.vmem [shape: f32[3,32,64], index: 5, kind: input, shape index: {}]
  %s6 = inlined_call_operand.vmem [shape: f32[3,32,1], index: 6, kind: input, shape index: {}]
  %s7 = inlined_call_operand.vmem [shape: f32[8,32], index: 7, kind: input, shape index: {}]
  %s8 = inlined_call_operand.vmem [shape: f32[8,1], index: 8, kind: input, shape index: {}]
  %s9 = inlined_call_operand.vmem [shape: f32[2,32,8], index: 9, kind: input, shape index: {}]
  %s10 = inlined_call_operand.vmem [shape: f32[2,32,1], index: 10, kind: input, shape index: {}]
  %s11 = inlined_call_operand.vmem [shape: f32[4,32,96], index: 11, kind: input, shape index: {}]
  %s12 = inlined_call_operand.vmem [shape: f32[4,32,1], index: 12, kind: input, shape index: {}]
  %s13 = inlined_call_operand.vmem [shape: f32[4,32,32], index: 13, kind: input, shape index: {}]
  %s14 = inlined_call_operand.vmem [shape: f32[4,32,1], index: 14, kind: input, shape index: {}]
  %s15 = inlined_call_operand.vmem [shape: f32[2,8,32], index: 15, kind: input, shape index: {}]
  %s16 = inlined_call_operand.vmem [shape: f32[2,8,1], index: 16, kind: input, shape index: {}]
  %s17 = inlined_call_operand.hbm [shape: f32[3,2,8,128], index: 17, kind: output, shape index: {}]
  %s18 = sld [smem:[#allocation0]]
  $region78: #{multi_stage_refined_tcn.1} parent=0
    _
  %s20 = ssub.s32 1, %s18
  %s21 = scalar_select 0, %s20, %s18
  $region1: #{multi_stage_refined_tcn.1} parent=0
    #allocation3 [shape = 'u8[24576]{0}', space=vmem, size = 0x6000, scoped, tag = 'output window, operand 0, single buffered']
    #allocation4 [shape = 's32[1]{0}', space=sflag, size = 0x4, scoped, tag = 'scoped memory for multi_stage_refined_tcn.1']
    %22 = vsyncpa [#allocation4], 0
    // Predicated region
    $region2: #{multi_stage_refined_tcn.1} parent=1 // pred_check
      _
    $region3: #{multi_stage_refined_tcn.1} parent=1 // pred_check_branch
      %24 = sbr.rel (0) target = $region5
    $region4: #{multi_stage_refined_tcn.1} parent=1 // pred_region
      _
    $region5: #{multi_stage_refined_tcn.1} parent=1 // pred_fallthru
      _
    // Predicated region
    $region6: #{multi_stage_refined_tcn.1} parent=1 // pred_check
      _
    $region7: #{multi_stage_refined_tcn.1} parent=1 // pred_check_branch
      %26 = sbr.rel (0) target = $region9
    $region8: #{multi_stage_refined_tcn.1} parent=1 // pred_region
      _
    $region9: #{multi_stage_refined_tcn.1} parent=1 // pred_fallthru
      _
    // Predicated region
    $region10: #{multi_stage_refined_tcn.1} parent=1 // pred_check
      _
    $region11: #{multi_stage_refined_tcn.1} parent=1 // pred_check_branch
      %28 = sbr.rel (0) target = $region13
    $region12: #{multi_stage_refined_tcn.1} parent=1 // pred_region
      _
    $region13: #{multi_stage_refined_tcn.1} parent=1 // pred_fallthru
      _
    // Predicated region
    $region14: #{multi_stage_refined_tcn.1} parent=1 // pred_check
      _
    $region15: #{multi_stage_refined_tcn.1} parent=1 // pred_check_branch
      %30 = sbr.rel (0) target = $region17
    $region16: #{multi_stage_refined_tcn.1} parent=1 // pred_region
      _
    $region17: #{multi_stage_refined_tcn.1} parent=1 // pred_fallthru
      _
    // Predicated region
    $region18: #{multi_stage_refined_tcn.1} parent=1 // pred_check
      _
    $region19: #{multi_stage_refined_tcn.1} parent=1 // pred_check_branch
      %32 = sbr.rel (0) target = $region21
    $region20: #{multi_stage_refined_tcn.1} parent=1 // pred_region
      _
    $region21: #{multi_stage_refined_tcn.1} parent=1 // pred_fallthru
      _
    // Predicated region
    $region22: #{multi_stage_refined_tcn.1} parent=1 // pred_check
      _
    $region23: #{multi_stage_refined_tcn.1} parent=1 // pred_check_branch
      %34 = sbr.rel (0) target = $region25
    $region24: #{multi_stage_refined_tcn.1} parent=1 // pred_region
      _
    $region25: #{multi_stage_refined_tcn.1} parent=1 // pred_fallthru
      _
    // Predicated region
    $region26: #{multi_stage_refined_tcn.1} parent=1 // pred_check
      _
    $region27: #{multi_stage_refined_tcn.1} parent=1 // pred_check_branch
      %36 = sbr.rel (0) target = $region29
    $region28: #{multi_stage_refined_tcn.1} parent=1 // pred_region
      _
    $region29: #{multi_stage_refined_tcn.1} parent=1 // pred_fallthru
      _
    // Predicated region
    $region30: #{multi_stage_refined_tcn.1} parent=1 // pred_check
      _
    $region31: #{multi_stage_refined_tcn.1} parent=1 // pred_check_branch
      %38 = sbr.rel (0) target = $region33
    $region32: #{multi_stage_refined_tcn.1} parent=1 // pred_region
      _
    $region33: #{multi_stage_refined_tcn.1} parent=1 // pred_fallthru
      _
    // Predicated region
    $region34: #{multi_stage_refined_tcn.1} parent=1 // pred_check
      _
    $region35: #{multi_stage_refined_tcn.1} parent=1 // pred_check_branch
      %40 = sbr.rel (0) target = $region37
    $region36: #{multi_stage_refined_tcn.1} parent=1 // pred_region
      _
    $region37: #{multi_stage_refined_tcn.1} parent=1 // pred_fallthru
      _
    // Predicated region
    $region38: #{multi_stage_refined_tcn.1} parent=1 // pred_check
      _
    $region39: #{multi_stage_refined_tcn.1} parent=1 // pred_check_branch
      %42 = sbr.rel (0) target = $region41
    $region40: #{multi_stage_refined_tcn.1} parent=1 // pred_region
      _
    $region41: #{multi_stage_refined_tcn.1} parent=1 // pred_fallthru
      _
    // Predicated region
    $region42: #{multi_stage_refined_tcn.1} parent=1 // pred_check
      _
    $region43: #{multi_stage_refined_tcn.1} parent=1 // pred_check_branch
      %44 = sbr.rel (0) target = $region45
    $region44: #{multi_stage_refined_tcn.1} parent=1 // pred_region
      _
    $region45: #{multi_stage_refined_tcn.1} parent=1 // pred_fallthru
      _
    // Predicated region
    $region46: #{multi_stage_refined_tcn.1} parent=1 // pred_check
      _
    $region47: #{multi_stage_refined_tcn.1} parent=1 // pred_check_branch
      %46 = sbr.rel (0) target = $region49
    $region48: #{multi_stage_refined_tcn.1} parent=1 // pred_region
      _
    $region49: #{multi_stage_refined_tcn.1} parent=1 // pred_fallthru
      _
    // Predicated region
    $region50: #{multi_stage_refined_tcn.1} parent=1 // pred_check
      _
    $region51: #{multi_stage_refined_tcn.1} parent=1 // pred_check_branch
      %48 = sbr.rel (0) target = $region53
    $region52: #{multi_stage_refined_tcn.1} parent=1 // pred_region
      _
    $region53: #{multi_stage_refined_tcn.1} parent=1 // pred_fallthru
      _
    // Predicated region
    $region54: #{multi_stage_refined_tcn.1} parent=1 // pred_check
      _
    $region55: #{multi_stage_refined_tcn.1} parent=1 // pred_check_branch
      %50 = sbr.rel (0) target = $region57
    $region56: #{multi_stage_refined_tcn.1} parent=1 // pred_region
      _
    $region57: #{multi_stage_refined_tcn.1} parent=1 // pred_fallthru
      _
    // Predicated region
    $region58: #{multi_stage_refined_tcn.1} parent=1 // pred_check
      _
    $region59: #{multi_stage_refined_tcn.1} parent=1 // pred_check_branch
      %52 = sbr.rel (0) target = $region61
    $region60: #{multi_stage_refined_tcn.1} parent=1 // pred_region
      _
    $region61: #{multi_stage_refined_tcn.1} parent=1 // pred_fallthru
      _
    // Predicated region
    $region62: #{multi_stage_refined_tcn.1} parent=1 // pred_check
      _
    $region63: #{multi_stage_refined_tcn.1} parent=1 // pred_check_branch
      %54 = sbr.rel (0) target = $region65
    $region64: #{multi_stage_refined_tcn.1} parent=1 // pred_region
      _
    $region65: #{multi_stage_refined_tcn.1} parent=1 // pred_fallthru
      _
    // Predicated region
    $region66: #{multi_stage_refined_tcn.1} parent=1 // pred_check
      _
    $region67: #{multi_stage_refined_tcn.1} parent=1 // pred_check_branch
      %56 = sbr.rel (0) target = $region69
    $region68: #{multi_stage_refined_tcn.1} parent=1 // pred_region
      _
    $region69: #{multi_stage_refined_tcn.1} parent=1 // pred_fallthru
      _
    %v57 = vlaneseq
    %v58 = vand.u32 %v57, 127
    %vm59 = vcmp.lt.s32.totalorder %v58, 16
    %v60 = vld [vmem:[%s0] sm:$0xff]
    %v61 = vld [vmem:[%s0 + $0x8] sm:$0xff]
    %s62 = scalar_lea.vmem %s0, 16
    %v63 = vld [vmem:[%s62] sm:$0xff]
    %v64 = vld [vmem:[%s62 + $0x8] sm:$0xff]
    %v65 = vld [vmem:[%s1] sm:$0xff]
    %v66 = vld [vmem:[%s1 + $0x8] sm:$0xff]
    %v67 = vld [vmem:[%s1 + $0x10] sm:$0xff]
    %v68 = vld [vmem:[%s1 + $0x18] sm:$0xff]
    %v69 = vld [vmem:[%s2] sm:$0xff]
    %v70 = vld [vmem:[%s2 + $0x8] sm:$0xff]
    %v71 = vld [vmem:[%s2 + $0x10] sm:$0xff]
    %v72 = vld [vmem:[%s2 + $0x18] sm:$0xff]
    %74 = vset.pattern.permute.xlu0 0
    %75 = vperm.xlu0 %74, %v69
    %v76 = vpop.permute.xlu0 %75
    %79 = vset.pattern.permute.xlu0 0
    %80 = vperm.xlu0 %79, %v70
    %v81 = vpop.permute.xlu0 %80
    %84 = vset.pattern.permute.xlu0 0
    %85 = vperm.xlu0 %84, %v71
    %v86 = vpop.permute.xlu0 %85
    %89 = vset.pattern.permute.xlu0 0
    %90 = vperm.xlu0 %89, %v72
    %v91 = vpop.permute.xlu0 %90
    %vm93 = vcmask 130048
    %v95 = vsel %vm93, %v65, 0
    %v98 = vsel %vm93, %v66, 0
    %v101 = vsel %vm93, %v67, 0
    %v104 = vsel %vm93, %v68, 0
    %106 = vmatprep.subr.mxu0 0.0
    %107 = vmatpush1.msra.mxu0 0.0
    %108 = vmatprep.subr.mxu0 0.0
    %109 = vmatpush1.msra.mxu0 0.0
    %110 = vmatprep.subr.mxu0 0.0
    %111 = vmatpush1.msra.mxu0 0.0
    %112 = vmatprep.subr.mxu0 0.0
    %113 = vmatpush1.msra.mxu0 0.0
    %114 = vmatprep.subr.mxu0 0.0
    %115 = vmatpush1.msra.mxu0 0.0
    %116 = vmatprep.subr.mxu0 0.0
    %117 = vmatpush1.msra.mxu0 0.0
    %118 = vmatprep.subr.mxu0 0.0
    %119 = vmatpush1.msra.mxu0 0.0
    %120 = vmatprep.subr.mxu0 0.0
    %121 = vmatpush1.msra.mxu0 0.0
    %122 = vmatprep.subr.mxu0 0.0
    %123 = vmatpush1.msra.mxu0 0.0
    %124 = vmatprep.subr.mxu0 0.0
    %125 = vmatpush1.msra.mxu0 0.0
    %126 = vmatprep.subr.mxu0 0.0
    %127 = vmatpush1.msra.mxu0 0.0
    %128 = vmatprep.subr.mxu0 0.0
    %129 = vmatpush1.msra.mxu0 0.0
    %130 = vmatprep.subr.mxu0 0.0
    %131 = vmatpush1.msra.mxu0 0.0
    %132 = vmatprep.subr.mxu0 0.0
    %133 = vmatpush1.msra.mxu0 0.0
    %134 = vmatprep.subr.mxu0 %v64
    %135 = vmatpush1.msra.mxu0 %v61
    %136 = vmatprep.subr.mxu0 %v63
    %137 = vmatpush1.msra.mxu0 %v60
    %138 = vmatprep.subr.mxu0 0.0
    %139 = vmatpush2.msra.mxu0 0.0
    %140 = vmatprep.subr.mxu0 0.0
    %141 = vmatpush2.msra.mxu0 0.0
    %142 = vmatprep.subr.mxu0 0.0
    %143 = vmatpush2.msra.mxu0 0.0
    %144 = vmatprep.subr.mxu0 0.0
    %145 = vmatpush2.msra.mxu0 0.0
    %146 = vmatprep.subr.mxu0 0.0
    %147 = vmatpush2.msra.mxu0 0.0
    %148 = vmatprep.subr.mxu0 0.0
    %149 = vmatpush2.msra.mxu0 0.0
    %150 = vmatprep.subr.mxu0 0.0
    %151 = vmatpush2.msra.mxu0 0.0
    %152 = vmatprep.subr.mxu0 0.0
    %153 = vmatpush2.msra.mxu0 0.0
    %154 = vmatprep.subr.mxu0 0.0
    %155 = vmatpush2.msra.mxu0 0.0
    %156 = vmatprep.subr.mxu0 0.0
    %157 = vmatpush2.msra.mxu0 0.0
    %158 = vmatprep.subr.mxu0 0.0
    %159 = vmatpush2.msra.mxu0 0.0
    %160 = vmatprep.subr.mxu0 0.0
    %161 = vmatpush2.msra.mxu0 0.0
    %162 = vmatprep.subr.mxu0 0.0
    %163 = vmatpush2.msra.mxu0 0.0
    %164 = vmatprep.subr.mxu0 0.0
    %165 = vmatpush2.msra.mxu0 0.0
    %166 = vmatprep.subr.mxu0 0.0
    %167 = vmatpush2.msra.mxu0 0.0
    %168 = vmatprep.subr.mxu0 0.0
    %169 = vmatpush2.msra.mxu0 0.0
    %170 = vmatprep.mubr.f32.mxu0 0.0
    %171 = vmatmul.mubr.f32.gmra.mxu0 %v95
    %v172 = vpop.f32.mrf.mxu0
    %v173 = vadd.f32 %v76, %v172
    %v174 = vpop.f32.mrf.mxu0
    %v175 = vadd.f32 %v76, %v174
    %176 = vmatprep.mubr.f32.mxu0 0.0
    %177 = vmatmul.mubr.f32.gmra.mxu0 %v98
    %v178 = vpop.f32.mrf.mxu0
    %v179 = vadd.f32 %v81, %v178
    %v180 = vpop.f32.mrf.mxu0
    %v181 = vadd.f32 %v81, %v180
    %182 = vmatprep.mubr.f32.mxu0 0.0
    %183 = vmatmul.mubr.f32.gmra.mxu0 %v101
    %v184 = vpop.f32.mrf.mxu0
    %v185 = vadd.f32 %v86, %v184
    %v186 = vpop.f32.mrf.mxu0
    %v187 = vadd.f32 %v86, %v186
    %188 = vmatprep.mubr.f32.mxu0 0.0
    %189 = vmatmul.mubr.f32.gmra.mxu0 %v104
    %v190 = vpop.f32.mrf.mxu0
    %v191 = vadd.f32 %v91, %v190
    %v192 = vpop.f32.mrf.mxu0
    %v193 = vadd.f32 %v91, %v192
    %194 = vdwg.mxu0
    %vm195 = vcmp.ge.s32.totalorder %v58, 4
    %vm196 = vcmp.lt.s32.totalorder %v58, 12
    %197 = vrot.lane.b32.xlu0 %v173, 4
    %v198 = vpop.permute.xlu0 %197
    %199 = vrot.lane.b32.xlu0 %v179, 4
    %v200 = vpop.permute.xlu0 %199
    %201 = vrot.lane.b32.xlu0 %v185, 4
    %v202 = vpop.permute.xlu0 %201
    %203 = vrot.lane.b32.xlu0 %v191, 4
    %v204 = vpop.permute.xlu0 %203
    %205 = vrot.lane.b32.xlu0 %v175, 4
    %v206 = vpop.permute.xlu0 %205
    %207 = vrot.lane.b32.xlu0 %v181, 4
    %v208 = vpop.permute.xlu0 %207
    %209 = vrot.lane.b32.xlu0 %v187, 4
    %v210 = vpop.permute.xlu0 %209
    %211 = vrot.lane.b32.xlu0 %v193, 4
    %v212 = vpop.permute.xlu0 %211
    %vm213 = vcmp.lt.s32.totalorder %v58, 4
    %v214 = vsel %vm213, %v198, %v206
    %v215 = vsel %vm213, %v200, %v208
    %v216 = vsel %vm213, %v202, %v210
    %v217 = vsel %vm213, %v204, %v212
    %v218 = vsel %vm213, %v206, %v198
    %v219 = vsel %vm213, %v208, %v200
    %v220 = vsel %vm213, %v210, %v202
    %v221 = vsel %vm213, %v212, %v204
    %v222 = vsel %vm195, 1, 0
    %v223 = vlaneseq
    %v224 = vshrl.u32 %v223, 7
    %v225 = vsub.s32 0, %v224
    %v226 = vrot.slane %v222, %v225
    %vm227 = vcmp.eq.s32.totalorder %v226, 1
    %v228 = vsel %vm227, %v218, 0.0
    %v229 = vsel %vm227, %v214, 0.0
    %v230 = vsel %vm227, %v219, 0.0
    %v231 = vsel %vm227, %v215, 0.0
    %v232 = vsel %vm227, %v220, 0.0
    %v233 = vsel %vm227, %v216, 0.0
    %v234 = vsel %vm227, %v221, 0.0
    %v235 = vsel %vm227, %v217, 0.0
    %236 = vrot.lane.b32.xlu0 %v173, 124
    %v237 = vpop.permute.xlu0 %236
    %238 = vrot.lane.b32.xlu0 %v179, 124
    %v239 = vpop.permute.xlu0 %238
    %240 = vrot.lane.b32.xlu0 %v185, 124
    %v241 = vpop.permute.xlu0 %240
    %242 = vrot.lane.b32.xlu0 %v191, 124
    %v243 = vpop.permute.xlu0 %242
    %244 = vrot.lane.b32.xlu0 %v175, 124
    %v245 = vpop.permute.xlu0 %244
    %246 = vrot.lane.b32.xlu0 %v181, 124
    %v247 = vpop.permute.xlu0 %246
    %248 = vrot.lane.b32.xlu0 %v187, 124
    %v249 = vpop.permute.xlu0 %248
    %250 = vrot.lane.b32.xlu0 %v193, 124
    %v251 = vpop.permute.xlu0 %250
    %vm252 = vcmp.lt.s32.totalorder %v58, 124
    %v253 = vsel %vm252, %v237, %v245
    %v254 = vsel %vm252, %v239, %v247
    %v255 = vsel %vm252, %v241, %v249
    %v256 = vsel %vm252, %v243, %v251
    %v257 = vsel %vm252, %v245, %v237
    %v258 = vsel %vm252, %v247, %v239
    %v259 = vsel %vm252, %v249, %v241
    %v260 = vsel %vm252, %v251, %v243
    %v261 = vsel %vm196, 1, 0
    %v262 = vlaneseq
    %v263 = vshrl.u32 %v262, 7
    %v264 = vsub.s32 0, %v263
    %v265 = vrot.slane %v261, %v264
    %vm266 = vcmp.eq.s32.totalorder %v265, 1
    %v267 = vsel %vm266, %v253, 0.0
    %v268 = vsel %vm266, %v257, 0.0
    %v269 = vsel %vm266, %v254, 0.0
    %v270 = vsel %vm266, %v258, 0.0
    %v271 = vsel %vm266, %v255, 0.0
    %v272 = vsel %vm266, %v259, 0.0
    %v273 = vsel %vm266, %v256, 0.0
    %v274 = vsel %vm266, %v260, 0.0
    %vm275 = vcmp.ge.s32.totalorder %v58, 1
    %vm276 = vcmp.lt.s32.totalorder %v58, 15
    %277 = vrot.lane.b32.xlu0 %v173, 1
    %v278 = vpop.permute.xlu0 %277
    %279 = vrot.lane.b32.xlu0 %v179, 1
    %v280 = vpop.permute.xlu0 %279
    %281 = vrot.lane.b32.xlu0 %v185, 1
    %v282 = vpop.permute.xlu0 %281
    %283 = vrot.lane.b32.xlu0 %v191, 1
    %v284 = vpop.permute.xlu0 %283
    %285 = vrot.lane.b32.xlu0 %v175, 1
    %v286 = vpop.permute.xlu0 %285
    %287 = vrot.lane.b32.xlu0 %v181, 1
    %v288 = vpop.permute.xlu0 %287
    %289 = vrot.lane.b32.xlu0 %v187, 1
    %v290 = vpop.permute.xlu0 %289
    %291 = vrot.lane.b32.xlu0 %v193, 1
    %v292 = vpop.permute.xlu0 %291
    %vm293 = vcmp.lt.s32.totalorder %v58, 1
    %v294 = vsel %vm293, %v278, %v286
    %v295 = vsel %vm293, %v280, %v288
    %v296 = vsel %vm293, %v282, %v290
    %v297 = vsel %vm293, %v284, %v292
    %v298 = vsel %vm293, %v286, %v278
    %v299 = vsel %vm293, %v288, %v280
    %v300 = vsel %vm293, %v290, %v282
    %v301 = vsel %vm293, %v292, %v284
    %v302 = vsel %vm275, 1, 0
    %v303 = vlaneseq
    %v304 = vshrl.u32 %v303, 7
    %v305 = vsub.s32 0, %v304
    %v306 = vrot.slane %v302, %v305
    %vm307 = vcmp.eq.s32.totalorder %v306, 1
    %v308 = vsel %vm307, %v298, 0.0
    %v309 = vsel %vm307, %v294, 0.0
    %v310 = vsel %vm307, %v299, 0.0
    %v311 = vsel %vm307, %v295, 0.0
    %v312 = vsel %vm307, %v300, 0.0
    %v313 = vsel %vm307, %v296, 0.0
    %v314 = vsel %vm307, %v301, 0.0
    %v315 = vsel %vm307, %v297, 0.0
    %316 = vrot.lane.b32.xlu0 %v173, 127
    %v317 = vpop.permute.xlu0 %316
    %318 = vrot.lane.b32.xlu0 %v179, 127
    %v319 = vpop.permute.xlu0 %318
    %320 = vrot.lane.b32.xlu0 %v185, 127
    %v321 = vpop.permute.xlu0 %320
    %322 = vrot.lane.b32.xlu0 %v191, 127
    %v323 = vpop.permute.xlu0 %322
    %324 = vrot.lane.b32.xlu0 %v175, 127
    %v325 = vpop.permute.xlu0 %324
    %326 = vrot.lane.b32.xlu0 %v181, 127
    %v327 = vpop.permute.xlu0 %326
    %328 = vrot.lane.b32.xlu0 %v187, 127
    %v329 = vpop.permute.xlu0 %328
    %330 = vrot.lane.b32.xlu0 %v193, 127
    %v331 = vpop.permute.xlu0 %330
    %vm332 = vcmp.lt.s32.totalorder %v58, 127
    %v333 = vsel %vm332, %v317, %v325
    %v334 = vsel %vm332, %v319, %v327
    %v335 = vsel %vm332, %v321, %v329
    %v336 = vsel %vm332, %v323, %v331
    %v337 = vsel %vm332, %v325, %v317
    %v338 = vsel %vm332, %v327, %v319
    %v339 = vsel %vm332, %v329, %v321
    %v340 = vsel %vm332, %v331, %v323
    %v341 = vsel %vm276, 1, 0
    %v342 = vlaneseq
    %v343 = vshrl.u32 %v342, 7
    %v344 = vsub.s32 0, %v343
    %v345 = vrot.slane %v341, %v344
    %vm346 = vcmp.eq.s32.totalorder %v345, 1
    %v347 = vsel %vm346, %v333, 0.0
    %v348 = vsel %vm346, %v337, 0.0
    %v349 = vsel %vm346, %v334, 0.0
    %v350 = vsel %vm346, %v338, 0.0
    %v351 = vsel %vm346, %v335, 0.0
    %v352 = vsel %vm346, %v339, 0.0
    %v353 = vsel %vm346, %v336, 0.0
    %v354 = vsel %vm346, %v340, 0.0
    %355 = vst [vmem:[#allocation2] sm:$0xff] %v228
    %356 = vst [vmem:[#allocation2 + $0x8] sm:$0xff] %v229
    %357 = vst [vmem:[#allocation2 + $0x10] sm:$0xff] %v230
    %358 = vst [vmem:[#allocation2 + $0x18] sm:$0xff] %v231
    %359 = vst [vmem:[#allocation2 + $0x20] sm:$0xff] %v232
    %360 = vst [vmem:[#allocation2 + $0x28] sm:$0xff] %v233
    %361 = vst [vmem:[#allocation2 + $0x30] sm:$0xff] %v234
    %362 = vst [vmem:[#allocation2 + $0x38] sm:$0xff] %v235
    %363 = vst [vmem:[#allocation2 + $0x40] sm:$0xff] %v308
    %364 = vst [vmem:[#allocation2 + $0x48] sm:$0xff] %v309
    %365 = vst [vmem:[#allocation2 + $0x50] sm:$0xff] %v310
    %366 = vst [vmem:[#allocation2 + $0x58] sm:$0xff] %v311
    %367 = vst [vmem:[#allocation2 + $0x60] sm:$0xff] %v312
    %368 = vst [vmem:[#allocation2 + $0x68] sm:$0xff] %v313
    %369 = vst [vmem:[#allocation2 + $0x70] sm:$0xff] %v314
    %370 = vst [vmem:[#allocation2 + $0x78] sm:$0xff] %v315
    %371 = vst [vmem:[#allocation2 + $0x80] sm:$0xff] %v173
    %372 = vst [vmem:[#allocation2 + $0x88] sm:$0xff] %v175
    %373 = vst [vmem:[#allocation2 + $0x90] sm:$0xff] %v179
    %374 = vst [vmem:[#allocation2 + $0x98] sm:$0xff] %v181
    %375 = vst [vmem:[#allocation2 + $0xa0] sm:$0xff] %v185
    %376 = vst [vmem:[#allocation2 + $0xa8] sm:$0xff] %v187
    %377 = vst [vmem:[#allocation2 + $0xb0] sm:$0xff] %v191
    %378 = vst [vmem:[#allocation2 + $0xb8] sm:$0xff] %v193
    %379 = vst [vmem:[#allocation2 + $0xc0] sm:$0xff] %v267
    %380 = vst [vmem:[#allocation2 + $0xc8] sm:$0xff] %v268
    %381 = vst [vmem:[#allocation2 + $0xd0] sm:$0xff] %v269
    %382 = vst [vmem:[#allocation2 + $0xd8] sm:$0xff] %v270
    %383 = vst [vmem:[#allocation2 + $0xe0] sm:$0xff] %v271
    %384 = vst [vmem:[#allocation2 + $0xe8] sm:$0xff] %v272
    %385 = vst [vmem:[#allocation2 + $0xf0] sm:$0xff] %v273
    %386 = vst [vmem:[#allocation2 + $0xf8] sm:$0xff] %v274
    %387 = vst [vmem:[#allocation2 + $0x100] sm:$0xff] %v347
    %388 = vst [vmem:[#allocation2 + $0x108] sm:$0xff] %v348
    %389 = vst [vmem:[#allocation2 + $0x110] sm:$0xff] %v349
    %390 = vst [vmem:[#allocation2 + $0x118] sm:$0xff] %v350
    %391 = vst [vmem:[#allocation2 + $0x120] sm:$0xff] %v351
    %392 = vst [vmem:[#allocation2 + $0x128] sm:$0xff] %v352
    %393 = vst [vmem:[#allocation2 + $0x130] sm:$0xff] %v353
    %394 = vst [vmem:[#allocation2 + $0x138] sm:$0xff] %v354
    %v395 = vld [vmem:[%s3] sm:$0xff]
    %v396 = vld [vmem:[%s3 + $0x8] sm:$0xff]
    %v397 = vld [vmem:[%s3 + $0x10] sm:$0xff]
    %v398 = vld [vmem:[%s3 + $0x18] sm:$0xff]
    %v399 = vld [vmem:[%s3 + $0x20] sm:$0xff]
    %v400 = vld [vmem:[%s3 + $0x28] sm:$0xff]
    %v401 = vld [vmem:[%s3 + $0x30] sm:$0xff]
    %v402 = vld [vmem:[%s3 + $0x38] sm:$0xff]
    %v403 = vld [vmem:[%s3 + $0x40] sm:$0xff]
    %v404 = vld [vmem:[%s3 + $0x48] sm:$0xff]
    %v405 = vld [vmem:[%s3 + $0x50] sm:$0xff]
    %v406 = vld [vmem:[%s3 + $0x58] sm:$0xff]
    %v407 = vld [vmem:[%s3 + $0x60] sm:$0xff]
    %v408 = vld [vmem:[%s3 + $0x68] sm:$0xff]
    %v409 = vld [vmem:[%s3 + $0x70] sm:$0xff]
    %v410 = vld [vmem:[%s3 + $0x78] sm:$0xff]
    %v411 = vld [vmem:[#allocation2] sm:$0xff]
    %v412 = vld [vmem:[#allocation2 + $0x8] sm:$0xff]
    %v413 = vld [vmem:[#allocation2 + $0x10] sm:$0xff]
    %v414 = vld [vmem:[#allocation2 + $0x18] sm:$0xff]
    %v415 = vld [vmem:[#allocation2 + $0x20] sm:$0xff]
    %v416 = vld [vmem:[#allocation2 + $0x28] sm:$0xff]
    %v417 = vld [vmem:[#allocation2 + $0x30] sm:$0xff]
    %v418 = vld [vmem:[#allocation2 + $0x38] sm:$0xff]
    %v419 = vld [vmem:[#allocation2 + $0x40] sm:$0xff]
    %v420 = vld [vmem:[#allocation2 + $0x48] sm:$0xff]
    %v421 = vld [vmem:[#allocation2 + $0x50] sm:$0xff]
    %v422 = vld [vmem:[#allocation2 + $0x58] sm:$0xff]
    %v423 = vld [vmem:[#allocation2 + $0x60] sm:$0xff]
    %v424 = vld [vmem:[#allocation2 + $0x68] sm:$0xff]
    %v425 = vld [vmem:[#allocation2 + $0x70] sm:$0xff]
    %v426 = vld [vmem:[#allocation2 + $0x78] sm:$0xff]
    %v427 = vld [vmem:[#allocation2 + $0x80] sm:$0xff]
    %v428 = vld [vmem:[#allocation2 + $0x88] sm:$0xff]
    %v429 = vld [vmem:[#allocation2 + $0x90] sm:$0xff]
    %v430 = vld [vmem:[#allocation2 + $0x98] sm:$0xff]
    %v431 = vld [vmem:[#allocation2 + $0xa0] sm:$0xff]
    %v432 = vld [vmem:[#allocation2 + $0xa8] sm:$0xff]
    %v433 = vld [vmem:[#allocation2 + $0xb0] sm:$0xff]
    %v434 = vld [vmem:[#allocation2 + $0xb8] sm:$0xff]
    %v435 = vld [vmem:[#allocation2 + $0xc0] sm:$0xff]
    %v436 = vld [vmem:[#allocation2 + $0xc8] sm:$0xff]
    %v437 = vld [vmem:[#allocation2 + $0xd0] sm:$0xff]
    %v438 = vld [vmem:[#allocation2 + $0xd8] sm:$0xff]
    %v439 = vld [vmem:[#allocation2 + $0xe0] sm:$0xff]
    %v440 = vld [vmem:[#allocation2 + $0xe8] sm:$0xff]
    %v441 = vld [vmem:[#allocation2 + $0xf0] sm:$0xff]
    %v442 = vld [vmem:[#allocation2 + $0xf8] sm:$0xff]
    %v443 = vld [vmem:[#allocation2 + $0x100] sm:$0xff]
    %v444 = vld [vmem:[#allocation2 + $0x108] sm:$0xff]
    %v445 = vld [vmem:[#allocation2 + $0x110] sm:$0xff]
    %v446 = vld [vmem:[#allocation2 + $0x118] sm:$0xff]
    %v447 = vld [vmem:[#allocation2 + $0x120] sm:$0xff]
    %v448 = vld [vmem:[#allocation2 + $0x128] sm:$0xff]
    %v449 = vld [vmem:[#allocation2 + $0x130] sm:$0xff]
    %v450 = vld [vmem:[#allocation2 + $0x138] sm:$0xff]
    %v451 = vld [vmem:[%s4] sm:$0xff]
    %v452 = vld [vmem:[%s4 + $0x8] sm:$0xff]
    %v453 = vld [vmem:[%s4 + $0x10] sm:$0xff]
    %v454 = vld [vmem:[%s4 + $0x18] sm:$0xff]
    %v455 = vld [vmem:[%s4 + $0x20] sm:$0xff]
    %v456 = vld [vmem:[%s4 + $0x28] sm:$0xff]
    %v457 = vld [vmem:[%s4 + $0x30] sm:$0xff]
    %v458 = vld [vmem:[%s4 + $0x38] sm:$0xff]
    %460 = vset.pattern.permute.xlu0 0
    %461 = vperm.xlu0 %460, %v451
    %v462 = vpop.permute.xlu0 %461
    %465 = vset.pattern.permute.xlu0 0
    %466 = vperm.xlu0 %465, %v452
    %v467 = vpop.permute.xlu0 %466
    %470 = vset.pattern.permute.xlu0 0
    %471 = vperm.xlu0 %470, %v453
    %v472 = vpop.permute.xlu0 %471
    %475 = vset.pattern.permute.xlu0 0
    %476 = vperm.xlu0 %475, %v454
    %v477 = vpop.permute.xlu0 %476
    %480 = vset.pattern.permute.xlu0 0
    %481 = vperm.xlu0 %480, %v455
    %v482 = vpop.permute.xlu0 %481
    %485 = vset.pattern.permute.xlu0 0
    %486 = vperm.xlu0 %485, %v456
    %v487 = vpop.permute.xlu0 %486
    %490 = vset.pattern.permute.xlu0 0
    %491 = vperm.xlu0 %490, %v457
    %v492 = vpop.permute.xlu0 %491
    %495 = vset.pattern.permute.xlu0 0
    %496 = vperm.xlu0 %495, %v458
    %v497 = vpop.permute.xlu0 %496
    %vm499 = vcmask 261120
    %v501 = vsel %vm499, %v396, 0
    %v504 = vsel %vm499, %v398, 0
    %v507 = vsel %vm499, %v400, 0
    %v510 = vsel %vm499, %v402, 0
    %v513 = vsel %vm499, %v404, 0
    %v516 = vsel %vm499, %v406, 0
    %v519 = vsel %vm499, %v408, 0
    %v522 = vsel %vm499, %v410, 0
    %524 = vmatprep.subr.mxu0 %v442
    %525 = vmatpush1.msra.mxu0 %v441
    %526 = vmatprep.subr.mxu0 %v440
    %527 = vmatpush1.msra.mxu0 %v439
    %528 = vmatprep.subr.mxu0 %v438
    %529 = vmatpush1.msra.mxu0 %v437
    %530 = vmatprep.subr.mxu0 %v436
    %531 = vmatpush1.msra.mxu0 %v435
    %532 = vmatprep.subr.mxu0 %v434
    %533 = vmatpush1.msra.mxu0 %v433
    %534 = vmatprep.subr.mxu0 %v432
    %535 = vmatpush1.msra.mxu0 %v431
    %536 = vmatprep.subr.mxu0 %v430
    %537 = vmatpush1.msra.mxu0 %v429
    %538 = vmatprep.subr.mxu0 %v428
    %539 = vmatpush1.msra.mxu0 %v427
    %540 = vmatprep.subr.mxu0 %v426
    %541 = vmatpush1.msra.mxu0 %v425
    %542 = vmatprep.subr.mxu0 %v424
    %543 = vmatpush1.msra.mxu0 %v423
    %544 = vmatprep.subr.mxu0 %v422
    %545 = vmatpush1.msra.mxu0 %v421
    %546 = vmatprep.subr.mxu0 %v420
    %547 = vmatpush1.msra.mxu0 %v419
    %548 = vmatprep.subr.mxu0 %v418
    %549 = vmatpush1.msra.mxu0 %v417
    %550 = vmatprep.subr.mxu0 %v416
    %551 = vmatpush1.msra.mxu0 %v415
    %552 = vmatprep.subr.mxu0 %v414
    %553 = vmatpush1.msra.mxu0 %v413
    %554 = vmatprep.subr.mxu0 %v412
    %555 = vmatpush1.msra.mxu0 %v411
    %556 = vmatprep.subr.mxu0 0.0
    %557 = vmatpush2.msra.mxu0 0.0
    %558 = vmatprep.subr.mxu0 0.0
    %559 = vmatpush2.msra.mxu0 0.0
    %560 = vmatprep.subr.mxu0 0.0
    %561 = vmatpush2.msra.mxu0 0.0
    %562 = vmatprep.subr.mxu0 0.0
    %563 = vmatpush2.msra.mxu0 0.0
    %564 = vmatprep.subr.mxu0 0.0
    %565 = vmatpush2.msra.mxu0 0.0
    %566 = vmatprep.subr.mxu0 0.0
    %567 = vmatpush2.msra.mxu0 0.0
    %568 = vmatprep.subr.mxu0 0.0
    %569 = vmatpush2.msra.mxu0 0.0
    %570 = vmatprep.subr.mxu0 0.0
    %571 = vmatpush2.msra.mxu0 0.0
    %572 = vmatprep.subr.mxu0 0.0
    %573 = vmatpush2.msra.mxu0 0.0
    %574 = vmatprep.subr.mxu0 0.0
    %575 = vmatpush2.msra.mxu0 0.0
    %576 = vmatprep.subr.mxu0 0.0
    %577 = vmatpush2.msra.mxu0 0.0
    %578 = vmatprep.subr.mxu0 0.0
    %579 = vmatpush2.msra.mxu0 0.0
    %580 = vmatprep.subr.mxu0 %v450
    %581 = vmatpush2.msra.mxu0 %v449
    %582 = vmatprep.subr.mxu0 %v448
    %583 = vmatpush2.msra.mxu0 %v447
    %584 = vmatprep.subr.mxu0 %v446
    %585 = vmatpush2.msra.mxu0 %v445
    %586 = vmatprep.subr.mxu0 %v444
    %587 = vmatpush2.msra.mxu0 %v443
    %588 = vmatprep.mubr.f32.mxu0 %v501
    %589 = vmatmul.mubr.f32.gmra.mxu0 %v395
    %v590 = vpop.f32.mrf.mxu0
    %v591 = vadd.f32 %v462, %v590
    %v592 = vpop.f32.mrf.mxu0
    %v593 = vadd.f32 %v462, %v592
    %594 = vmatprep.mubr.f32.mxu0 %v504
    %595 = vmatmul.mubr.f32.gmra.mxu0 %v397
    %v596 = vpop.f32.mrf.mxu0
    %v597 = vadd.f32 %v467, %v596
    %v598 = vpop.f32.mrf.mxu0
    %v599 = vadd.f32 %v467, %v598
    %600 = vmatprep.mubr.f32.mxu0 %v507
    %601 = vmatmul.mubr.f32.gmra.mxu0 %v399
    %v602 = vpop.f32.mrf.mxu0
    %v603 = vadd.f32 %v472, %v602
    %v604 = vpop.f32.mrf.mxu0
    %v605 = vadd.f32 %v472, %v604
    %606 = vmatprep.mubr.f32.mxu0 %v510
    %607 = vmatmul.mubr.f32.gmra.mxu0 %v401
    %v608 = vpop.f32.mrf.mxu0
    %v609 = vadd.f32 %v477, %v608
    %v610 = vpop.f32.mrf.mxu0
    %v611 = vadd.f32 %v477, %v610
    %612 = vmatprep.mubr.f32.mxu0 %v513
    %613 = vmatmul.mubr.f32.gmra.mxu0 %v403
    %v614 = vpop.f32.mrf.mxu0
    %v615 = vadd.f32 %v482, %v614
    %v616 = vpop.f32.mrf.mxu0
    %v617 = vadd.f32 %v482, %v616
    %618 = vmatprep.mubr.f32.mxu0 %v516
    %619 = vmatmul.mubr.f32.gmra.mxu0 %v405
    %v620 = vpop.f32.mrf.mxu0
    %v621 = vadd.f32 %v487, %v620
    %v622 = vpop.f32.mrf.mxu0
    %v623 = vadd.f32 %v487, %v622
    %624 = vmatprep.mubr.f32.mxu0 %v519
    %625 = vmatmul.mubr.f32.gmra.mxu0 %v407
    %v626 = vpop.f32.mrf.mxu0
    %v627 = vadd.f32 %v492, %v626
    %v628 = vpop.f32.mrf.mxu0
    %v629 = vadd.f32 %v492, %v628
    %630 = vmatprep.mubr.f32.mxu0 %v522
    %631 = vmatmul.mubr.f32.gmra.mxu0 %v409
    %v632 = vpop.f32.mrf.mxu0
    %v633 = vadd.f32 %v497, %v632
    %v634 = vpop.f32.mrf.mxu0
    %v635 = vadd.f32 %v497, %v634
    %636 = vdwg.mxu0
    %v637 = vld [vmem:[%s5] sm:$0xff]
    %v638 = vld [vmem:[%s5 + $0x8] sm:$0xff]
    %v639 = vld [vmem:[%s5 + $0x10] sm:$0xff]
    %v640 = vld [vmem:[%s5 + $0x18] sm:$0xff]
    %v641 = vld [vmem:[%s6] sm:$0xff]
    %v642 = vld [vmem:[%s6 + $0x8] sm:$0xff]
    %v643 = vld [vmem:[%s6 + $0x10] sm:$0xff]
    %v644 = vld [vmem:[%s6 + $0x18] sm:$0xff]
    %646 = vset.pattern.permute.xlu0 0
    %647 = vperm.xlu0 %646, %v641
    %v648 = vpop.permute.xlu0 %647
    %651 = vset.pattern.permute.xlu0 0
    %652 = vperm.xlu0 %651, %v642
    %v653 = vpop.permute.xlu0 %652
    %656 = vset.pattern.permute.xlu0 0
    %657 = vperm.xlu0 %656, %v643
    %v658 = vpop.permute.xlu0 %657
    %661 = vset.pattern.permute.xlu0 0
    %662 = vperm.xlu0 %661, %v644
    %v663 = vpop.permute.xlu0 %662
    %vm665 = vcmask 523264
    %v667 = vsel %vm665, %v637, 0
    %v670 = vsel %vm665, %v638, 0
    %v673 = vsel %vm665, %v639, 0
    %v676 = vsel %vm665, %v640, 0
    %678 = vmatprep.subr.mxu0 0.0
    %679 = vmatpush1.msra.mxu0 0.0
    %680 = vmatprep.subr.mxu0 0.0
    %681 = vmatpush1.msra.mxu0 0.0
    %682 = vmatprep.subr.mxu0 0.0
    %683 = vmatpush1.msra.mxu0 0.0
    %684 = vmatprep.subr.mxu0 0.0
    %685 = vmatpush1.msra.mxu0 0.0
    %686 = vmatprep.subr.mxu0 0.0
    %687 = vmatpush1.msra.mxu0 0.0
    %688 = vmatprep.subr.mxu0 0.0
    %689 = vmatpush1.msra.mxu0 0.0
    %690 = vmatprep.subr.mxu0 0.0
    %691 = vmatpush1.msra.mxu0 0.0
    %692 = vmatprep.subr.mxu0 0.0
    %693 = vmatpush1.msra.mxu0 0.0
    %694 = vmatprep.subr.mxu0 %v635
    %695 = vmatpush1.msra.mxu0 %v633
    %696 = vmatprep.subr.mxu0 %v629
    %697 = vmatpush1.msra.mxu0 %v627
    %698 = vmatprep.subr.mxu0 %v623
    %699 = vmatpush1.msra.mxu0 %v621
    %700 = vmatprep.subr.mxu0 %v617
    %701 = vmatpush1.msra.mxu0 %v615
    %702 = vmatprep.subr.mxu0 %v611
    %703 = vmatpush1.msra.mxu0 %v609
    %704 = vmatprep.subr.mxu0 %v605
    %705 = vmatpush1.msra.mxu0 %v603
    %706 = vmatprep.subr.mxu0 %v599
    %707 = vmatpush1.msra.mxu0 %v597
    %708 = vmatprep.subr.mxu0 %v593
    %709 = vmatpush1.msra.mxu0 %v591
    %710 = vmatprep.subr.mxu0 0.0
    %711 = vmatpush2.msra.mxu0 0.0
    %712 = vmatprep.subr.mxu0 0.0
    %713 = vmatpush2.msra.mxu0 0.0
    %714 = vmatprep.subr.mxu0 0.0
    %715 = vmatpush2.msra.mxu0 0.0
    %716 = vmatprep.subr.mxu0 0.0
    %717 = vmatpush2.msra.mxu0 0.0
    %718 = vmatprep.subr.mxu0 0.0
    %719 = vmatpush2.msra.mxu0 0.0
    %720 = vmatprep.subr.mxu0 0.0
    %721 = vmatpush2.msra.mxu0 0.0
    %722 = vmatprep.subr.mxu0 0.0
    %723 = vmatpush2.msra.mxu0 0.0
    %724 = vmatprep.subr.mxu0 0.0
    %725 = vmatpush2.msra.mxu0 0.0
    %726 = vmatprep.subr.mxu0 0.0
    %727 = vmatpush2.msra.mxu0 0.0
    %728 = vmatprep.subr.mxu0 0.0
    %729 = vmatpush2.msra.mxu0 0.0
    %730 = vmatprep.subr.mxu0 0.0
    %731 = vmatpush2.msra.mxu0 0.0
    %732 = vmatprep.subr.mxu0 0.0
    %733 = vmatpush2.msra.mxu0 0.0
    %734 = vmatprep.subr.mxu0 0.0
    %735 = vmatpush2.msra.mxu0 0.0
    %736 = vmatprep.subr.mxu0 0.0
    %737 = vmatpush2.msra.mxu0 0.0
    %738 = vmatprep.subr.mxu0 0.0
    %739 = vmatpush2.msra.mxu0 0.0
    %740 = vmatprep.subr.mxu0 0.0
    %741 = vmatpush2.msra.mxu0 0.0
    %742 = vmatprep.mubr.f32.mxu0 0.0
    %743 = vmatmul.mubr.f32.gmra.mxu0 %v667
    %v744 = vpop.f32.mrf.mxu0
    %v745 = vadd.f32 %v648, %v744
    %v746 = vpop.f32.mrf.mxu0
    %v747 = vadd.f32 %v648, %v746
    %748 = vmatprep.mubr.f32.mxu0 0.0
    %749 = vmatmul.mubr.f32.gmra.mxu0 %v670
    %v750 = vpop.f32.mrf.mxu0
    %v751 = vadd.f32 %v653, %v750
    %v752 = vpop.f32.mrf.mxu0
    %v753 = vadd.f32 %v653, %v752
    %754 = vmatprep.mubr.f32.mxu0 0.0
    %755 = vmatmul.mubr.f32.gmra.mxu0 %v673
    %v756 = vpop.f32.mrf.mxu0
    %v757 = vadd.f32 %v658, %v756
    %v758 = vpop.f32.mrf.mxu0
    %v759 = vadd.f32 %v658, %v758
    %760 = vmatprep.mubr.f32.mxu0 0.0
    %761 = vmatmul.mubr.f32.gmra.mxu0 %v676
    %v762 = vpop.f32.mrf.mxu0
    %v763 = vadd.f32 %v663, %v762
    %v764 = vpop.f32.mrf.mxu0
    %v765 = vadd.f32 %v663, %v764
    %766 = vdwg.mxu0
    %v767 = vmax.f32 %v745, 0.0
    %v768 = vmax.f32 %v747, 0.0
    %v769 = vmax.f32 %v751, 0.0
    %v770 = vmax.f32 %v753, 0.0
    %v771 = vmax.f32 %v757, 0.0
    %v772 = vmax.f32 %v759, 0.0
    %v773 = vmax.f32 %v763, 0.0
    %v774 = vmax.f32 %v765, 0.0
    %v775 = vadd.f32 %v173, %v767
    %v776 = vadd.f32 %v175, %v768
    %v777 = vadd.f32 %v179, %v769
    %v778 = vadd.f32 %v181, %v770
    %v779 = vadd.f32 %v185, %v771
    %v780 = vadd.f32 %v187, %v772
    %v781 = vadd.f32 %v191, %v773
    %v782 = vadd.f32 %v193, %v774
    %vm783 = vcmp.ge.s32.totalorder %v58, 2
    %vm784 = vcmp.lt.s32.totalorder %v58, 14
    %785 = vrot.lane.b32.xlu0 %v775, 2
    %v786 = vpop.permute.xlu0 %785
    %787 = vrot.lane.b32.xlu0 %v777, 2
    %v788 = vpop.permute.xlu0 %787
    %789 = vrot.lane.b32.xlu0 %v779, 2
    %v790 = vpop.permute.xlu0 %789
    %791 = vrot.lane.b32.xlu0 %v781, 2
    %v792 = vpop.permute.xlu0 %791
    %793 = vrot.lane.b32.xlu0 %v776, 2
    %v794 = vpop.permute.xlu0 %793
    %795 = vrot.lane.b32.xlu0 %v778, 2
    %v796 = vpop.permute.xlu0 %795
    %797 = vrot.lane.b32.xlu0 %v780, 2
    %v798 = vpop.permute.xlu0 %797
    %799 = vrot.lane.b32.xlu0 %v782, 2
    %v800 = vpop.permute.xlu0 %799
    %vm801 = vcmp.lt.s32.totalorder %v58, 2
    %v802 = vsel %vm801, %v786, %v794
    %v803 = vsel %vm801, %v788, %v796
    %v804 = vsel %vm801, %v790, %v798
    %v805 = vsel %vm801, %v792, %v800
    %v806 = vsel %vm801, %v794, %v786
    %v807 = vsel %vm801, %v796, %v788
    %v808 = vsel %vm801, %v798, %v790
    %v809 = vsel %vm801, %v800, %v792
    %v810 = vsel %vm783, 1, 0
    %v811 = vlaneseq
    %v812 = vshrl.u32 %v811, 7
    %v813 = vsub.s32 0, %v812
    %v814 = vrot.slane %v810, %v813
    %vm815 = vcmp.eq.s32.totalorder %v814, 1
    %v816 = vsel %vm815, %v806, 0.0
    %v817 = vsel %vm815, %v802, 0.0
    %v818 = vsel %vm815, %v807, 0.0
    %v819 = vsel %vm815, %v803, 0.0
    %v820 = vsel %vm815, %v808, 0.0
    %v821 = vsel %vm815, %v804, 0.0
    %v822 = vsel %vm815, %v809, 0.0
    %v823 = vsel %vm815, %v805, 0.0
    %824 = vrot.lane.b32.xlu0 %v775, 126
    %v825 = vpop.permute.xlu0 %824
    %826 = vrot.lane.b32.xlu0 %v777, 126
    %v827 = vpop.permute.xlu0 %826
    %828 = vrot.lane.b32.xlu0 %v779, 126
    %v829 = vpop.permute.xlu0 %828
    %830 = vrot.lane.b32.xlu0 %v781, 126
    %v831 = vpop.permute.xlu0 %830
    %832 = vrot.lane.b32.xlu0 %v776, 126
    %v833 = vpop.permute.xlu0 %832
    %834 = vrot.lane.b32.xlu0 %v778, 126
    %v835 = vpop.permute.xlu0 %834
    %836 = vrot.lane.b32.xlu0 %v780, 126
    %v837 = vpop.permute.xlu0 %836
    %838 = vrot.lane.b32.xlu0 %v782, 126
    %v839 = vpop.permute.xlu0 %838
    %vm840 = vcmp.lt.s32.totalorder %v58, 126
    %v841 = vsel %vm840, %v825, %v833
    %v842 = vsel %vm840, %v827, %v835
    %v843 = vsel %vm840, %v829, %v837
    %v844 = vsel %vm840, %v831, %v839
    %v845 = vsel %vm840, %v833, %v825
    %v846 = vsel %vm840, %v835, %v827
    %v847 = vsel %vm840, %v837, %v829
    %v848 = vsel %vm840, %v839, %v831
    %v849 = vsel %vm784, 1, 0
    %v850 = vlaneseq
    %v851 = vshrl.u32 %v850, 7
    %v852 = vsub.s32 0, %v851
    %v853 = vrot.slane %v849, %v852
    %vm854 = vcmp.eq.s32.totalorder %v853, 1
    %v855 = vsel %vm854, %v841, 0.0
    %v856 = vsel %vm854, %v845, 0.0
    %v857 = vsel %vm854, %v842, 0.0
    %v858 = vsel %vm854, %v846, 0.0
    %v859 = vsel %vm854, %v843, 0.0
    %v860 = vsel %vm854, %v847, 0.0
    %v861 = vsel %vm854, %v844, 0.0
    %v862 = vsel %vm854, %v848, 0.0
    %863 = vst [vmem:[#allocation2] sm:$0xff] %v816
    %864 = vst [vmem:[#allocation2 + $0x8] sm:$0xff] %v817
    %865 = vst [vmem:[#allocation2 + $0x10] sm:$0xff] %v818
    %866 = vst [vmem:[#allocation2 + $0x18] sm:$0xff] %v819
    %867 = vst [vmem:[#allocation2 + $0x20] sm:$0xff] %v820
    %868 = vst [vmem:[#allocation2 + $0x28] sm:$0xff] %v821
    %869 = vst [vmem:[#allocation2 + $0x30] sm:$0xff] %v822
    %870 = vst [vmem:[#allocation2 + $0x38] sm:$0xff] %v823
    %871 = vst [vmem:[#allocation2 + $0x40] sm:$0xff] %v816
    %872 = vst [vmem:[#allocation2 + $0x48] sm:$0xff] %v817
    %873 = vst [vmem:[#allocation2 + $0x50] sm:$0xff] %v818
    %874 = vst [vmem:[#allocation2 + $0x58] sm:$0xff] %v819
    %875 = vst [vmem:[#allocation2 + $0x60] sm:$0xff] %v820
    %876 = vst [vmem:[#allocation2 + $0x68] sm:$0xff] %v821
    %877 = vst [vmem:[#allocation2 + $0x70] sm:$0xff] %v822
    %878 = vst [vmem:[#allocation2 + $0x78] sm:$0xff] %v823
    %879 = vst [vmem:[#allocation2 + $0x80] sm:$0xff] %v775
    %880 = vst [vmem:[#allocation2 + $0x88] sm:$0xff] %v776
    %881 = vst [vmem:[#allocation2 + $0x90] sm:$0xff] %v777
    %882 = vst [vmem:[#allocation2 + $0x98] sm:$0xff] %v778
    %883 = vst [vmem:[#allocation2 + $0xa0] sm:$0xff] %v779
    %884 = vst [vmem:[#allocation2 + $0xa8] sm:$0xff] %v780
    %885 = vst [vmem:[#allocation2 + $0xb0] sm:$0xff] %v781
    %886 = vst [vmem:[#allocation2 + $0xb8] sm:$0xff] %v782
    %887 = vst [vmem:[#allocation2 + $0xc0] sm:$0xff] %v855
    %888 = vst [vmem:[#allocation2 + $0xc8] sm:$0xff] %v856
    %889 = vst [vmem:[#allocation2 + $0xd0] sm:$0xff] %v857
    %890 = vst [vmem:[#allocation2 + $0xd8] sm:$0xff] %v858
    %891 = vst [vmem:[#allocation2 + $0xe0] sm:$0xff] %v859
    %892 = vst [vmem:[#allocation2 + $0xe8] sm:$0xff] %v860
    %893 = vst [vmem:[#allocation2 + $0xf0] sm:$0xff] %v861
    %894 = vst [vmem:[#allocation2 + $0xf8] sm:$0xff] %v862
    %895 = vst [vmem:[#allocation2 + $0x100] sm:$0xff] %v855
    %896 = vst [vmem:[#allocation2 + $0x108] sm:$0xff] %v856
    %897 = vst [vmem:[#allocation2 + $0x110] sm:$0xff] %v857
    %898 = vst [vmem:[#allocation2 + $0x118] sm:$0xff] %v858
    %899 = vst [vmem:[#allocation2 + $0x120] sm:$0xff] %v859
    %900 = vst [vmem:[#allocation2 + $0x128] sm:$0xff] %v860
    %901 = vst [vmem:[#allocation2 + $0x130] sm:$0xff] %v861
    %902 = vst [vmem:[#allocation2 + $0x138] sm:$0xff] %v862
    %s903 = scalar_lea.vmem %s3, 128
    %v904 = vld [vmem:[%s903] sm:$0xff]
    %v905 = vld [vmem:[%s903 + $0x8] sm:$0xff]
    %v906 = vld [vmem:[%s903 + $0x10] sm:$0xff]
    %v907 = vld [vmem:[%s903 + $0x18] sm:$0xff]
    %v908 = vld [vmem:[%s903 + $0x20] sm:$0xff]
    %v909 = vld [vmem:[%s903 + $0x28] sm:$0xff]
    %v910 = vld [vmem:[%s903 + $0x30] sm:$0xff]
    %v911 = vld [vmem:[%s903 + $0x38] sm:$0xff]
    %v912 = vld [vmem:[%s903 + $0x40] sm:$0xff]
    %v913 = vld [vmem:[%s903 + $0x48] sm:$0xff]
    %v914 = vld [vmem:[%s903 + $0x50] sm:$0xff]
    %v915 = vld [vmem:[%s903 + $0x58] sm:$0xff]
    %v916 = vld [vmem:[%s903 + $0x60] sm:$0xff]
    %v917 = vld [vmem:[%s903 + $0x68] sm:$0xff]
    %v918 = vld [vmem:[%s903 + $0x70] sm:$0xff]
    %v919 = vld [vmem:[%s903 + $0x78] sm:$0xff]
    %v920 = vld [vmem:[#allocation2] sm:$0xff]
    %v921 = vld [vmem:[#allocation2 + $0x8] sm:$0xff]
    %v922 = vld [vmem:[#allocation2 + $0x10] sm:$0xff]
    %v923 = vld [vmem:[#allocation2 + $0x18] sm:$0xff]
    %v924 = vld [vmem:[#allocation2 + $0x20] sm:$0xff]
    %v925 = vld [vmem:[#allocation2 + $0x28] sm:$0xff]
    %v926 = vld [vmem:[#allocation2 + $0x30] sm:$0xff]
    %v927 = vld [vmem:[#allocation2 + $0x38] sm:$0xff]
    %v928 = vld [vmem:[#allocation2 + $0x40] sm:$0xff]
    %v929 = vld [vmem:[#allocation2 + $0x48] sm:$0xff]
    %v930 = vld [vmem:[#allocation2 + $0x50] sm:$0xff]
    %v931 = vld [vmem:[#allocation2 + $0x58] sm:$0xff]
    %v932 = vld [vmem:[#allocation2 + $0x60] sm:$0xff]
    %v933 = vld [vmem:[#allocation2 + $0x68] sm:$0xff]
    %v934 = vld [vmem:[#allocation2 + $0x70] sm:$0xff]
    %v935 = vld [vmem:[#allocation2 + $0x78] sm:$0xff]
    %v936 = vld [vmem:[#allocation2 + $0x80] sm:$0xff]
    %v937 = vld [vmem:[#allocation2 + $0x88] sm:$0xff]
    %v938 = vld [vmem:[#allocation2 + $0x90] sm:$0xff]
    %v939 = vld [vmem:[#allocation2 + $0x98] sm:$0xff]
    %v940 = vld [vmem:[#allocation2 + $0xa0] sm:$0xff]
    %v941 = vld [vmem:[#allocation2 + $0xa8] sm:$0xff]
    %v942 = vld [vmem:[#allocation2 + $0xb0] sm:$0xff]
    %v943 = vld [vmem:[#allocation2 + $0xb8] sm:$0xff]
    %v944 = vld [vmem:[#allocation2 + $0xc0] sm:$0xff]
    %v945 = vld [vmem:[#allocation2 + $0xc8] sm:$0xff]
    %v946 = vld [vmem:[#allocation2 + $0xd0] sm:$0xff]
    %v947 = vld [vmem:[#allocation2 + $0xd8] sm:$0xff]
    %v948 = vld [vmem:[#allocation2 + $0xe0] sm:$0xff]
    %v949 = vld [vmem:[#allocation2 + $0xe8] sm:$0xff]
    %v950 = vld [vmem:[#allocation2 + $0xf0] sm:$0xff]
    %v951 = vld [vmem:[#allocation2 + $0xf8] sm:$0xff]
    %v952 = vld [vmem:[#allocation2 + $0x100] sm:$0xff]
    %v953 = vld [vmem:[#allocation2 + $0x108] sm:$0xff]
    %v954 = vld [vmem:[#allocation2 + $0x110] sm:$0xff]
    %v955 = vld [vmem:[#allocation2 + $0x118] sm:$0xff]
    %v956 = vld [vmem:[#allocation2 + $0x120] sm:$0xff]
    %v957 = vld [vmem:[#allocation2 + $0x128] sm:$0xff]
    %v958 = vld [vmem:[#allocation2 + $0x130] sm:$0xff]
    %v959 = vld [vmem:[#allocation2 + $0x138] sm:$0xff]
    %s960 = scalar_lea.vmem %s4, 64
    %v961 = vld [vmem:[%s960] sm:$0xff]
    %v962 = vld [vmem:[%s960 + $0x8] sm:$0xff]
    %v963 = vld [vmem:[%s960 + $0x10] sm:$0xff]
    %v964 = vld [vmem:[%s960 + $0x18] sm:$0xff]
    %v965 = vld [vmem:[%s960 + $0x20] sm:$0xff]
    %v966 = vld [vmem:[%s960 + $0x28] sm:$0xff]
    %v967 = vld [vmem:[%s960 + $0x30] sm:$0xff]
    %v968 = vld [vmem:[%s960 + $0x38] sm:$0xff]
    %970 = vset.pattern.permute.xlu0 0
    %971 = vperm.xlu0 %970, %v961
    %v972 = vpop.permute.xlu0 %971
    %975 = vset.pattern.permute.xlu0 0
    %976 = vperm.xlu0 %975, %v962
    %v977 = vpop.permute.xlu0 %976
    %980 = vset.pattern.permute.xlu0 0
    %981 = vperm.xlu0 %980, %v963
    %v982 = vpop.permute.xlu0 %981
    %985 = vset.pattern.permute.xlu0 0
    %986 = vperm.xlu0 %985, %v964
    %v987 = vpop.permute.xlu0 %986
    %990 = vset.pattern.permute.xlu0 0
    %991 = vperm.xlu0 %990, %v965
    %v992 = vpop.permute.xlu0 %991
    %995 = vset.pattern.permute.xlu0 0
    %996 = vperm.xlu0 %995, %v966
    %v997 = vpop.permute.xlu0 %996
    %1000 = vset.pattern.permute.xlu0 0
    %1001 = vperm.xlu0 %1000, %v967
    %v1002 = vpop.permute.xlu0 %1001
    %1005 = vset.pattern.permute.xlu0 0
    %1006 = vperm.xlu0 %1005, %v968
    %v1007 = vpop.permute.xlu0 %1006
    %v1010 = vsel %vm499, %v905, 0
    %v1013 = vsel %vm499, %v907, 0
    %v1016 = vsel %vm499, %v909, 0
    %v1019 = vsel %vm499, %v911, 0
    %v1022 = vsel %vm499, %v913, 0
    %v1025 = vsel %vm499, %v915, 0
    %v1028 = vsel %vm499, %v917, 0
    %v1031 = vsel %vm499, %v919, 0
    %1033 = vmatprep.subr.mxu0 %v951
    %1034 = vmatpush1.msra.mxu0 %v950
    %1035 = vmatprep.subr.mxu0 %v949
    %1036 = vmatpush1.msra.mxu0 %v948
    %1037 = vmatprep.subr.mxu0 %v947
    %1038 = vmatpush1.msra.mxu0 %v946
    %1039 = vmatprep.subr.mxu0 %v945
    %1040 = vmatpush1.msra.mxu0 %v944
    %1041 = vmatprep.subr.mxu0 %v943
    %1042 = vmatpush1.msra.mxu0 %v942
    %1043 = vmatprep.subr.mxu0 %v941
    %1044 = vmatpush1.msra.mxu0 %v940
    %1045 = vmatprep.subr.mxu0 %v939
    %1046 = vmatpush1.msra.mxu0 %v938
    %1047 = vmatprep.subr.mxu0 %v937
    %1048 = vmatpush1.msra.mxu0 %v936
    %1049 = vmatprep.subr.mxu0 %v935
    %1050 = vmatpush1.msra.mxu0 %v934
    %1051 = vmatprep.subr.mxu0 %v933
    %1052 = vmatpush1.msra.mxu0 %v932
    %1053 = vmatprep.subr.mxu0 %v931
    %1054 = vmatpush1.msra.mxu0 %v930
    %1055 = vmatprep.subr.mxu0 %v929
    %1056 = vmatpush1.msra.mxu0 %v928
    %1057 = vmatprep.subr.mxu0 %v927
    %1058 = vmatpush1.msra.mxu0 %v926
    %1059 = vmatprep.subr.mxu0 %v925
    %1060 = vmatpush1.msra.mxu0 %v924
    %1061 = vmatprep.subr.mxu0 %v923
    %1062 = vmatpush1.msra.mxu0 %v922
    %1063 = vmatprep.subr.mxu0 %v921
    %1064 = vmatpush1.msra.mxu0 %v920
    %1065 = vmatprep.subr.mxu0 0.0
    %1066 = vmatpush2.msra.mxu0 0.0
    %1067 = vmatprep.subr.mxu0 0.0
    %1068 = vmatpush2.msra.mxu0 0.0
    %1069 = vmatprep.subr.mxu0 0.0
    %1070 = vmatpush2.msra.mxu0 0.0
    %1071 = vmatprep.subr.mxu0 0.0
    %1072 = vmatpush2.msra.mxu0 0.0
    %1073 = vmatprep.subr.mxu0 0.0
    %1074 = vmatpush2.msra.mxu0 0.0
    %1075 = vmatprep.subr.mxu0 0.0
    %1076 = vmatpush2.msra.mxu0 0.0
    %1077 = vmatprep.subr.mxu0 0.0
    %1078 = vmatpush2.msra.mxu0 0.0
    %1079 = vmatprep.subr.mxu0 0.0
    %1080 = vmatpush2.msra.mxu0 0.0
    %1081 = vmatprep.subr.mxu0 0.0
    %1082 = vmatpush2.msra.mxu0 0.0
    %1083 = vmatprep.subr.mxu0 0.0
    %1084 = vmatpush2.msra.mxu0 0.0
    %1085 = vmatprep.subr.mxu0 0.0
    %1086 = vmatpush2.msra.mxu0 0.0
    %1087 = vmatprep.subr.mxu0 0.0
    %1088 = vmatpush2.msra.mxu0 0.0
    %1089 = vmatprep.subr.mxu0 %v959
    %1090 = vmatpush2.msra.mxu0 %v958
    %1091 = vmatprep.subr.mxu0 %v957
    %1092 = vmatpush2.msra.mxu0 %v956
    %1093 = vmatprep.subr.mxu0 %v955
    %1094 = vmatpush2.msra.mxu0 %v954
    %1095 = vmatprep.subr.mxu0 %v953
    %1096 = vmatpush2.msra.mxu0 %v952
    %1097 = vmatprep.mubr.f32.mxu0 %v1010
    %1098 = vmatmul.mubr.f32.gmra.mxu0 %v904
    %v1099 = vpop.f32.mrf.mxu0
    %v1100 = vadd.f32 %v972, %v1099
    %v1101 = vpop.f32.mrf.mxu0
    %v1102 = vadd.f32 %v972, %v1101
    %1103 = vmatprep.mubr.f32.mxu0 %v1013
    %1104 = vmatmul.mubr.f32.gmra.mxu0 %v906
    %v1105 = vpop.f32.mrf.mxu0
    %v1106 = vadd.f32 %v977, %v1105
    %v1107 = vpop.f32.mrf.mxu0
    %v1108 = vadd.f32 %v977, %v1107
    %1109 = vmatprep.mubr.f32.mxu0 %v1016
    %1110 = vmatmul.mubr.f32.gmra.mxu0 %v908
    %v1111 = vpop.f32.mrf.mxu0
    %v1112 = vadd.f32 %v982, %v1111
    %v1113 = vpop.f32.mrf.mxu0
    %v1114 = vadd.f32 %v982, %v1113
    %1115 = vmatprep.mubr.f32.mxu0 %v1019
    %1116 = vmatmul.mubr.f32.gmra.mxu0 %v910
    %v1117 = vpop.f32.mrf.mxu0
    %v1118 = vadd.f32 %v987, %v1117
    %v1119 = vpop.f32.mrf.mxu0
    %v1120 = vadd.f32 %v987, %v1119
    %1121 = vmatprep.mubr.f32.mxu0 %v1022
    %1122 = vmatmul.mubr.f32.gmra.mxu0 %v912
    %v1123 = vpop.f32.mrf.mxu0
    %v1124 = vadd.f32 %v992, %v1123
    %v1125 = vpop.f32.mrf.mxu0
    %v1126 = vadd.f32 %v992, %v1125
    %1127 = vmatprep.mubr.f32.mxu0 %v1025
    %1128 = vmatmul.mubr.f32.gmra.mxu0 %v914
    %v1129 = vpop.f32.mrf.mxu0
    %v1130 = vadd.f32 %v997, %v1129
    %v1131 = vpop.f32.mrf.mxu0
    %v1132 = vadd.f32 %v997, %v1131
    %1133 = vmatprep.mubr.f32.mxu0 %v1028
    %1134 = vmatmul.mubr.f32.gmra.mxu0 %v916
    %v1135 = vpop.f32.mrf.mxu0
    %v1136 = vadd.f32 %v1002, %v1135
    %v1137 = vpop.f32.mrf.mxu0
    %v1138 = vadd.f32 %v1002, %v1137
    %1139 = vmatprep.mubr.f32.mxu0 %v1031
    %1140 = vmatmul.mubr.f32.gmra.mxu0 %v918
    %v1141 = vpop.f32.mrf.mxu0
    %v1142 = vadd.f32 %v1007, %v1141
    %v1143 = vpop.f32.mrf.mxu0
    %v1144 = vadd.f32 %v1007, %v1143
    %1145 = vdwg.mxu0
    %s1146 = scalar_lea.vmem %s5, 32
    %v1147 = vld [vmem:[%s1146] sm:$0xff]
    %v1148 = vld [vmem:[%s1146 + $0x8] sm:$0xff]
    %v1149 = vld [vmem:[%s1146 + $0x10] sm:$0xff]
    %v1150 = vld [vmem:[%s1146 + $0x18] sm:$0xff]
    %s1151 = scalar_lea.vmem %s6, 32
    %v1152 = vld [vmem:[%s1151] sm:$0xff]
    %v1153 = vld [vmem:[%s1151 + $0x8] sm:$0xff]
    %v1154 = vld [vmem:[%s1151 + $0x10] sm:$0xff]
    %v1155 = vld [vmem:[%s1151 + $0x18] sm:$0xff]
    %1157 = vset.pattern.permute.xlu0 0
    %1158 = vperm.xlu0 %1157, %v1152
    %v1159 = vpop.permute.xlu0 %1158
    %1162 = vset.pattern.permute.xlu0 0
    %1163 = vperm.xlu0 %1162, %v1153
    %v1164 = vpop.permute.xlu0 %1163
    %1167 = vset.pattern.permute.xlu0 0
    %1168 = vperm.xlu0 %1167, %v1154
    %v1169 = vpop.permute.xlu0 %1168
    %1172 = vset.pattern.permute.xlu0 0
    %1173 = vperm.xlu0 %1172, %v1155
    %v1174 = vpop.permute.xlu0 %1173
    %v1177 = vsel %vm665, %v1147, 0
    %v1180 = vsel %vm665, %v1148, 0
    %v1183 = vsel %vm665, %v1149, 0
    %v1186 = vsel %vm665, %v1150, 0
    %1188 = vmatprep.subr.mxu0 0.0
    %1189 = vmatpush1.msra.mxu0 0.0
    %1190 = vmatprep.subr.mxu0 0.0
    %1191 = vmatpush1.msra.mxu0 0.0
    %1192 = vmatprep.subr.mxu0 0.0
    %1193 = vmatpush1.msra.mxu0 0.0
    %1194 = vmatprep.subr.mxu0 0.0
    %1195 = vmatpush1.msra.mxu0 0.0
    %1196 = vmatprep.subr.mxu0 0.0
    %1197 = vmatpush1.msra.mxu0 0.0
    %1198 = vmatprep.subr.mxu0 0.0
    %1199 = vmatpush1.msra.mxu0 0.0
    %1200 = vmatprep.subr.mxu0 0.0
    %1201 = vmatpush1.msra.mxu0 0.0
    %1202 = vmatprep.subr.mxu0 0.0
    %1203 = vmatpush1.msra.mxu0 0.0
    %1204 = vmatprep.subr.mxu0 %v1144
    %1205 = vmatpush1.msra.mxu0 %v1142
    %1206 = vmatprep.subr.mxu0 %v1138
    %1207 = vmatpush1.msra.mxu0 %v1136
    %1208 = vmatprep.subr.mxu0 %v1132
    %1209 = vmatpush1.msra.mxu0 %v1130
    %1210 = vmatprep.subr.mxu0 %v1126
    %1211 = vmatpush1.msra.mxu0 %v1124
    %1212 = vmatprep.subr.mxu0 %v1120
    %1213 = vmatpush1.msra.mxu0 %v1118
    %1214 = vmatprep.subr.mxu0 %v1114
    %1215 = vmatpush1.msra.mxu0 %v1112
    %1216 = vmatprep.subr.mxu0 %v1108
    %1217 = vmatpush1.msra.mxu0 %v1106
    %1218 = vmatprep.subr.mxu0 %v1102
    %1219 = vmatpush1.msra.mxu0 %v1100
    %1220 = vmatprep.subr.mxu0 0.0
    %1221 = vmatpush2.msra.mxu0 0.0
    %1222 = vmatprep.subr.mxu0 0.0
    %1223 = vmatpush2.msra.mxu0 0.0
    %1224 = vmatprep.subr.mxu0 0.0
    %1225 = vmatpush2.msra.mxu0 0.0
    %1226 = vmatprep.subr.mxu0 0.0
    %1227 = vmatpush2.msra.mxu0 0.0
    %1228 = vmatprep.subr.mxu0 0.0
    %1229 = vmatpush2.msra.mxu0 0.0
    %1230 = vmatprep.subr.mxu0 0.0
    %1231 = vmatpush2.msra.mxu0 0.0
    %1232 = vmatprep.subr.mxu0 0.0
    %1233 = vmatpush2.msra.mxu0 0.0
    %1234 = vmatprep.subr.mxu0 0.0
    %1235 = vmatpush2.msra.mxu0 0.0
    %1236 = vmatprep.subr.mxu0 0.0
    %1237 = vmatpush2.msra.mxu0 0.0
    %1238 = vmatprep.subr.mxu0 0.0
    %1239 = vmatpush2.msra.mxu0 0.0
    %1240 = vmatprep.subr.mxu0 0.0
    %1241 = vmatpush2.msra.mxu0 0.0
    %1242 = vmatprep.subr.mxu0 0.0
    %1243 = vmatpush2.msra.mxu0 0.0
    %1244 = vmatprep.subr.mxu0 0.0
    %1245 = vmatpush2.msra.mxu0 0.0
    %1246 = vmatprep.subr.mxu0 0.0
    %1247 = vmatpush2.msra.mxu0 0.0
    %1248 = vmatprep.subr.mxu0 0.0
    %1249 = vmatpush2.msra.mxu0 0.0
    %1250 = vmatprep.subr.mxu0 0.0
    %1251 = vmatpush2.msra.mxu0 0.0
    %1252 = vmatprep.mubr.f32.mxu0 0.0
    %1253 = vmatmul.mubr.f32.gmra.mxu0 %v1177
    %v1254 = vpop.f32.mrf.mxu0
    %v1255 = vadd.f32 %v1159, %v1254
    %v1256 = vpop.f32.mrf.mxu0
    %v1257 = vadd.f32 %v1159, %v1256
    %1258 = vmatprep.mubr.f32.mxu0 0.0
    %1259 = vmatmul.mubr.f32.gmra.mxu0 %v1180
    %v1260 = vpop.f32.mrf.mxu0
    %v1261 = vadd.f32 %v1164, %v1260
    %v1262 = vpop.f32.mrf.mxu0
    %v1263 = vadd.f32 %v1164, %v1262
    %1264 = vmatprep.mubr.f32.mxu0 0.0
    %1265 = vmatmul.mubr.f32.gmra.mxu0 %v1183
    %v1266 = vpop.f32.mrf.mxu0
    %v1267 = vadd.f32 %v1169, %v1266
    %v1268 = vpop.f32.mrf.mxu0
    %v1269 = vadd.f32 %v1169, %v1268
    %1270 = vmatprep.mubr.f32.mxu0 0.0
    %1271 = vmatmul.mubr.f32.gmra.mxu0 %v1186
    %v1272 = vpop.f32.mrf.mxu0
    %v1273 = vadd.f32 %v1174, %v1272
    %v1274 = vpop.f32.mrf.mxu0
    %v1275 = vadd.f32 %v1174, %v1274
    %1276 = vdwg.mxu0
    %v1277 = vmax.f32 %v1255, 0.0
    %v1278 = vmax.f32 %v1257, 0.0
    %v1279 = vmax.f32 %v1261, 0.0
    %v1280 = vmax.f32 %v1263, 0.0
    %v1281 = vmax.f32 %v1267, 0.0
    %v1282 = vmax.f32 %v1269, 0.0
    %v1283 = vmax.f32 %v1273, 0.0
    %v1284 = vmax.f32 %v1275, 0.0
    %v1285 = vadd.f32 %v775, %v1277
    %v1286 = vadd.f32 %v776, %v1278
    %v1287 = vadd.f32 %v777, %v1279
    %v1288 = vadd.f32 %v778, %v1280
    %v1289 = vadd.f32 %v779, %v1281
    %v1290 = vadd.f32 %v780, %v1282
    %v1291 = vadd.f32 %v781, %v1283
    %v1292 = vadd.f32 %v782, %v1284
    %1293 = vrot.lane.b32.xlu0 %v1285, 1
    %v1294 = vpop.permute.xlu0 %1293
    %1295 = vrot.lane.b32.xlu0 %v1287, 1
    %v1296 = vpop.permute.xlu0 %1295
    %1297 = vrot.lane.b32.xlu0 %v1289, 1
    %v1298 = vpop.permute.xlu0 %1297
    %1299 = vrot.lane.b32.xlu0 %v1291, 1
    %v1300 = vpop.permute.xlu0 %1299
    %1301 = vrot.lane.b32.xlu0 %v1286, 1
    %v1302 = vpop.permute.xlu0 %1301
    %1303 = vrot.lane.b32.xlu0 %v1288, 1
    %v1304 = vpop.permute.xlu0 %1303
    %1305 = vrot.lane.b32.xlu0 %v1290, 1
    %v1306 = vpop.permute.xlu0 %1305
    %1307 = vrot.lane.b32.xlu0 %v1292, 1
    %v1308 = vpop.permute.xlu0 %1307
    %v1309 = vsel %vm293, %v1294, %v1302
    %v1310 = vsel %vm293, %v1296, %v1304
    %v1311 = vsel %vm293, %v1298, %v1306
    %v1312 = vsel %vm293, %v1300, %v1308
    %v1313 = vsel %vm293, %v1302, %v1294
    %v1314 = vsel %vm293, %v1304, %v1296
    %v1315 = vsel %vm293, %v1306, %v1298
    %v1316 = vsel %vm293, %v1308, %v1300
    %v1317 = vsel %vm307, %v1313, 0.0
    %v1318 = vsel %vm307, %v1309, 0.0
    %v1319 = vsel %vm307, %v1314, 0.0
    %v1320 = vsel %vm307, %v1310, 0.0
    %v1321 = vsel %vm307, %v1315, 0.0
    %v1322 = vsel %vm307, %v1311, 0.0
    %v1323 = vsel %vm307, %v1316, 0.0
    %v1324 = vsel %vm307, %v1312, 0.0
    %1325 = vrot.lane.b32.xlu0 %v1285, 127
    %v1326 = vpop.permute.xlu0 %1325
    %1327 = vrot.lane.b32.xlu0 %v1287, 127
    %v1328 = vpop.permute.xlu0 %1327
    %1329 = vrot.lane.b32.xlu0 %v1289, 127
    %v1330 = vpop.permute.xlu0 %1329
    %1331 = vrot.lane.b32.xlu0 %v1291, 127
    %v1332 = vpop.permute.xlu0 %1331
    %1333 = vrot.lane.b32.xlu0 %v1286, 127
    %v1334 = vpop.permute.xlu0 %1333
    %1335 = vrot.lane.b32.xlu0 %v1288, 127
    %v1336 = vpop.permute.xlu0 %1335
    %1337 = vrot.lane.b32.xlu0 %v1290, 127
    %v1338 = vpop.permute.xlu0 %1337
    %1339 = vrot.lane.b32.xlu0 %v1292, 127
    %v1340 = vpop.permute.xlu0 %1339
    %v1341 = vsel %vm332, %v1326, %v1334
    %v1342 = vsel %vm332, %v1328, %v1336
    %v1343 = vsel %vm332, %v1330, %v1338
    %v1344 = vsel %vm332, %v1332, %v1340
    %v1345 = vsel %vm332, %v1334, %v1326
    %v1346 = vsel %vm332, %v1336, %v1328
    %v1347 = vsel %vm332, %v1338, %v1330
    %v1348 = vsel %vm332, %v1340, %v1332
    %v1349 = vsel %vm346, %v1341, 0.0
    %v1350 = vsel %vm346, %v1345, 0.0
    %v1351 = vsel %vm346, %v1342, 0.0
    %v1352 = vsel %vm346, %v1346, 0.0
    %v1353 = vsel %vm346, %v1343, 0.0
    %v1354 = vsel %vm346, %v1347, 0.0
    %v1355 = vsel %vm346, %v1344, 0.0
    %v1356 = vsel %vm346, %v1348, 0.0
    %1357 = vrot.lane.b32.xlu0 %v1285, 4
    %v1358 = vpop.permute.xlu0 %1357
    %1359 = vrot.lane.b32.xlu0 %v1287, 4
    %v1360 = vpop.permute.xlu0 %1359
    %1361 = vrot.lane.b32.xlu0 %v1289, 4
    %v1362 = vpop.permute.xlu0 %1361
    %1363 = vrot.lane.b32.xlu0 %v1291, 4
    %v1364 = vpop.permute.xlu0 %1363
    %1365 = vrot.lane.b32.xlu0 %v1286, 4
    %v1366 = vpop.permute.xlu0 %1365
    %1367 = vrot.lane.b32.xlu0 %v1288, 4
    %v1368 = vpop.permute.xlu0 %1367
    %1369 = vrot.lane.b32.xlu0 %v1290, 4
    %v1370 = vpop.permute.xlu0 %1369
    %1371 = vrot.lane.b32.xlu0 %v1292, 4
    %v1372 = vpop.permute.xlu0 %1371
    %v1373 = vsel %vm213, %v1358, %v1366
    %v1374 = vsel %vm213, %v1360, %v1368
    %v1375 = vsel %vm213, %v1362, %v1370
    %v1376 = vsel %vm213, %v1364, %v1372
    %v1377 = vsel %vm213, %v1366, %v1358
    %v1378 = vsel %vm213, %v1368, %v1360
    %v1379 = vsel %vm213, %v1370, %v1362
    %v1380 = vsel %vm213, %v1372, %v1364
    %v1381 = vsel %vm227, %v1377, 0.0
    %v1382 = vsel %vm227, %v1373, 0.0
    %v1383 = vsel %vm227, %v1378, 0.0
    %v1384 = vsel %vm227, %v1374, 0.0
    %v1385 = vsel %vm227, %v1379, 0.0
    %v1386 = vsel %vm227, %v1375, 0.0
    %v1387 = vsel %vm227, %v1380, 0.0
    %v1388 = vsel %vm227, %v1376, 0.0
    %1389 = vrot.lane.b32.xlu0 %v1285, 124
    %v1390 = vpop.permute.xlu0 %1389
    %1391 = vrot.lane.b32.xlu0 %v1287, 124
    %v1392 = vpop.permute.xlu0 %1391
    %1393 = vrot.lane.b32.xlu0 %v1289, 124
    %v1394 = vpop.permute.xlu0 %1393
    %1395 = vrot.lane.b32.xlu0 %v1291, 124
    %v1396 = vpop.permute.xlu0 %1395
    %1397 = vrot.lane.b32.xlu0 %v1286, 124
    %v1398 = vpop.permute.xlu0 %1397
    %1399 = vrot.lane.b32.xlu0 %v1288, 124
    %v1400 = vpop.permute.xlu0 %1399
    %1401 = vrot.lane.b32.xlu0 %v1290, 124
    %v1402 = vpop.permute.xlu0 %1401
    %1403 = vrot.lane.b32.xlu0 %v1292, 124
    %v1404 = vpop.permute.xlu0 %1403
    %v1405 = vsel %vm252, %v1390, %v1398
    %v1406 = vsel %vm252, %v1392, %v1400
    %v1407 = vsel %vm252, %v1394, %v1402
    %v1408 = vsel %vm252, %v1396, %v1404
    %v1409 = vsel %vm252, %v1398, %v1390
    %v1410 = vsel %vm252, %v1400, %v1392
    %v1411 = vsel %vm252, %v1402, %v1394
    %v1412 = vsel %vm252, %v1404, %v1396
    %v1413 = vsel %vm266, %v1405, 0.0
    %v1414 = vsel %vm266, %v1409, 0.0
    %v1415 = vsel %vm266, %v1406, 0.0
    %v1416 = vsel %vm266, %v1410, 0.0
    %v1417 = vsel %vm266, %v1407, 0.0
    %v1418 = vsel %vm266, %v1411, 0.0
    %v1419 = vsel %vm266, %v1408, 0.0
    %v1420 = vsel %vm266, %v1412, 0.0
    %1421 = vst [vmem:[#allocation2] sm:$0xff] %v1317
    %1422 = vst [vmem:[#allocation2 + $0x8] sm:$0xff] %v1318
    %1423 = vst [vmem:[#allocation2 + $0x10] sm:$0xff] %v1319
    %1424 = vst [vmem:[#allocation2 + $0x18] sm:$0xff] %v1320
    %1425 = vst [vmem:[#allocation2 + $0x20] sm:$0xff] %v1321
    %1426 = vst [vmem:[#allocation2 + $0x28] sm:$0xff] %v1322
    %1427 = vst [vmem:[#allocation2 + $0x30] sm:$0xff] %v1323
    %1428 = vst [vmem:[#allocation2 + $0x38] sm:$0xff] %v1324
    %1429 = vst [vmem:[#allocation2 + $0x40] sm:$0xff] %v1381
    %1430 = vst [vmem:[#allocation2 + $0x48] sm:$0xff] %v1382
    %1431 = vst [vmem:[#allocation2 + $0x50] sm:$0xff] %v1383
    %1432 = vst [vmem:[#allocation2 + $0x58] sm:$0xff] %v1384
    %1433 = vst [vmem:[#allocation2 + $0x60] sm:$0xff] %v1385
    %1434 = vst [vmem:[#allocation2 + $0x68] sm:$0xff] %v1386
    %1435 = vst [vmem:[#allocation2 + $0x70] sm:$0xff] %v1387
    %1436 = vst [vmem:[#allocation2 + $0x78] sm:$0xff] %v1388
    %1437 = vst [vmem:[#allocation2 + $0x80] sm:$0xff] %v1285
    %1438 = vst [vmem:[#allocation2 + $0x88] sm:$0xff] %v1286
    %1439 = vst [vmem:[#allocation2 + $0x90] sm:$0xff] %v1287
    %1440 = vst [vmem:[#allocation2 + $0x98] sm:$0xff] %v1288
    %1441 = vst [vmem:[#allocation2 + $0xa0] sm:$0xff] %v1289
    %1442 = vst [vmem:[#allocation2 + $0xa8] sm:$0xff] %v1290
    %1443 = vst [vmem:[#allocation2 + $0xb0] sm:$0xff] %v1291
    %1444 = vst [vmem:[#allocation2 + $0xb8] sm:$0xff] %v1292
    %1445 = vst [vmem:[#allocation2 + $0xc0] sm:$0xff] %v1349
    %1446 = vst [vmem:[#allocation2 + $0xc8] sm:$0xff] %v1350
    %1447 = vst [vmem:[#allocation2 + $0xd0] sm:$0xff] %v1351
    %1448 = vst [vmem:[#allocation2 + $0xd8] sm:$0xff] %v1352
    %1449 = vst [vmem:[#allocation2 + $0xe0] sm:$0xff] %v1353
    %1450 = vst [vmem:[#allocation2 + $0xe8] sm:$0xff] %v1354
    %1451 = vst [vmem:[#allocation2 + $0xf0] sm:$0xff] %v1355
    %1452 = vst [vmem:[#allocation2 + $0xf8] sm:$0xff] %v1356
    %1453 = vst [vmem:[#allocation2 + $0x100] sm:$0xff] %v1413
    %1454 = vst [vmem:[#allocation2 + $0x108] sm:$0xff] %v1414
    %1455 = vst [vmem:[#allocation2 + $0x110] sm:$0xff] %v1415
    %1456 = vst [vmem:[#allocation2 + $0x118] sm:$0xff] %v1416
    %1457 = vst [vmem:[#allocation2 + $0x120] sm:$0xff] %v1417
    %1458 = vst [vmem:[#allocation2 + $0x128] sm:$0xff] %v1418
    %1459 = vst [vmem:[#allocation2 + $0x130] sm:$0xff] %v1419
    %1460 = vst [vmem:[#allocation2 + $0x138] sm:$0xff] %v1420
    %s1461 = scalar_lea.vmem %s3, 256
    %v1462 = vld [vmem:[%s1461] sm:$0xff]
    %v1463 = vld [vmem:[%s1461 + $0x8] sm:$0xff]
    %v1464 = vld [vmem:[%s1461 + $0x10] sm:$0xff]
    %v1465 = vld [vmem:[%s1461 + $0x18] sm:$0xff]
    %v1466 = vld [vmem:[%s1461 + $0x20] sm:$0xff]
    %v1467 = vld [vmem:[%s1461 + $0x28] sm:$0xff]
    %v1468 = vld [vmem:[%s1461 + $0x30] sm:$0xff]
    %v1469 = vld [vmem:[%s1461 + $0x38] sm:$0xff]
    %v1470 = vld [vmem:[%s1461 + $0x40] sm:$0xff]
    %v1471 = vld [vmem:[%s1461 + $0x48] sm:$0xff]
    %v1472 = vld [vmem:[%s1461 + $0x50] sm:$0xff]
    %v1473 = vld [vmem:[%s1461 + $0x58] sm:$0xff]
    %v1474 = vld [vmem:[%s1461 + $0x60] sm:$0xff]
    %v1475 = vld [vmem:[%s1461 + $0x68] sm:$0xff]
    %v1476 = vld [vmem:[%s1461 + $0x70] sm:$0xff]
    %v1477 = vld [vmem:[%s1461 + $0x78] sm:$0xff]
    %v1478 = vld [vmem:[#allocation2] sm:$0xff]
    %v1479 = vld [vmem:[#allocation2 + $0x8] sm:$0xff]
    %v1480 = vld [vmem:[#allocation2 + $0x10] sm:$0xff]
    %v1481 = vld [vmem:[#allocation2 + $0x18] sm:$0xff]
    %v1482 = vld [vmem:[#allocation2 + $0x20] sm:$0xff]
    %v1483 = vld [vmem:[#allocation2 + $0x28] sm:$0xff]
    %v1484 = vld [vmem:[#allocation2 + $0x30] sm:$0xff]
    %v1485 = vld [vmem:[#allocation2 + $0x38] sm:$0xff]
    %v1486 = vld [vmem:[#allocation2 + $0x40] sm:$0xff]
    %v1487 = vld [vmem:[#allocation2 + $0x48] sm:$0xff]
    %v1488 = vld [vmem:[#allocation2 + $0x50] sm:$0xff]
    %v1489 = vld [vmem:[#allocation2 + $0x58] sm:$0xff]
    %v1490 = vld [vmem:[#allocation2 + $0x60] sm:$0xff]
    %v1491 = vld [vmem:[#allocation2 + $0x68] sm:$0xff]
    %v1492 = vld [vmem:[#allocation2 + $0x70] sm:$0xff]
    %v1493 = vld [vmem:[#allocation2 + $0x78] sm:$0xff]
    %v1494 = vld [vmem:[#allocation2 + $0x80] sm:$0xff]
    %v1495 = vld [vmem:[#allocation2 + $0x88] sm:$0xff]
    %v1496 = vld [vmem:[#allocation2 + $0x90] sm:$0xff]
    %v1497 = vld [vmem:[#allocation2 + $0x98] sm:$0xff]
    %v1498 = vld [vmem:[#allocation2 + $0xa0] sm:$0xff]
    %v1499 = vld [vmem:[#allocation2 + $0xa8] sm:$0xff]
    %v1500 = vld [vmem:[#allocation2 + $0xb0] sm:$0xff]
    %v1501 = vld [vmem:[#allocation2 + $0xb8] sm:$0xff]
    %v1502 = vld [vmem:[#allocation2 + $0xc0] sm:$0xff]
    %v1503 = vld [vmem:[#allocation2 + $0xc8] sm:$0xff]
    %v1504 = vld [vmem:[#allocation2 + $0xd0] sm:$0xff]
    %v1505 = vld [vmem:[#allocation2 + $0xd8] sm:$0xff]
    %v1506 = vld [vmem:[#allocation2 + $0xe0] sm:$0xff]
    %v1507 = vld [vmem:[#allocation2 + $0xe8] sm:$0xff]
    %v1508 = vld [vmem:[#allocation2 + $0xf0] sm:$0xff]
    %v1509 = vld [vmem:[#allocation2 + $0xf8] sm:$0xff]
    %v1510 = vld [vmem:[#allocation2 + $0x100] sm:$0xff]
    %v1511 = vld [vmem:[#allocation2 + $0x108] sm:$0xff]
    %v1512 = vld [vmem:[#allocation2 + $0x110] sm:$0xff]
    %v1513 = vld [vmem:[#allocation2 + $0x118] sm:$0xff]
    %v1514 = vld [vmem:[#allocation2 + $0x120] sm:$0xff]
    %v1515 = vld [vmem:[#allocation2 + $0x128] sm:$0xff]
    %v1516 = vld [vmem:[#allocation2 + $0x130] sm:$0xff]
    %v1517 = vld [vmem:[#allocation2 + $0x138] sm:$0xff]
    %s1518 = scalar_lea.vmem %s4, 128
    %v1519 = vld [vmem:[%s1518] sm:$0xff]
    %v1520 = vld [vmem:[%s1518 + $0x8] sm:$0xff]
    %v1521 = vld [vmem:[%s1518 + $0x10] sm:$0xff]
    %v1522 = vld [vmem:[%s1518 + $0x18] sm:$0xff]
    %v1523 = vld [vmem:[%s1518 + $0x20] sm:$0xff]
    %v1524 = vld [vmem:[%s1518 + $0x28] sm:$0xff]
    %v1525 = vld [vmem:[%s1518 + $0x30] sm:$0xff]
    %v1526 = vld [vmem:[%s1518 + $0x38] sm:$0xff]
    %1528 = vset.pattern.permute.xlu0 0
    %1529 = vperm.xlu0 %1528, %v1519
    %v1530 = vpop.permute.xlu0 %1529
    %1533 = vset.pattern.permute.xlu0 0
    %1534 = vperm.xlu0 %1533, %v1520
    %v1535 = vpop.permute.xlu0 %1534
    %1538 = vset.pattern.permute.xlu0 0
    %1539 = vperm.xlu0 %1538, %v1521
    %v1540 = vpop.permute.xlu0 %1539
    %1543 = vset.pattern.permute.xlu0 0
    %1544 = vperm.xlu0 %1543, %v1522
    %v1545 = vpop.permute.xlu0 %1544
    %1548 = vset.pattern.permute.xlu0 0
    %1549 = vperm.xlu0 %1548, %v1523
    %v1550 = vpop.permute.xlu0 %1549
    %1553 = vset.pattern.permute.xlu0 0
    %1554 = vperm.xlu0 %1553, %v1524
    %v1555 = vpop.permute.xlu0 %1554
    %1558 = vset.pattern.permute.xlu0 0
    %1559 = vperm.xlu0 %1558, %v1525
    %v1560 = vpop.permute.xlu0 %1559
    %1563 = vset.pattern.permute.xlu0 0
    %1564 = vperm.xlu0 %1563, %v1526
    %v1565 = vpop.permute.xlu0 %1564
    %v1568 = vsel %vm499, %v1463, 0
    %v1571 = vsel %vm499, %v1465, 0
    %v1574 = vsel %vm499, %v1467, 0
    %v1577 = vsel %vm499, %v1469, 0
    %v1580 = vsel %vm499, %v1471, 0
    %v1583 = vsel %vm499, %v1473, 0
    %v1586 = vsel %vm499, %v1475, 0
    %v1589 = vsel %vm499, %v1477, 0
    %1591 = vmatprep.subr.mxu0 %v1509
    %1592 = vmatpush1.msra.mxu0 %v1508
    %1593 = vmatprep.subr.mxu0 %v1507
    %1594 = vmatpush1.msra.mxu0 %v1506
    %1595 = vmatprep.subr.mxu0 %v1505
    %1596 = vmatpush1.msra.mxu0 %v1504
    %1597 = vmatprep.subr.mxu0 %v1503
    %1598 = vmatpush1.msra.mxu0 %v1502
    %1599 = vmatprep.subr.mxu0 %v1501
    %1600 = vmatpush1.msra.mxu0 %v1500
    %1601 = vmatprep.subr.mxu0 %v1499
    %1602 = vmatpush1.msra.mxu0 %v1498
    %1603 = vmatprep.subr.mxu0 %v1497
    %1604 = vmatpush1.msra.mxu0 %v1496
    %1605 = vmatprep.subr.mxu0 %v1495
    %1606 = vmatpush1.msra.mxu0 %v1494
    %1607 = vmatprep.subr.mxu0 %v1493
    %1608 = vmatpush1.msra.mxu0 %v1492
    %1609 = vmatprep.subr.mxu0 %v1491
    %1610 = vmatpush1.msra.mxu0 %v1490
    %1611 = vmatprep.subr.mxu0 %v1489
    %1612 = vmatpush1.msra.mxu0 %v1488
    %1613 = vmatprep.subr.mxu0 %v1487
    %1614 = vmatpush1.msra.mxu0 %v1486
    %1615 = vmatprep.subr.mxu0 %v1485
    %1616 = vmatpush1.msra.mxu0 %v1484
    %1617 = vmatprep.subr.mxu0 %v1483
    %1618 = vmatpush1.msra.mxu0 %v1482
    %1619 = vmatprep.subr.mxu0 %v1481
    %1620 = vmatpush1.msra.mxu0 %v1480
    %1621 = vmatprep.subr.mxu0 %v1479
    %1622 = vmatpush1.msra.mxu0 %v1478
    %1623 = vmatprep.subr.mxu0 0.0
    %1624 = vmatpush2.msra.mxu0 0.0
    %1625 = vmatprep.subr.mxu0 0.0
    %1626 = vmatpush2.msra.mxu0 0.0
    %1627 = vmatprep.subr.mxu0 0.0
    %1628 = vmatpush2.msra.mxu0 0.0
    %1629 = vmatprep.subr.mxu0 0.0
    %1630 = vmatpush2.msra.mxu0 0.0
    %1631 = vmatprep.subr.mxu0 0.0
    %1632 = vmatpush2.msra.mxu0 0.0
    %1633 = vmatprep.subr.mxu0 0.0
    %1634 = vmatpush2.msra.mxu0 0.0
    %1635 = vmatprep.subr.mxu0 0.0
    %1636 = vmatpush2.msra.mxu0 0.0
    %1637 = vmatprep.subr.mxu0 0.0
    %1638 = vmatpush2.msra.mxu0 0.0
    %1639 = vmatprep.subr.mxu0 0.0
    %1640 = vmatpush2.msra.mxu0 0.0
    %1641 = vmatprep.subr.mxu0 0.0
    %1642 = vmatpush2.msra.mxu0 0.0
    %1643 = vmatprep.subr.mxu0 0.0
    %1644 = vmatpush2.msra.mxu0 0.0
    %1645 = vmatprep.subr.mxu0 0.0
    %1646 = vmatpush2.msra.mxu0 0.0
    %1647 = vmatprep.subr.mxu0 %v1517
    %1648 = vmatpush2.msra.mxu0 %v1516
    %1649 = vmatprep.subr.mxu0 %v1515
    %1650 = vmatpush2.msra.mxu0 %v1514
    %1651 = vmatprep.subr.mxu0 %v1513
    %1652 = vmatpush2.msra.mxu0 %v1512
    %1653 = vmatprep.subr.mxu0 %v1511
    %1654 = vmatpush2.msra.mxu0 %v1510
    %1655 = vmatprep.mubr.f32.mxu0 %v1568
    %1656 = vmatmul.mubr.f32.gmra.mxu0 %v1462
    %v1657 = vpop.f32.mrf.mxu0
    %v1658 = vadd.f32 %v1530, %v1657
    %v1659 = vpop.f32.mrf.mxu0
    %v1660 = vadd.f32 %v1530, %v1659
    %1661 = vmatprep.mubr.f32.mxu0 %v1571
    %1662 = vmatmul.mubr.f32.gmra.mxu0 %v1464
    %v1663 = vpop.f32.mrf.mxu0
    %v1664 = vadd.f32 %v1535, %v1663
    %v1665 = vpop.f32.mrf.mxu0
    %v1666 = vadd.f32 %v1535, %v1665
    %1667 = vmatprep.mubr.f32.mxu0 %v1574
    %1668 = vmatmul.mubr.f32.gmra.mxu0 %v1466
    %v1669 = vpop.f32.mrf.mxu0
    %v1670 = vadd.f32 %v1540, %v1669
    %v1671 = vpop.f32.mrf.mxu0
    %v1672 = vadd.f32 %v1540, %v1671
    %1673 = vmatprep.mubr.f32.mxu0 %v1577
    %1674 = vmatmul.mubr.f32.gmra.mxu0 %v1468
    %v1675 = vpop.f32.mrf.mxu0
    %v1676 = vadd.f32 %v1545, %v1675
    %v1677 = vpop.f32.mrf.mxu0
    %v1678 = vadd.f32 %v1545, %v1677
    %1679 = vmatprep.mubr.f32.mxu0 %v1580
    %1680 = vmatmul.mubr.f32.gmra.mxu0 %v1470
    %v1681 = vpop.f32.mrf.mxu0
    %v1682 = vadd.f32 %v1550, %v1681
    %v1683 = vpop.f32.mrf.mxu0
    %v1684 = vadd.f32 %v1550, %v1683
    %1685 = vmatprep.mubr.f32.mxu0 %v1583
    %1686 = vmatmul.mubr.f32.gmra.mxu0 %v1472
    %v1687 = vpop.f32.mrf.mxu0
    %v1688 = vadd.f32 %v1555, %v1687
    %v1689 = vpop.f32.mrf.mxu0
    %v1690 = vadd.f32 %v1555, %v1689
    %1691 = vmatprep.mubr.f32.mxu0 %v1586
    %1692 = vmatmul.mubr.f32.gmra.mxu0 %v1474
    %v1693 = vpop.f32.mrf.mxu0
    %v1694 = vadd.f32 %v1560, %v1693
    %v1695 = vpop.f32.mrf.mxu0
    %v1696 = vadd.f32 %v1560, %v1695
    %1697 = vmatprep.mubr.f32.mxu0 %v1589
    %1698 = vmatmul.mubr.f32.gmra.mxu0 %v1476
    %v1699 = vpop.f32.mrf.mxu0
    %v1700 = vadd.f32 %v1565, %v1699
    %v1701 = vpop.f32.mrf.mxu0
    %v1702 = vadd.f32 %v1565, %v1701
    %1703 = vdwg.mxu0
    %s1704 = scalar_lea.vmem %s5, 64
    %v1705 = vld [vmem:[%s1704] sm:$0xff]
    %v1706 = vld [vmem:[%s1704 + $0x8] sm:$0xff]
    %v1707 = vld [vmem:[%s1704 + $0x10] sm:$0xff]
    %v1708 = vld [vmem:[%s1704 + $0x18] sm:$0xff]
    %s1709 = scalar_lea.vmem %s6, 64
    %v1710 = vld [vmem:[%s1709] sm:$0xff]
    %v1711 = vld [vmem:[%s1709 + $0x8] sm:$0xff]
    %v1712 = vld [vmem:[%s1709 + $0x10] sm:$0xff]
    %v1713 = vld [vmem:[%s1709 + $0x18] sm:$0xff]
    %1715 = vset.pattern.permute.xlu0 0
    %1716 = vperm.xlu0 %1715, %v1710
    %v1717 = vpop.permute.xlu0 %1716
    %1720 = vset.pattern.permute.xlu0 0
    %1721 = vperm.xlu0 %1720, %v1711
    %v1722 = vpop.permute.xlu0 %1721
    %1725 = vset.pattern.permute.xlu0 0
    %1726 = vperm.xlu0 %1725, %v1712
    %v1727 = vpop.permute.xlu0 %1726
    %1730 = vset.pattern.permute.xlu0 0
    %1731 = vperm.xlu0 %1730, %v1713
    %v1732 = vpop.permute.xlu0 %1731
    %v1735 = vsel %vm665, %v1705, 0
    %v1738 = vsel %vm665, %v1706, 0
    %v1741 = vsel %vm665, %v1707, 0
    %v1744 = vsel %vm665, %v1708, 0
    %1746 = vmatprep.subr.mxu0 0.0
    %1747 = vmatpush1.msra.mxu0 0.0
    %1748 = vmatprep.subr.mxu0 0.0
    %1749 = vmatpush1.msra.mxu0 0.0
    %1750 = vmatprep.subr.mxu0 0.0
    %1751 = vmatpush1.msra.mxu0 0.0
    %1752 = vmatprep.subr.mxu0 0.0
    %1753 = vmatpush1.msra.mxu0 0.0
    %1754 = vmatprep.subr.mxu0 0.0
    %1755 = vmatpush1.msra.mxu0 0.0
    %1756 = vmatprep.subr.mxu0 0.0
    %1757 = vmatpush1.msra.mxu0 0.0
    %1758 = vmatprep.subr.mxu0 0.0
    %1759 = vmatpush1.msra.mxu0 0.0
    %1760 = vmatprep.subr.mxu0 0.0
    %1761 = vmatpush1.msra.mxu0 0.0
    %1762 = vmatprep.subr.mxu0 %v1702
    %1763 = vmatpush1.msra.mxu0 %v1700
    %1764 = vmatprep.subr.mxu0 %v1696
    %1765 = vmatpush1.msra.mxu0 %v1694
    %1766 = vmatprep.subr.mxu0 %v1690
    %1767 = vmatpush1.msra.mxu0 %v1688
    %1768 = vmatprep.subr.mxu0 %v1684
    %1769 = vmatpush1.msra.mxu0 %v1682
    %1770 = vmatprep.subr.mxu0 %v1678
    %1771 = vmatpush1.msra.mxu0 %v1676
    %1772 = vmatprep.subr.mxu0 %v1672
    %1773 = vmatpush1.msra.mxu0 %v1670
    %1774 = vmatprep.subr.mxu0 %v1666
    %1775 = vmatpush1.msra.mxu0 %v1664
    %1776 = vmatprep.subr.mxu0 %v1660
    %1777 = vmatpush1.msra.mxu0 %v1658
    %1778 = vmatprep.subr.mxu0 0.0
    %1779 = vmatpush2.msra.mxu0 0.0
    %1780 = vmatprep.subr.mxu0 0.0
    %1781 = vmatpush2.msra.mxu0 0.0
    %1782 = vmatprep.subr.mxu0 0.0
    %1783 = vmatpush2.msra.mxu0 0.0
    %1784 = vmatprep.subr.mxu0 0.0
    %1785 = vmatpush2.msra.mxu0 0.0
    %1786 = vmatprep.subr.mxu0 0.0
    %1787 = vmatpush2.msra.mxu0 0.0
    %1788 = vmatprep.subr.mxu0 0.0
    %1789 = vmatpush2.msra.mxu0 0.0
    %1790 = vmatprep.subr.mxu0 0.0
    %1791 = vmatpush2.msra.mxu0 0.0
    %1792 = vmatprep.subr.mxu0 0.0
    %1793 = vmatpush2.msra.mxu0 0.0
    %1794 = vmatprep.subr.mxu0 0.0
    %1795 = vmatpush2.msra.mxu0 0.0
    %1796 = vmatprep.subr.mxu0 0.0
    %1797 = vmatpush2.msra.mxu0 0.0
    %1798 = vmatprep.subr.mxu0 0.0
    %1799 = vmatpush2.msra.mxu0 0.0
    %1800 = vmatprep.subr.mxu0 0.0
    %1801 = vmatpush2.msra.mxu0 0.0
    %1802 = vmatprep.subr.mxu0 0.0
    %1803 = vmatpush2.msra.mxu0 0.0
    %1804 = vmatprep.subr.mxu0 0.0
    %1805 = vmatpush2.msra.mxu0 0.0
    %1806 = vmatprep.subr.mxu0 0.0
    %1807 = vmatpush2.msra.mxu0 0.0
    %1808 = vmatprep.subr.mxu0 0.0
    %1809 = vmatpush2.msra.mxu0 0.0
    %1810 = vmatprep.mubr.f32.mxu0 0.0
    %1811 = vmatmul.mubr.f32.gmra.mxu0 %v1735
    %v1812 = vpop.f32.mrf.mxu0
    %v1813 = vadd.f32 %v1717, %v1812
    %v1814 = vpop.f32.mrf.mxu0
    %v1815 = vadd.f32 %v1717, %v1814
    %1816 = vmatprep.mubr.f32.mxu0 0.0
    %1817 = vmatmul.mubr.f32.gmra.mxu0 %v1738
    %v1818 = vpop.f32.mrf.mxu0
    %v1819 = vadd.f32 %v1722, %v1818
    %v1820 = vpop.f32.mrf.mxu0
    %v1821 = vadd.f32 %v1722, %v1820
    %1822 = vmatprep.mubr.f32.mxu0 0.0
    %1823 = vmatmul.mubr.f32.gmra.mxu0 %v1741
    %v1824 = vpop.f32.mrf.mxu0
    %v1825 = vadd.f32 %v1727, %v1824
    %v1826 = vpop.f32.mrf.mxu0
    %v1827 = vadd.f32 %v1727, %v1826
    %1828 = vmatprep.mubr.f32.mxu0 0.0
    %1829 = vmatmul.mubr.f32.gmra.mxu0 %v1744
    %v1830 = vpop.f32.mrf.mxu0
    %v1831 = vadd.f32 %v1732, %v1830
    %v1832 = vpop.f32.mrf.mxu0
    %v1833 = vadd.f32 %v1732, %v1832
    %1834 = vdwg.mxu0
    %v1835 = vmax.f32 %v1813, 0.0
    %v1836 = vmax.f32 %v1815, 0.0
    %v1837 = vmax.f32 %v1819, 0.0
    %v1838 = vmax.f32 %v1821, 0.0
    %v1839 = vmax.f32 %v1825, 0.0
    %v1840 = vmax.f32 %v1827, 0.0
    %v1841 = vmax.f32 %v1831, 0.0
    %v1842 = vmax.f32 %v1833, 0.0
    %v1843 = vadd.f32 %v1285, %v1835
    %v1844 = vadd.f32 %v1286, %v1836
    %v1845 = vadd.f32 %v1287, %v1837
    %v1846 = vadd.f32 %v1288, %v1838
    %v1847 = vadd.f32 %v1289, %v1839
    %v1848 = vadd.f32 %v1290, %v1840
    %v1849 = vadd.f32 %v1291, %v1841
    %v1850 = vadd.f32 %v1292, %v1842
    %v1851 = vld [vmem:[%s7] sm:$0xff]
    %v1852 = vld [vmem:[%s8] sm:$0xff]
    %1854 = vset.pattern.permute.xlu0 0
    %1855 = vperm.xlu0 %1854, %v1852
    %v1856 = vpop.permute.xlu0 %1855
    %v1859 = vsel %vm499, %v1851, 0
    %1861 = vmatprep.subr.mxu0 0.0
    %1862 = vmatpush1.msra.mxu0 0.0
    %1863 = vmatprep.subr.mxu0 0.0
    %1864 = vmatpush1.msra.mxu0 0.0
    %1865 = vmatprep.subr.mxu0 0.0
    %1866 = vmatpush1.msra.mxu0 0.0
    %1867 = vmatprep.subr.mxu0 0.0
    %1868 = vmatpush1.msra.mxu0 0.0
    %1869 = vmatprep.subr.mxu0 0.0
    %1870 = vmatpush1.msra.mxu0 0.0
    %1871 = vmatprep.subr.mxu0 0.0
    %1872 = vmatpush1.msra.mxu0 0.0
    %1873 = vmatprep.subr.mxu0 0.0
    %1874 = vmatpush1.msra.mxu0 0.0
    %1875 = vmatprep.subr.mxu0 0.0
    %1876 = vmatpush1.msra.mxu0 0.0
    %1877 = vmatprep.subr.mxu0 0.0
    %1878 = vmatpush1.msra.mxu0 0.0
    %1879 = vmatprep.subr.mxu0 0.0
    %1880 = vmatpush1.msra.mxu0 0.0
    %1881 = vmatprep.subr.mxu0 0.0
    %1882 = vmatpush1.msra.mxu0 0.0
    %1883 = vmatprep.subr.mxu0 0.0
    %1884 = vmatpush1.msra.mxu0 0.0
    %1885 = vmatprep.subr.mxu0 %v1850
    %1886 = vmatpush1.msra.mxu0 %v1849
    %1887 = vmatprep.subr.mxu0 %v1848
    %1888 = vmatpush1.msra.mxu0 %v1847
    %1889 = vmatprep.subr.mxu0 %v1846
    %1890 = vmatpush1.msra.mxu0 %v1845
    %1891 = vmatprep.subr.mxu0 %v1844
    %1892 = vmatpush1.msra.mxu0 %v1843
    %1893 = vmatprep.subr.mxu0 0.0
    %1894 = vmatpush2.msra.mxu0 0.0
    %1895 = vmatprep.subr.mxu0 0.0
    %1896 = vmatpush2.msra.mxu0 0.0
    %1897 = vmatprep.subr.mxu0 0.0
    %1898 = vmatpush2.msra.mxu0 0.0
    %1899 = vmatprep.subr.mxu0 0.0
    %1900 = vmatpush2.msra.mxu0 0.0
    %1901 = vmatprep.subr.mxu0 0.0
    %1902 = vmatpush2.msra.mxu0 0.0
    %1903 = vmatprep.subr.mxu0 0.0
    %1904 = vmatpush2.msra.mxu0 0.0
    %1905 = vmatprep.subr.mxu0 0.0
    %1906 = vmatpush2.msra.mxu0 0.0
    %1907 = vmatprep.subr.mxu0 0.0
    %1908 = vmatpush2.msra.mxu0 0.0
    %1909 = vmatprep.subr.mxu0 0.0
    %1910 = vmatpush2.msra.mxu0 0.0
    %1911 = vmatprep.subr.mxu0 0.0
    %1912 = vmatpush2.msra.mxu0 0.0
    %1913 = vmatprep.subr.mxu0 0.0
    %1914 = vmatpush2.msra.mxu0 0.0
    %1915 = vmatprep.subr.mxu0 0.0
    %1916 = vmatpush2.msra.mxu0 0.0
    %1917 = vmatprep.subr.mxu0 0.0
    %1918 = vmatpush2.msra.mxu0 0.0
    %1919 = vmatprep.subr.mxu0 0.0
    %1920 = vmatpush2.msra.mxu0 0.0
    %1921 = vmatprep.subr.mxu0 0.0
    %1922 = vmatpush2.msra.mxu0 0.0
    %1923 = vmatprep.subr.mxu0 0.0
    %1924 = vmatpush2.msra.mxu0 0.0
    %1925 = vmatprep.mubr.f32.mxu0 0.0
    %1926 = vmatmul.mubr.f32.gmra.mxu0 %v1859
    %v1927 = vpop.f32.mrf.mxu0
    %v1928 = vadd.f32 %v1856, %v1927
    %v1929 = vpop.f32.mrf.mxu0
    %v1930 = vadd.f32 %v1856, %v1929
    %1931 = vdwg.mxu0
    %v1932 = vsel %vm59, 1, 0
    %v1933 = vlaneseq
    %v1934 = vshrl.u32 %v1933, 7
    %v1935 = vsub.s32 0, %v1934
    %v1936 = vrot.slane %v1932, %v1935
    %vm1937 = vcmp.eq.s32.totalorder %v1936, 1
    %v1938 = vsel %vm1937, %v1928, 0.0
    %v1939 = vsel %vm1937, %v1930, 0.0
    %1940 = vst [vmem:[#allocation3] sm:$0xff] %v1938
    %s1941 = scalar_lea.vmem [#allocation3], 8
    %1942 = vst [vmem:[%s1941] sm:$0xff] %v1939
    %v1943 = vrot.slane %v1938, 4
    %v1944 = vmax.f32 %v1938, %v1943
    %v1945 = vrot.slane %v1944, 2
    %v1946 = vmax.f32 %v1944, %v1945
    %v1947 = vrot.slane %v1946, 1
    %v1948 = vmax.f32 %v1946, %v1947
    %v1949 = vrot.slane %v1939, 4
    %v1950 = vmax.f32 %v1939, %v1949
    %v1951 = vrot.slane %v1950, 2
    %v1952 = vmax.f32 %v1950, %v1951
    %v1953 = vrot.slane %v1952, 1
    %v1954 = vmax.f32 %v1952, %v1953
    %v1955 = vsub.f32 %v1938, %v1948
    %v1956 = vsub.f32 %v1939, %v1954
    %v1957 = vmul.f32 %v1955, 1.442695
    %v1958 = vpow.pop %v1957
    %v1959 = vmul.f32 %v1956, 1.442695
    %v1960 = vpow.pop %v1959
    %v1961 = vrot.slane %v1958, 4
    %v1962 = vadd.f32 %v1958, %v1961
    %v1963 = vrot.slane %v1962, 2
    %v1964 = vadd.f32 %v1962, %v1963
    %v1965 = vrot.slane %v1964, 1
    %v1966 = vadd.f32 %v1964, %v1965
    %v1967 = vrot.slane %v1960, 4
    %v1968 = vadd.f32 %v1960, %v1967
    %v1969 = vrot.slane %v1968, 2
    %v1970 = vadd.f32 %v1968, %v1969
    %v1971 = vrot.slane %v1970, 1
    %v1972 = vadd.f32 %v1970, %v1971
    %v1973 = vrcp.pop %v1966
    %v1974 = vmul.f32 %v1958, %v1973
    %v1975 = vrcp.pop %v1972
    %v1976 = vmul.f32 %v1960, %v1975
    %v1977 = vld [vmem:[%s9] sm:$0xff]
    %v1978 = vld [vmem:[%s9 + $0x8] sm:$0xff]
    %v1979 = vld [vmem:[%s9 + $0x10] sm:$0xff]
    %v1980 = vld [vmem:[%s9 + $0x18] sm:$0xff]
    %v1981 = vld [vmem:[%s10] sm:$0xff]
    %v1982 = vld [vmem:[%s10 + $0x8] sm:$0xff]
    %v1983 = vld [vmem:[%s10 + $0x10] sm:$0xff]
    %v1984 = vld [vmem:[%s10 + $0x18] sm:$0xff]
    %1986 = vset.pattern.permute.xlu0 0
    %1987 = vperm.xlu0 %1986, %v1981
    %v1988 = vpop.permute.xlu0 %1987
    %1991 = vset.pattern.permute.xlu0 0
    %1992 = vperm.xlu0 %1991, %v1982
    %v1993 = vpop.permute.xlu0 %1992
    %1996 = vset.pattern.permute.xlu0 0
    %1997 = vperm.xlu0 %1996, %v1983
    %v1998 = vpop.permute.xlu0 %1997
    %2001 = vset.pattern.permute.xlu0 0
    %2002 = vperm.xlu0 %2001, %v1984
    %v2003 = vpop.permute.xlu0 %2002
    %vm2005 = vcmask 64512
    %v2007 = vsel %vm2005, %v1977, 0
    %v2010 = vsel %vm2005, %v1978, 0
    %v2013 = vsel %vm2005, %v1979, 0
    %v2016 = vsel %vm2005, %v1980, 0
    %2018 = vmatprep.subr.mxu0 0.0
    %2019 = vmatpush1.msra.mxu0 0.0
    %2020 = vmatprep.subr.mxu0 0.0
    %2021 = vmatpush1.msra.mxu0 0.0
    %2022 = vmatprep.subr.mxu0 0.0
    %2023 = vmatpush1.msra.mxu0 0.0
    %2024 = vmatprep.subr.mxu0 0.0
    %2025 = vmatpush1.msra.mxu0 0.0
    %2026 = vmatprep.subr.mxu0 0.0
    %2027 = vmatpush1.msra.mxu0 0.0
    %2028 = vmatprep.subr.mxu0 0.0
    %2029 = vmatpush1.msra.mxu0 0.0
    %2030 = vmatprep.subr.mxu0 0.0
    %2031 = vmatpush1.msra.mxu0 0.0
    %2032 = vmatprep.subr.mxu0 0.0
    %2033 = vmatpush1.msra.mxu0 0.0
    %2034 = vmatprep.subr.mxu0 0.0
    %2035 = vmatpush1.msra.mxu0 0.0
    %2036 = vmatprep.subr.mxu0 0.0
    %2037 = vmatpush1.msra.mxu0 0.0
    %2038 = vmatprep.subr.mxu0 0.0
    %2039 = vmatpush1.msra.mxu0 0.0
    %2040 = vmatprep.subr.mxu0 0.0
    %2041 = vmatpush1.msra.mxu0 0.0
    %2042 = vmatprep.subr.mxu0 0.0
    %2043 = vmatpush1.msra.mxu0 0.0
    %2044 = vmatprep.subr.mxu0 0.0
    %2045 = vmatpush1.msra.mxu0 0.0
    %2046 = vmatprep.subr.mxu0 0.0
    %2047 = vmatpush1.msra.mxu0 0.0
    %2048 = vmatprep.subr.mxu0 %v1976
    %2049 = vmatpush1.msra.mxu0 %v1974
    %2050 = vmatprep.subr.mxu0 0.0
    %2051 = vmatpush2.msra.mxu0 0.0
    %2052 = vmatprep.subr.mxu0 0.0
    %2053 = vmatpush2.msra.mxu0 0.0
    %2054 = vmatprep.subr.mxu0 0.0
    %2055 = vmatpush2.msra.mxu0 0.0
    %2056 = vmatprep.subr.mxu0 0.0
    %2057 = vmatpush2.msra.mxu0 0.0
    %2058 = vmatprep.subr.mxu0 0.0
    %2059 = vmatpush2.msra.mxu0 0.0
    %2060 = vmatprep.subr.mxu0 0.0
    %2061 = vmatpush2.msra.mxu0 0.0
    %2062 = vmatprep.subr.mxu0 0.0
    %2063 = vmatpush2.msra.mxu0 0.0
    %2064 = vmatprep.subr.mxu0 0.0
    %2065 = vmatpush2.msra.mxu0 0.0
    %2066 = vmatprep.subr.mxu0 0.0
    %2067 = vmatpush2.msra.mxu0 0.0
    %2068 = vmatprep.subr.mxu0 0.0
    %2069 = vmatpush2.msra.mxu0 0.0
    %2070 = vmatprep.subr.mxu0 0.0
    %2071 = vmatpush2.msra.mxu0 0.0
    %2072 = vmatprep.subr.mxu0 0.0
    %2073 = vmatpush2.msra.mxu0 0.0
    %2074 = vmatprep.subr.mxu0 0.0
    %2075 = vmatpush2.msra.mxu0 0.0
    %2076 = vmatprep.subr.mxu0 0.0
    %2077 = vmatpush2.msra.mxu0 0.0
    %2078 = vmatprep.subr.mxu0 0.0
    %2079 = vmatpush2.msra.mxu0 0.0
    %2080 = vmatprep.subr.mxu0 0.0
    %2081 = vmatpush2.msra.mxu0 0.0
    %2082 = vmatprep.mubr.f32.mxu0 0.0
    %2083 = vmatmul.mubr.f32.gmra.mxu0 %v2007
    %v2084 = vpop.f32.mrf.mxu0
    %v2085 = vadd.f32 %v1988, %v2084
    %v2086 = vpop.f32.mrf.mxu0
    %v2087 = vadd.f32 %v1988, %v2086
    %2088 = vmatprep.mubr.f32.mxu0 0.0
    %2089 = vmatmul.mubr.f32.gmra.mxu0 %v2010
    %v2090 = vpop.f32.mrf.mxu0
    %v2091 = vadd.f32 %v1993, %v2090
    %v2092 = vpop.f32.mrf.mxu0
    %v2093 = vadd.f32 %v1993, %v2092
    %2094 = vmatprep.mubr.f32.mxu0 0.0
    %2095 = vmatmul.mubr.f32.gmra.mxu0 %v2013
    %v2096 = vpop.f32.mrf.mxu0
    %v2097 = vadd.f32 %v1998, %v2096
    %v2098 = vpop.f32.mrf.mxu0
    %v2099 = vadd.f32 %v1998, %v2098
    %2100 = vmatprep.mubr.f32.mxu0 0.0
    %2101 = vmatmul.mubr.f32.gmra.mxu0 %v2016
    %v2102 = vpop.f32.mrf.mxu0
    %v2103 = vadd.f32 %v2003, %v2102
    %v2104 = vpop.f32.mrf.mxu0
    %v2105 = vadd.f32 %v2003, %v2104
    %2106 = vdwg.mxu0
    %2107 = vrot.lane.b32.xlu0 %v2085, 1
    %v2108 = vpop.permute.xlu0 %2107
    %2109 = vrot.lane.b32.xlu0 %v2091, 1
    %v2110 = vpop.permute.xlu0 %2109
    %2111 = vrot.lane.b32.xlu0 %v2097, 1
    %v2112 = vpop.permute.xlu0 %2111
    %2113 = vrot.lane.b32.xlu0 %v2103, 1
    %v2114 = vpop.permute.xlu0 %2113
    %2115 = vrot.lane.b32.xlu0 %v2087, 1
    %v2116 = vpop.permute.xlu0 %2115
    %2117 = vrot.lane.b32.xlu0 %v2093, 1
    %v2118 = vpop.permute.xlu0 %2117
    %2119 = vrot.lane.b32.xlu0 %v2099, 1
    %v2120 = vpop.permute.xlu0 %2119
    %2121 = vrot.lane.b32.xlu0 %v2105, 1
    %v2122 = vpop.permute.xlu0 %2121
    %v2123 = vsel %vm293, %v2108, %v2116
    %v2124 = vsel %vm293, %v2110, %v2118
    %v2125 = vsel %vm293, %v2112, %v2120
    %v2126 = vsel %vm293, %v2114, %v2122
    %v2127 = vsel %vm293, %v2116, %v2108
    %v2128 = vsel %vm293, %v2118, %v2110
    %v2129 = vsel %vm293, %v2120, %v2112
    %v2130 = vsel %vm293, %v2122, %v2114
    %v2131 = vsel %vm307, %v2127, 0.0
    %v2132 = vsel %vm307, %v2123, 0.0
    %v2133 = vsel %vm307, %v2128, 0.0
    %v2134 = vsel %vm307, %v2124, 0.0
    %v2135 = vsel %vm307, %v2129, 0.0
    %v2136 = vsel %vm307, %v2125, 0.0
    %v2137 = vsel %vm307, %v2130, 0.0
    %v2138 = vsel %vm307, %v2126, 0.0
    %2139 = vrot.lane.b32.xlu0 %v2085, 127
    %v2140 = vpop.permute.xlu0 %2139
    %2141 = vrot.lane.b32.xlu0 %v2091, 127
    %v2142 = vpop.permute.xlu0 %2141
    %2143 = vrot.lane.b32.xlu0 %v2097, 127
    %v2144 = vpop.permute.xlu0 %2143
    %2145 = vrot.lane.b32.xlu0 %v2103, 127
    %v2146 = vpop.permute.xlu0 %2145
    %2147 = vrot.lane.b32.xlu0 %v2087, 127
    %v2148 = vpop.permute.xlu0 %2147
    %2149 = vrot.lane.b32.xlu0 %v2093, 127
    %v2150 = vpop.permute.xlu0 %2149
    %2151 = vrot.lane.b32.xlu0 %v2099, 127
    %v2152 = vpop.permute.xlu0 %2151
    %2153 = vrot.lane.b32.xlu0 %v2105, 127
    %v2154 = vpop.permute.xlu0 %2153
    %v2155 = vsel %vm332, %v2140, %v2148
    %v2156 = vsel %vm332, %v2142, %v2150
    %v2157 = vsel %vm332, %v2144, %v2152
    %v2158 = vsel %vm332, %v2146, %v2154
    %v2159 = vsel %vm332, %v2148, %v2140
    %v2160 = vsel %vm332, %v2150, %v2142
    %v2161 = vsel %vm332, %v2152, %v2144
    %v2162 = vsel %vm332, %v2154, %v2146
    %v2163 = vsel %vm346, %v2155, 0.0
    %v2164 = vsel %vm346, %v2159, 0.0
    %v2165 = vsel %vm346, %v2156, 0.0
    %v2166 = vsel %vm346, %v2160, 0.0
    %v2167 = vsel %vm346, %v2157, 0.0
    %v2168 = vsel %vm346, %v2161, 0.0
    %v2169 = vsel %vm346, %v2158, 0.0
    %v2170 = vsel %vm346, %v2162, 0.0
    %2171 = vst [vmem:[#allocation2] sm:$0xff] %v2131
    %2172 = vst [vmem:[#allocation2 + $0x8] sm:$0xff] %v2132
    %2173 = vst [vmem:[#allocation2 + $0x10] sm:$0xff] %v2133
    %2174 = vst [vmem:[#allocation2 + $0x18] sm:$0xff] %v2134
    %2175 = vst [vmem:[#allocation2 + $0x20] sm:$0xff] %v2135
    %2176 = vst [vmem:[#allocation2 + $0x28] sm:$0xff] %v2136
    %2177 = vst [vmem:[#allocation2 + $0x30] sm:$0xff] %v2137
    %2178 = vst [vmem:[#allocation2 + $0x38] sm:$0xff] %v2138
    %2179 = vst [vmem:[#allocation2 + $0x40] sm:$0xff] %v2085
    %2180 = vst [vmem:[#allocation2 + $0x48] sm:$0xff] %v2087
    %2181 = vst [vmem:[#allocation2 + $0x50] sm:$0xff] %v2091
    %2182 = vst [vmem:[#allocation2 + $0x58] sm:$0xff] %v2093
    %2183 = vst [vmem:[#allocation2 + $0x60] sm:$0xff] %v2097
    %2184 = vst [vmem:[#allocation2 + $0x68] sm:$0xff] %v2099
    %2185 = vst [vmem:[#allocation2 + $0x70] sm:$0xff] %v2103
    %2186 = vst [vmem:[#allocation2 + $0x78] sm:$0xff] %v2105
    %2187 = vst [vmem:[#allocation2 + $0x80] sm:$0xff] %v2163
    %2188 = vst [vmem:[#allocation2 + $0x88] sm:$0xff] %v2164
    %2189 = vst [vmem:[#allocation2 + $0x90] sm:$0xff] %v2165
    %2190 = vst [vmem:[#allocation2 + $0x98] sm:$0xff] %v2166
    %2191 = vst [vmem:[#allocation2 + $0xa0] sm:$0xff] %v2167
    %2192 = vst [vmem:[#allocation2 + $0xa8] sm:$0xff] %v2168
    %2193 = vst [vmem:[#allocation2 + $0xb0] sm:$0xff] %v2169
    %2194 = vst [vmem:[#allocation2 + $0xb8] sm:$0xff] %v2170
    %v2195 = vld [vmem:[%s11] sm:$0xff]
    %v2196 = vld [vmem:[%s11 + $0x8] sm:$0xff]
    %v2197 = vld [vmem:[%s11 + $0x10] sm:$0xff]
    %v2198 = vld [vmem:[%s11 + $0x18] sm:$0xff]
    %v2199 = vld [vmem:[#allocation2] sm:$0xff]
    %v2200 = vld [vmem:[#allocation2 + $0x8] sm:$0xff]
    %v2201 = vld [vmem:[#allocation2 + $0x10] sm:$0xff]
    %v2202 = vld [vmem:[#allocation2 + $0x18] sm:$0xff]
    %v2203 = vld [vmem:[#allocation2 + $0x20] sm:$0xff]
    %v2204 = vld [vmem:[#allocation2 + $0x28] sm:$0xff]
    %v2205 = vld [vmem:[#allocation2 + $0x30] sm:$0xff]
    %v2206 = vld [vmem:[#allocation2 + $0x38] sm:$0xff]
    %v2207 = vld [vmem:[#allocation2 + $0x40] sm:$0xff]
    %v2208 = vld [vmem:[#allocation2 + $0x48] sm:$0xff]
    %v2209 = vld [vmem:[#allocation2 + $0x50] sm:$0xff]
    %v2210 = vld [vmem:[#allocation2 + $0x58] sm:$0xff]
    %v2211 = vld [vmem:[#allocation2 + $0x60] sm:$0xff]
    %v2212 = vld [vmem:[#allocation2 + $0x68] sm:$0xff]
    %v2213 = vld [vmem:[#allocation2 + $0x70] sm:$0xff]
    %v2214 = vld [vmem:[#allocation2 + $0x78] sm:$0xff]
    %v2215 = vld [vmem:[#allocation2 + $0x80] sm:$0xff]
    %v2216 = vld [vmem:[#allocation2 + $0x88] sm:$0xff]
    %v2217 = vld [vmem:[#allocation2 + $0x90] sm:$0xff]
    %v2218 = vld [vmem:[#allocation2 + $0x98] sm:$0xff]
    %v2219 = vld [vmem:[#allocation2 + $0xa0] sm:$0xff]
    %v2220 = vld [vmem:[#allocation2 + $0xa8] sm:$0xff]
    %v2221 = vld [vmem:[#allocation2 + $0xb0] sm:$0xff]
    %v2222 = vld [vmem:[#allocation2 + $0xb8] sm:$0xff]
    %v2223 = vld [vmem:[%s12] sm:$0xff]
    %v2224 = vld [vmem:[%s12 + $0x8] sm:$0xff]
    %v2225 = vld [vmem:[%s12 + $0x10] sm:$0xff]
    %v2226 = vld [vmem:[%s12 + $0x18] sm:$0xff]
    %2228 = vset.pattern.permute.xlu0 0
    %2229 = vperm.xlu0 %2228, %v2223
    %v2230 = vpop.permute.xlu0 %2229
    %2233 = vset.pattern.permute.xlu0 0
    %2234 = vperm.xlu0 %2233, %v2224
    %v2235 = vpop.permute.xlu0 %2234
    %2238 = vset.pattern.permute.xlu0 0
    %2239 = vperm.xlu0 %2238, %v2225
    %v2240 = vpop.permute.xlu0 %2239
    %2243 = vset.pattern.permute.xlu0 0
    %2244 = vperm.xlu0 %2243, %v2226
    %v2245 = vpop.permute.xlu0 %2244
    %vm2247 = vcmask 785408
    %v2249 = vsel %vm2247, %v2195, 0
    %v2252 = vsel %vm2247, %v2196, 0
    %v2255 = vsel %vm2247, %v2197, 0
    %v2258 = vsel %vm2247, %v2198, 0
    %2260 = vmatprep.subr.mxu0 0.0
    %2261 = vmatpush1.msra.mxu0 0.0
    %2262 = vmatprep.subr.mxu0 0.0
    %2263 = vmatpush1.msra.mxu0 0.0
    %2264 = vmatprep.subr.mxu0 0.0
    %2265 = vmatpush1.msra.mxu0 0.0
    %2266 = vmatprep.subr.mxu0 0.0
    %2267 = vmatpush1.msra.mxu0 0.0
    %2268 = vmatprep.subr.mxu0 %v2222
    %2269 = vmatpush1.msra.mxu0 %v2221
    %2270 = vmatprep.subr.mxu0 %v2220
    %2271 = vmatpush1.msra.mxu0 %v2219
    %2272 = vmatprep.subr.mxu0 %v2218
    %2273 = vmatpush1.msra.mxu0 %v2217
    %2274 = vmatprep.subr.mxu0 %v2216
    %2275 = vmatpush1.msra.mxu0 %v2215
    %2276 = vmatprep.subr.mxu0 %v2214
    %2277 = vmatpush1.msra.mxu0 %v2213
    %2278 = vmatprep.subr.mxu0 %v2212
    %2279 = vmatpush1.msra.mxu0 %v2211
    %2280 = vmatprep.subr.mxu0 %v2210
    %2281 = vmatpush1.msra.mxu0 %v2209
    %2282 = vmatprep.subr.mxu0 %v2208
    %2283 = vmatpush1.msra.mxu0 %v2207
    %2284 = vmatprep.subr.mxu0 %v2206
    %2285 = vmatpush1.msra.mxu0 %v2205
    %2286 = vmatprep.subr.mxu0 %v2204
    %2287 = vmatpush1.msra.mxu0 %v2203
    %2288 = vmatprep.subr.mxu0 %v2202
    %2289 = vmatpush1.msra.mxu0 %v2201
    %2290 = vmatprep.subr.mxu0 %v2200
    %2291 = vmatpush1.msra.mxu0 %v2199
    %2292 = vmatprep.subr.mxu0 0.0
    %2293 = vmatpush2.msra.mxu0 0.0
    %2294 = vmatprep.subr.mxu0 0.0
    %2295 = vmatpush2.msra.mxu0 0.0
    %2296 = vmatprep.subr.mxu0 0.0
    %2297 = vmatpush2.msra.mxu0 0.0
    %2298 = vmatprep.subr.mxu0 0.0
    %2299 = vmatpush2.msra.mxu0 0.0
    %2300 = vmatprep.subr.mxu0 0.0
    %2301 = vmatpush2.msra.mxu0 0.0
    %2302 = vmatprep.subr.mxu0 0.0
    %2303 = vmatpush2.msra.mxu0 0.0
    %2304 = vmatprep.subr.mxu0 0.0
    %2305 = vmatpush2.msra.mxu0 0.0
    %2306 = vmatprep.subr.mxu0 0.0
    %2307 = vmatpush2.msra.mxu0 0.0
    %2308 = vmatprep.subr.mxu0 0.0
    %2309 = vmatpush2.msra.mxu0 0.0
    %2310 = vmatprep.subr.mxu0 0.0
    %2311 = vmatpush2.msra.mxu0 0.0
    %2312 = vmatprep.subr.mxu0 0.0
    %2313 = vmatpush2.msra.mxu0 0.0
    %2314 = vmatprep.subr.mxu0 0.0
    %2315 = vmatpush2.msra.mxu0 0.0
    %2316 = vmatprep.subr.mxu0 0.0
    %2317 = vmatpush2.msra.mxu0 0.0
    %2318 = vmatprep.subr.mxu0 0.0
    %2319 = vmatpush2.msra.mxu0 0.0
    %2320 = vmatprep.subr.mxu0 0.0
    %2321 = vmatpush2.msra.mxu0 0.0
    %2322 = vmatprep.subr.mxu0 0.0
    %2323 = vmatpush2.msra.mxu0 0.0
    %2324 = vmatprep.mubr.f32.mxu0 0.0
    %2325 = vmatmul.mubr.f32.gmra.mxu0 %v2249
    %v2326 = vpop.f32.mrf.mxu0
    %v2327 = vadd.f32 %v2230, %v2326
    %v2328 = vpop.f32.mrf.mxu0
    %v2329 = vadd.f32 %v2230, %v2328
    %2330 = vmatprep.mubr.f32.mxu0 0.0
    %2331 = vmatmul.mubr.f32.gmra.mxu0 %v2252
    %v2332 = vpop.f32.mrf.mxu0
    %v2333 = vadd.f32 %v2235, %v2332
    %v2334 = vpop.f32.mrf.mxu0
    %v2335 = vadd.f32 %v2235, %v2334
    %2336 = vmatprep.mubr.f32.mxu0 0.0
    %2337 = vmatmul.mubr.f32.gmra.mxu0 %v2255
    %v2338 = vpop.f32.mrf.mxu0
    %v2339 = vadd.f32 %v2240, %v2338
    %v2340 = vpop.f32.mrf.mxu0
    %v2341 = vadd.f32 %v2240, %v2340
    %2342 = vmatprep.mubr.f32.mxu0 0.0
    %2343 = vmatmul.mubr.f32.gmra.mxu0 %v2258
    %v2344 = vpop.f32.mrf.mxu0
    %v2345 = vadd.f32 %v2245, %v2344
    %v2346 = vpop.f32.mrf.mxu0
    %v2347 = vadd.f32 %v2245, %v2346
    %2348 = vdwg.mxu0
    %v2349 = vmax.f32 %v2327, 0.0
    %v2350 = vmax.f32 %v2329, 0.0
    %v2351 = vmax.f32 %v2333, 0.0
    %v2352 = vmax.f32 %v2335, 0.0
    %v2353 = vmax.f32 %v2339, 0.0
    %v2354 = vmax.f32 %v2341, 0.0
    %v2355 = vmax.f32 %v2345, 0.0
    %v2356 = vmax.f32 %v2347, 0.0
    %v2357 = vld [vmem:[%s13] sm:$0xff]
    %v2358 = vld [vmem:[%s13 + $0x8] sm:$0xff]
    %v2359 = vld [vmem:[%s13 + $0x10] sm:$0xff]
    %v2360 = vld [vmem:[%s13 + $0x18] sm:$0xff]
    %v2361 = vld [vmem:[%s14] sm:$0xff]
    %v2362 = vld [vmem:[%s14 + $0x8] sm:$0xff]
    %v2363 = vld [vmem:[%s14 + $0x10] sm:$0xff]
    %v2364 = vld [vmem:[%s14 + $0x18] sm:$0xff]
    %2366 = vset.pattern.permute.xlu0 0
    %2367 = vperm.xlu0 %2366, %v2361
    %v2368 = vpop.permute.xlu0 %2367
    %2371 = vset.pattern.permute.xlu0 0
    %2372 = vperm.xlu0 %2371, %v2362
    %v2373 = vpop.permute.xlu0 %2372
    %2376 = vset.pattern.permute.xlu0 0
    %2377 = vperm.xlu0 %2376, %v2363
    %v2378 = vpop.permute.xlu0 %2377
    %2381 = vset.pattern.permute.xlu0 0
    %2382 = vperm.xlu0 %2381, %v2364
    %v2383 = vpop.permute.xlu0 %2382
    %v2386 = vsel %vm499, %v2357, 0
    %v2389 = vsel %vm499, %v2358, 0
    %v2392 = vsel %vm499, %v2359, 0
    %v2395 = vsel %vm499, %v2360, 0
    %2397 = vmatprep.subr.mxu0 0.0
    %2398 = vmatpush1.msra.mxu0 0.0
    %2399 = vmatprep.subr.mxu0 0.0
    %2400 = vmatpush1.msra.mxu0 0.0
    %2401 = vmatprep.subr.mxu0 0.0
    %2402 = vmatpush1.msra.mxu0 0.0
    %2403 = vmatprep.subr.mxu0 0.0
    %2404 = vmatpush1.msra.mxu0 0.0
    %2405 = vmatprep.subr.mxu0 0.0
    %2406 = vmatpush1.msra.mxu0 0.0
    %2407 = vmatprep.subr.mxu0 0.0
    %2408 = vmatpush1.msra.mxu0 0.0
    %2409 = vmatprep.subr.mxu0 0.0
    %2410 = vmatpush1.msra.mxu0 0.0
    %2411 = vmatprep.subr.mxu0 0.0
    %2412 = vmatpush1.msra.mxu0 0.0
    %2413 = vmatprep.subr.mxu0 0.0
    %2414 = vmatpush1.msra.mxu0 0.0
    %2415 = vmatprep.subr.mxu0 0.0
    %2416 = vmatpush1.msra.mxu0 0.0
    %2417 = vmatprep.subr.mxu0 0.0
    %2418 = vmatpush1.msra.mxu0 0.0
    %2419 = vmatprep.subr.mxu0 0.0
    %2420 = vmatpush1.msra.mxu0 0.0
    %2421 = vmatprep.subr.mxu0 %v2356
    %2422 = vmatpush1.msra.mxu0 %v2355
    %2423 = vmatprep.subr.mxu0 %v2354
    %2424 = vmatpush1.msra.mxu0 %v2353
    %2425 = vmatprep.subr.mxu0 %v2352
    %2426 = vmatpush1.msra.mxu0 %v2351
    %2427 = vmatprep.subr.mxu0 %v2350
    %2428 = vmatpush1.msra.mxu0 %v2349
    %2429 = vmatprep.subr.mxu0 0.0
    %2430 = vmatpush2.msra.mxu0 0.0
    %2431 = vmatprep.subr.mxu0 0.0
    %2432 = vmatpush2.msra.mxu0 0.0
    %2433 = vmatprep.subr.mxu0 0.0
    %2434 = vmatpush2.msra.mxu0 0.0
    %2435 = vmatprep.subr.mxu0 0.0
    %2436 = vmatpush2.msra.mxu0 0.0
    %2437 = vmatprep.subr.mxu0 0.0
    %2438 = vmatpush2.msra.mxu0 0.0
    %2439 = vmatprep.subr.mxu0 0.0
    %2440 = vmatpush2.msra.mxu0 0.0
    %2441 = vmatprep.subr.mxu0 0.0
    %2442 = vmatpush2.msra.mxu0 0.0
    %2443 = vmatprep.subr.mxu0 0.0
    %2444 = vmatpush2.msra.mxu0 0.0
    %2445 = vmatprep.subr.mxu0 0.0
    %2446 = vmatpush2.msra.mxu0 0.0
    %2447 = vmatprep.subr.mxu0 0.0
    %2448 = vmatpush2.msra.mxu0 0.0
    %2449 = vmatprep.subr.mxu0 0.0
    %2450 = vmatpush2.msra.mxu0 0.0
    %2451 = vmatprep.subr.mxu0 0.0
    %2452 = vmatpush2.msra.mxu0 0.0
    %2453 = vmatprep.subr.mxu0 0.0
    %2454 = vmatpush2.msra.mxu0 0.0
    %2455 = vmatprep.subr.mxu0 0.0
    %2456 = vmatpush2.msra.mxu0 0.0
    %2457 = vmatprep.subr.mxu0 0.0
    %2458 = vmatpush2.msra.mxu0 0.0
    %2459 = vmatprep.subr.mxu0 0.0
    %2460 = vmatpush2.msra.mxu0 0.0
    %2461 = vmatprep.mubr.f32.mxu0 0.0
    %2462 = vmatmul.mubr.f32.gmra.mxu0 %v2386
    %v2463 = vpop.f32.mrf.mxu0
    %v2464 = vadd.f32 %v2368, %v2463
    %v2465 = vpop.f32.mrf.mxu0
    %v2466 = vadd.f32 %v2368, %v2465
    %2467 = vmatprep.mubr.f32.mxu0 0.0
    %2468 = vmatmul.mubr.f32.gmra.mxu0 %v2389
    %v2469 = vpop.f32.mrf.mxu0
    %v2470 = vadd.f32 %v2373, %v2469
    %v2471 = vpop.f32.mrf.mxu0
    %v2472 = vadd.f32 %v2373, %v2471
    %2473 = vmatprep.mubr.f32.mxu0 0.0
    %2474 = vmatmul.mubr.f32.gmra.mxu0 %v2392
    %v2475 = vpop.f32.mrf.mxu0
    %v2476 = vadd.f32 %v2378, %v2475
    %v2477 = vpop.f32.mrf.mxu0
    %v2478 = vadd.f32 %v2378, %v2477
    %2479 = vmatprep.mubr.f32.mxu0 0.0
    %2480 = vmatmul.mubr.f32.gmra.mxu0 %v2395
    %v2481 = vpop.f32.mrf.mxu0
    %v2482 = vadd.f32 %v2383, %v2481
    %v2483 = vpop.f32.mrf.mxu0
    %v2484 = vadd.f32 %v2383, %v2483
    %2485 = vdwg.mxu0
    %v2486 = vadd.f32 %v2085, %v2464
    %v2487 = vadd.f32 %v2087, %v2466
    %v2488 = vadd.f32 %v2091, %v2470
    %v2489 = vadd.f32 %v2093, %v2472
    %v2490 = vadd.f32 %v2097, %v2476
    %v2491 = vadd.f32 %v2099, %v2478
    %v2492 = vadd.f32 %v2103, %v2482
    %v2493 = vadd.f32 %v2105, %v2484
    %2494 = vrot.lane.b32.xlu0 %v2486, 2
    %v2495 = vpop.permute.xlu0 %2494
    %2496 = vrot.lane.b32.xlu0 %v2488, 2
    %v2497 = vpop.permute.xlu0 %2496
    %2498 = vrot.lane.b32.xlu0 %v2490, 2
    %v2499 = vpop.permute.xlu0 %2498
    %2500 = vrot.lane.b32.xlu0 %v2492, 2
    %v2501 = vpop.permute.xlu0 %2500
    %2502 = vrot.lane.b32.xlu0 %v2487, 2
    %v2503 = vpop.permute.xlu0 %2502
    %2504 = vrot.lane.b32.xlu0 %v2489, 2
    %v2505 = vpop.permute.xlu0 %2504
    %2506 = vrot.lane.b32.xlu0 %v2491, 2
    %v2507 = vpop.permute.xlu0 %2506
    %2508 = vrot.lane.b32.xlu0 %v2493, 2
    %v2509 = vpop.permute.xlu0 %2508
    %v2510 = vsel %vm801, %v2495, %v2503
    %v2511 = vsel %vm801, %v2497, %v2505
    %v2512 = vsel %vm801, %v2499, %v2507
    %v2513 = vsel %vm801, %v2501, %v2509
    %v2514 = vsel %vm801, %v2503, %v2495
    %v2515 = vsel %vm801, %v2505, %v2497
    %v2516 = vsel %vm801, %v2507, %v2499
    %v2517 = vsel %vm801, %v2509, %v2501
    %v2518 = vsel %vm815, %v2514, 0.0
    %v2519 = vsel %vm815, %v2510, 0.0
    %v2520 = vsel %vm815, %v2515, 0.0
    %v2521 = vsel %vm815, %v2511, 0.0
    %v2522 = vsel %vm815, %v2516, 0.0
    %v2523 = vsel %vm815, %v2512, 0.0
    %v2524 = vsel %vm815, %v2517, 0.0
    %v2525 = vsel %vm815, %v2513, 0.0
    %2526 = vrot.lane.b32.xlu0 %v2486, 126
    %v2527 = vpop.permute.xlu0 %2526
    %2528 = vrot.lane.b32.xlu0 %v2488, 126
    %v2529 = vpop.permute.xlu0 %2528
    %2530 = vrot.lane.b32.xlu0 %v2490, 126
    %v2531 = vpop.permute.xlu0 %2530
    %2532 = vrot.lane.b32.xlu0 %v2492, 126
    %v2533 = vpop.permute.xlu0 %2532
    %2534 = vrot.lane.b32.xlu0 %v2487, 126
    %v2535 = vpop.permute.xlu0 %2534
    %2536 = vrot.lane.b32.xlu0 %v2489, 126
    %v2537 = vpop.permute.xlu0 %2536
    %2538 = vrot.lane.b32.xlu0 %v2491, 126
    %v2539 = vpop.permute.xlu0 %2538
    %2540 = vrot.lane.b32.xlu0 %v2493, 126
    %v2541 = vpop.permute.xlu0 %2540
    %v2542 = vsel %vm840, %v2527, %v2535
    %v2543 = vsel %vm840, %v2529, %v2537
    %v2544 = vsel %vm840, %v2531, %v2539
    %v2545 = vsel %vm840, %v2533, %v2541
    %v2546 = vsel %vm840, %v2535, %v2527
    %v2547 = vsel %vm840, %v2537, %v2529
    %v2548 = vsel %vm840, %v2539, %v2531
    %v2549 = vsel %vm840, %v2541, %v2533
    %v2550 = vsel %vm854, %v2542, 0.0
    %v2551 = vsel %vm854, %v2546, 0.0
    %v2552 = vsel %vm854, %v2543, 0.0
    %v2553 = vsel %vm854, %v2547, 0.0
    %v2554 = vsel %vm854, %v2544, 0.0
    %v2555 = vsel %vm854, %v2548, 0.0
    %v2556 = vsel %vm854, %v2545, 0.0
    %v2557 = vsel %vm854, %v2549, 0.0
    %2558 = vst [vmem:[#allocation2] sm:$0xff] %v2518
    %2559 = vst [vmem:[#allocation2 + $0x8] sm:$0xff] %v2519
    %2560 = vst [vmem:[#allocation2 + $0x10] sm:$0xff] %v2520
    %2561 = vst [vmem:[#allocation2 + $0x18] sm:$0xff] %v2521
    %2562 = vst [vmem:[#allocation2 + $0x20] sm:$0xff] %v2522
    %2563 = vst [vmem:[#allocation2 + $0x28] sm:$0xff] %v2523
    %2564 = vst [vmem:[#allocation2 + $0x30] sm:$0xff] %v2524
    %2565 = vst [vmem:[#allocation2 + $0x38] sm:$0xff] %v2525
    %2566 = vst [vmem:[#allocation2 + $0x40] sm:$0xff] %v2486
    %2567 = vst [vmem:[#allocation2 + $0x48] sm:$0xff] %v2487
    %2568 = vst [vmem:[#allocation2 + $0x50] sm:$0xff] %v2488
    %2569 = vst [vmem:[#allocation2 + $0x58] sm:$0xff] %v2489
    %2570 = vst [vmem:[#allocation2 + $0x60] sm:$0xff] %v2490
    %2571 = vst [vmem:[#allocation2 + $0x68] sm:$0xff] %v2491
    %2572 = vst [vmem:[#allocation2 + $0x70] sm:$0xff] %v2492
    %2573 = vst [vmem:[#allocation2 + $0x78] sm:$0xff] %v2493
    %2574 = vst [vmem:[#allocation2 + $0x80] sm:$0xff] %v2550
    %2575 = vst [vmem:[#allocation2 + $0x88] sm:$0xff] %v2551
    %2576 = vst [vmem:[#allocation2 + $0x90] sm:$0xff] %v2552
    %2577 = vst [vmem:[#allocation2 + $0x98] sm:$0xff] %v2553
    %2578 = vst [vmem:[#allocation2 + $0xa0] sm:$0xff] %v2554
    %2579 = vst [vmem:[#allocation2 + $0xa8] sm:$0xff] %v2555
    %2580 = vst [vmem:[#allocation2 + $0xb0] sm:$0xff] %v2556
    %2581 = vst [vmem:[#allocation2 + $0xb8] sm:$0xff] %v2557
    %s2582 = scalar_lea.vmem %s11, 32
    %v2583 = vld [vmem:[%s2582] sm:$0xff]
    %v2584 = vld [vmem:[%s2582 + $0x8] sm:$0xff]
    %v2585 = vld [vmem:[%s2582 + $0x10] sm:$0xff]
    %v2586 = vld [vmem:[%s2582 + $0x18] sm:$0xff]
    %v2587 = vld [vmem:[#allocation2] sm:$0xff]
    %v2588 = vld [vmem:[#allocation2 + $0x8] sm:$0xff]
    %v2589 = vld [vmem:[#allocation2 + $0x10] sm:$0xff]
    %v2590 = vld [vmem:[#allocation2 + $0x18] sm:$0xff]
    %v2591 = vld [vmem:[#allocation2 + $0x20] sm:$0xff]
    %v2592 = vld [vmem:[#allocation2 + $0x28] sm:$0xff]
    %v2593 = vld [vmem:[#allocation2 + $0x30] sm:$0xff]
    %v2594 = vld [vmem:[#allocation2 + $0x38] sm:$0xff]
    %v2595 = vld [vmem:[#allocation2 + $0x40] sm:$0xff]
    %v2596 = vld [vmem:[#allocation2 + $0x48] sm:$0xff]
    %v2597 = vld [vmem:[#allocation2 + $0x50] sm:$0xff]
    %v2598 = vld [vmem:[#allocation2 + $0x58] sm:$0xff]
    %v2599 = vld [vmem:[#allocation2 + $0x60] sm:$0xff]
    %v2600 = vld [vmem:[#allocation2 + $0x68] sm:$0xff]
    %v2601 = vld [vmem:[#allocation2 + $0x70] sm:$0xff]
    %v2602 = vld [vmem:[#allocation2 + $0x78] sm:$0xff]
    %v2603 = vld [vmem:[#allocation2 + $0x80] sm:$0xff]
    %v2604 = vld [vmem:[#allocation2 + $0x88] sm:$0xff]
    %v2605 = vld [vmem:[#allocation2 + $0x90] sm:$0xff]
    %v2606 = vld [vmem:[#allocation2 + $0x98] sm:$0xff]
    %v2607 = vld [vmem:[#allocation2 + $0xa0] sm:$0xff]
    %v2608 = vld [vmem:[#allocation2 + $0xa8] sm:$0xff]
    %v2609 = vld [vmem:[#allocation2 + $0xb0] sm:$0xff]
    %v2610 = vld [vmem:[#allocation2 + $0xb8] sm:$0xff]
    %s2611 = scalar_lea.vmem %s12, 32
    %v2612 = vld [vmem:[%s2611] sm:$0xff]
    %v2613 = vld [vmem:[%s2611 + $0x8] sm:$0xff]
    %v2614 = vld [vmem:[%s2611 + $0x10] sm:$0xff]
    %v2615 = vld [vmem:[%s2611 + $0x18] sm:$0xff]
    %2617 = vset.pattern.permute.xlu0 0
    %2618 = vperm.xlu0 %2617, %v2612
    %v2619 = vpop.permute.xlu0 %2618
    %2622 = vset.pattern.permute.xlu0 0
    %2623 = vperm.xlu0 %2622, %v2613
    %v2624 = vpop.permute.xlu0 %2623
    %2627 = vset.pattern.permute.xlu0 0
    %2628 = vperm.xlu0 %2627, %v2614
    %v2629 = vpop.permute.xlu0 %2628
    %2632 = vset.pattern.permute.xlu0 0
    %2633 = vperm.xlu0 %2632, %v2615
    %v2634 = vpop.permute.xlu0 %2633
    %v2637 = vsel %vm2247, %v2583, 0
    %v2640 = vsel %vm2247, %v2584, 0
    %v2643 = vsel %vm2247, %v2585, 0
    %v2646 = vsel %vm2247, %v2586, 0
    %2648 = vmatprep.subr.mxu0 0.0
    %2649 = vmatpush1.msra.mxu0 0.0
    %2650 = vmatprep.subr.mxu0 0.0
    %2651 = vmatpush1.msra.mxu0 0.0
    %2652 = vmatprep.subr.mxu0 0.0
    %2653 = vmatpush1.msra.mxu0 0.0
    %2654 = vmatprep.subr.mxu0 0.0
    %2655 = vmatpush1.msra.mxu0 0.0
    %2656 = vmatprep.subr.mxu0 %v2610
    %2657 = vmatpush1.msra.mxu0 %v2609
    %2658 = vmatprep.subr.mxu0 %v2608
    %2659 = vmatpush1.msra.mxu0 %v2607
    %2660 = vmatprep.subr.mxu0 %v2606
    %2661 = vmatpush1.msra.mxu0 %v2605
    %2662 = vmatprep.subr.mxu0 %v2604
    %2663 = vmatpush1.msra.mxu0 %v2603
    %2664 = vmatprep.subr.mxu0 %v2602
    %2665 = vmatpush1.msra.mxu0 %v2601
    %2666 = vmatprep.subr.mxu0 %v2600
    %2667 = vmatpush1.msra.mxu0 %v2599
    %2668 = vmatprep.subr.mxu0 %v2598
    %2669 = vmatpush1.msra.mxu0 %v2597
    %2670 = vmatprep.subr.mxu0 %v2596
    %2671 = vmatpush1.msra.mxu0 %v2595
    %2672 = vmatprep.subr.mxu0 %v2594
    %2673 = vmatpush1.msra.mxu0 %v2593
    %2674 = vmatprep.subr.mxu0 %v2592
    %2675 = vmatpush1.msra.mxu0 %v2591
    %2676 = vmatprep.subr.mxu0 %v2590
    %2677 = vmatpush1.msra.mxu0 %v2589
    %2678 = vmatprep.subr.mxu0 %v2588
    %2679 = vmatpush1.msra.mxu0 %v2587
    %2680 = vmatprep.subr.mxu0 0.0
    %2681 = vmatpush2.msra.mxu0 0.0
    %2682 = vmatprep.subr.mxu0 0.0
    %2683 = vmatpush2.msra.mxu0 0.0
    %2684 = vmatprep.subr.mxu0 0.0
    %2685 = vmatpush2.msra.mxu0 0.0
    %2686 = vmatprep.subr.mxu0 0.0
    %2687 = vmatpush2.msra.mxu0 0.0
    %2688 = vmatprep.subr.mxu0 0.0
    %2689 = vmatpush2.msra.mxu0 0.0
    %2690 = vmatprep.subr.mxu0 0.0
    %2691 = vmatpush2.msra.mxu0 0.0
    %2692 = vmatprep.subr.mxu0 0.0
    %2693 = vmatpush2.msra.mxu0 0.0
    %2694 = vmatprep.subr.mxu0 0.0
    %2695 = vmatpush2.msra.mxu0 0.0
    %2696 = vmatprep.subr.mxu0 0.0
    %2697 = vmatpush2.msra.mxu0 0.0
    %2698 = vmatprep.subr.mxu0 0.0
    %2699 = vmatpush2.msra.mxu0 0.0
    %2700 = vmatprep.subr.mxu0 0.0
    %2701 = vmatpush2.msra.mxu0 0.0
    %2702 = vmatprep.subr.mxu0 0.0
    %2703 = vmatpush2.msra.mxu0 0.0
    %2704 = vmatprep.subr.mxu0 0.0
    %2705 = vmatpush2.msra.mxu0 0.0
    %2706 = vmatprep.subr.mxu0 0.0
    %2707 = vmatpush2.msra.mxu0 0.0
    %2708 = vmatprep.subr.mxu0 0.0
    %2709 = vmatpush2.msra.mxu0 0.0
    %2710 = vmatprep.subr.mxu0 0.0
    %2711 = vmatpush2.msra.mxu0 0.0
    %2712 = vmatprep.mubr.f32.mxu0 0.0
    %2713 = vmatmul.mubr.f32.gmra.mxu0 %v2637
    %v2714 = vpop.f32.mrf.mxu0
    %v2715 = vadd.f32 %v2619, %v2714
    %v2716 = vpop.f32.mrf.mxu0
    %v2717 = vadd.f32 %v2619, %v2716
    %2718 = vmatprep.mubr.f32.mxu0 0.0
    %2719 = vmatmul.mubr.f32.gmra.mxu0 %v2640
    %v2720 = vpop.f32.mrf.mxu0
    %v2721 = vadd.f32 %v2624, %v2720
    %v2722 = vpop.f32.mrf.mxu0
    %v2723 = vadd.f32 %v2624, %v2722
    %2724 = vmatprep.mubr.f32.mxu0 0.0
    %2725 = vmatmul.mubr.f32.gmra.mxu0 %v2643
    %v2726 = vpop.f32.mrf.mxu0
    %v2727 = vadd.f32 %v2629, %v2726
    %v2728 = vpop.f32.mrf.mxu0
    %v2729 = vadd.f32 %v2629, %v2728
    %2730 = vmatprep.mubr.f32.mxu0 0.0
    %2731 = vmatmul.mubr.f32.gmra.mxu0 %v2646
    %v2732 = vpop.f32.mrf.mxu0
    %v2733 = vadd.f32 %v2634, %v2732
    %v2734 = vpop.f32.mrf.mxu0
    %v2735 = vadd.f32 %v2634, %v2734
    %2736 = vdwg.mxu0
    %v2737 = vmax.f32 %v2715, 0.0
    %v2738 = vmax.f32 %v2717, 0.0
    %v2739 = vmax.f32 %v2721, 0.0
    %v2740 = vmax.f32 %v2723, 0.0
    %v2741 = vmax.f32 %v2727, 0.0
    %v2742 = vmax.f32 %v2729, 0.0
    %v2743 = vmax.f32 %v2733, 0.0
    %v2744 = vmax.f32 %v2735, 0.0
    %s2745 = scalar_lea.vmem %s13, 32
    %v2746 = vld [vmem:[%s2745] sm:$0xff]
    %v2747 = vld [vmem:[%s2745 + $0x8] sm:$0xff]
    %v2748 = vld [vmem:[%s2745 + $0x10] sm:$0xff]
    %v2749 = vld [vmem:[%s2745 + $0x18] sm:$0xff]
    %s2750 = scalar_lea.vmem %s14, 32
    %v2751 = vld [vmem:[%s2750] sm:$0xff]
    %v2752 = vld [vmem:[%s2750 + $0x8] sm:$0xff]
    %v2753 = vld [vmem:[%s2750 + $0x10] sm:$0xff]
    %v2754 = vld [vmem:[%s2750 + $0x18] sm:$0xff]
    %2756 = vset.pattern.permute.xlu0 0
    %2757 = vperm.xlu0 %2756, %v2751
    %v2758 = vpop.permute.xlu0 %2757
    %2761 = vset.pattern.permute.xlu0 0
    %2762 = vperm.xlu0 %2761, %v2752
    %v2763 = vpop.permute.xlu0 %2762
    %2766 = vset.pattern.permute.xlu0 0
    %2767 = vperm.xlu0 %2766, %v2753
    %v2768 = vpop.permute.xlu0 %2767
    %2771 = vset.pattern.permute.xlu0 0
    %2772 = vperm.xlu0 %2771, %v2754
    %v2773 = vpop.permute.xlu0 %2772
    %v2776 = vsel %vm499, %v2746, 0
    %v2779 = vsel %vm499, %v2747, 0
    %v2782 = vsel %vm499, %v2748, 0
    %v2785 = vsel %vm499, %v2749, 0
    %2787 = vmatprep.subr.mxu0 0.0
    %2788 = vmatpush1.msra.mxu0 0.0
    %2789 = vmatprep.subr.mxu0 0.0
    %2790 = vmatpush1.msra.mxu0 0.0
    %2791 = vmatprep.subr.mxu0 0.0
    %2792 = vmatpush1.msra.mxu0 0.0
    %2793 = vmatprep.subr.mxu0 0.0
    %2794 = vmatpush1.msra.mxu0 0.0
    %2795 = vmatprep.subr.mxu0 0.0
    %2796 = vmatpush1.msra.mxu0 0.0
    %2797 = vmatprep.subr.mxu0 0.0
    %2798 = vmatpush1.msra.mxu0 0.0
    %2799 = vmatprep.subr.mxu0 0.0
    %2800 = vmatpush1.msra.mxu0 0.0
    %2801 = vmatprep.subr.mxu0 0.0
    %2802 = vmatpush1.msra.mxu0 0.0
    %2803 = vmatprep.subr.mxu0 0.0
    %2804 = vmatpush1.msra.mxu0 0.0
    %2805 = vmatprep.subr.mxu0 0.0
    %2806 = vmatpush1.msra.mxu0 0.0
    %2807 = vmatprep.subr.mxu0 0.0
    %2808 = vmatpush1.msra.mxu0 0.0
    %2809 = vmatprep.subr.mxu0 0.0
    %2810 = vmatpush1.msra.mxu0 0.0
    %2811 = vmatprep.subr.mxu0 %v2744
    %2812 = vmatpush1.msra.mxu0 %v2743
    %2813 = vmatprep.subr.mxu0 %v2742
    %2814 = vmatpush1.msra.mxu0 %v2741
    %2815 = vmatprep.subr.mxu0 %v2740
    %2816 = vmatpush1.msra.mxu0 %v2739
    %2817 = vmatprep.subr.mxu0 %v2738
    %2818 = vmatpush1.msra.mxu0 %v2737
    %2819 = vmatprep.subr.mxu0 0.0
    %2820 = vmatpush2.msra.mxu0 0.0
    %2821 = vmatprep.subr.mxu0 0.0
    %2822 = vmatpush2.msra.mxu0 0.0
    %2823 = vmatprep.subr.mxu0 0.0
    %2824 = vmatpush2.msra.mxu0 0.0
    %2825 = vmatprep.subr.mxu0 0.0
    %2826 = vmatpush2.msra.mxu0 0.0
    %2827 = vmatprep.subr.mxu0 0.0
    %2828 = vmatpush2.msra.mxu0 0.0
    %2829 = vmatprep.subr.mxu0 0.0
    %2830 = vmatpush2.msra.mxu0 0.0
    %2831 = vmatprep.subr.mxu0 0.0
    %2832 = vmatpush2.msra.mxu0 0.0
    %2833 = vmatprep.subr.mxu0 0.0
    %2834 = vmatpush2.msra.mxu0 0.0
    %2835 = vmatprep.subr.mxu0 0.0
    %2836 = vmatpush2.msra.mxu0 0.0
    %2837 = vmatprep.subr.mxu0 0.0
    %2838 = vmatpush2.msra.mxu0 0.0
    %2839 = vmatprep.subr.mxu0 0.0
    %2840 = vmatpush2.msra.mxu0 0.0
    %2841 = vmatprep.subr.mxu0 0.0
    %2842 = vmatpush2.msra.mxu0 0.0
    %2843 = vmatprep.subr.mxu0 0.0
    %2844 = vmatpush2.msra.mxu0 0.0
    %2845 = vmatprep.subr.mxu0 0.0
    %2846 = vmatpush2.msra.mxu0 0.0
    %2847 = vmatprep.subr.mxu0 0.0
    %2848 = vmatpush2.msra.mxu0 0.0
    %2849 = vmatprep.subr.mxu0 0.0
    %2850 = vmatpush2.msra.mxu0 0.0
    %2851 = vmatprep.mubr.f32.mxu0 0.0
    %2852 = vmatmul.mubr.f32.gmra.mxu0 %v2776
    %v2853 = vpop.f32.mrf.mxu0
    %v2854 = vadd.f32 %v2758, %v2853
    %v2855 = vpop.f32.mrf.mxu0
    %v2856 = vadd.f32 %v2758, %v2855
    %2857 = vmatprep.mubr.f32.mxu0 0.0
    %2858 = vmatmul.mubr.f32.gmra.mxu0 %v2779
    %v2859 = vpop.f32.mrf.mxu0
    %v2860 = vadd.f32 %v2763, %v2859
    %v2861 = vpop.f32.mrf.mxu0
    %v2862 = vadd.f32 %v2763, %v2861
    %2863 = vmatprep.mubr.f32.mxu0 0.0
    %2864 = vmatmul.mubr.f32.gmra.mxu0 %v2782
    %v2865 = vpop.f32.mrf.mxu0
    %v2866 = vadd.f32 %v2768, %v2865
    %v2867 = vpop.f32.mrf.mxu0
    %v2868 = vadd.f32 %v2768, %v2867
    %2869 = vmatprep.mubr.f32.mxu0 0.0
    %2870 = vmatmul.mubr.f32.gmra.mxu0 %v2785
    %v2871 = vpop.f32.mrf.mxu0
    %v2872 = vadd.f32 %v2773, %v2871
    %v2873 = vpop.f32.mrf.mxu0
    %v2874 = vadd.f32 %v2773, %v2873
    %2875 = vdwg.mxu0
    %v2876 = vadd.f32 %v2486, %v2854
    %v2877 = vadd.f32 %v2487, %v2856
    %v2878 = vadd.f32 %v2488, %v2860
    %v2879 = vadd.f32 %v2489, %v2862
    %v2880 = vadd.f32 %v2490, %v2866
    %v2881 = vadd.f32 %v2491, %v2868
    %v2882 = vadd.f32 %v2492, %v2872
    %v2883 = vadd.f32 %v2493, %v2874
    %v2884 = vld [vmem:[%s15] sm:$0xff]
    %v2885 = vld [vmem:[%s16] sm:$0xff]
    %2887 = vset.pattern.permute.xlu0 0
    %2888 = vperm.xlu0 %2887, %v2885
    %v2889 = vpop.permute.xlu0 %2888
    %v2892 = vsel %vm499, %v2884, 0
    %2894 = vmatprep.subr.mxu0 0.0
    %2895 = vmatpush1.msra.mxu0 0.0
    %2896 = vmatprep.subr.mxu0 0.0
    %2897 = vmatpush1.msra.mxu0 0.0
    %2898 = vmatprep.subr.mxu0 0.0
    %2899 = vmatpush1.msra.mxu0 0.0
    %2900 = vmatprep.subr.mxu0 0.0
    %2901 = vmatpush1.msra.mxu0 0.0
    %2902 = vmatprep.subr.mxu0 0.0
    %2903 = vmatpush1.msra.mxu0 0.0
    %2904 = vmatprep.subr.mxu0 0.0
    %2905 = vmatpush1.msra.mxu0 0.0
    %2906 = vmatprep.subr.mxu0 0.0
    %2907 = vmatpush1.msra.mxu0 0.0
    %2908 = vmatprep.subr.mxu0 0.0
    %2909 = vmatpush1.msra.mxu0 0.0
    %2910 = vmatprep.subr.mxu0 0.0
    %2911 = vmatpush1.msra.mxu0 0.0
    %2912 = vmatprep.subr.mxu0 0.0
    %2913 = vmatpush1.msra.mxu0 0.0
    %2914 = vmatprep.subr.mxu0 0.0
    %2915 = vmatpush1.msra.mxu0 0.0
    %2916 = vmatprep.subr.mxu0 0.0
    %2917 = vmatpush1.msra.mxu0 0.0
    %2918 = vmatprep.subr.mxu0 %v2883
    %2919 = vmatpush1.msra.mxu0 %v2882
    %2920 = vmatprep.subr.mxu0 %v2881
    %2921 = vmatpush1.msra.mxu0 %v2880
    %2922 = vmatprep.subr.mxu0 %v2879
    %2923 = vmatpush1.msra.mxu0 %v2878
    %2924 = vmatprep.subr.mxu0 %v2877
    %2925 = vmatpush1.msra.mxu0 %v2876
    %2926 = vmatprep.subr.mxu0 0.0
    %2927 = vmatpush2.msra.mxu0 0.0
    %2928 = vmatprep.subr.mxu0 0.0
    %2929 = vmatpush2.msra.mxu0 0.0
    %2930 = vmatprep.subr.mxu0 0.0
    %2931 = vmatpush2.msra.mxu0 0.0
    %2932 = vmatprep.subr.mxu0 0.0
    %2933 = vmatpush2.msra.mxu0 0.0
    %2934 = vmatprep.subr.mxu0 0.0
    %2935 = vmatpush2.msra.mxu0 0.0
    %2936 = vmatprep.subr.mxu0 0.0
    %2937 = vmatpush2.msra.mxu0 0.0
    %2938 = vmatprep.subr.mxu0 0.0
    %2939 = vmatpush2.msra.mxu0 0.0
    %2940 = vmatprep.subr.mxu0 0.0
    %2941 = vmatpush2.msra.mxu0 0.0
    %2942 = vmatprep.subr.mxu0 0.0
    %2943 = vmatpush2.msra.mxu0 0.0
    %2944 = vmatprep.subr.mxu0 0.0
    %2945 = vmatpush2.msra.mxu0 0.0
    %2946 = vmatprep.subr.mxu0 0.0
    %2947 = vmatpush2.msra.mxu0 0.0
    %2948 = vmatprep.subr.mxu0 0.0
    %2949 = vmatpush2.msra.mxu0 0.0
    %2950 = vmatprep.subr.mxu0 0.0
    %2951 = vmatpush2.msra.mxu0 0.0
    %2952 = vmatprep.subr.mxu0 0.0
    %2953 = vmatpush2.msra.mxu0 0.0
    %2954 = vmatprep.subr.mxu0 0.0
    %2955 = vmatpush2.msra.mxu0 0.0
    %2956 = vmatprep.subr.mxu0 0.0
    %2957 = vmatpush2.msra.mxu0 0.0
    %2958 = vmatprep.mubr.f32.mxu0 0.0
    %2959 = vmatmul.mubr.f32.gmra.mxu0 %v2892
    %v2960 = vpop.f32.mrf.mxu0
    %v2961 = vadd.f32 %v2889, %v2960
    %v2962 = vpop.f32.mrf.mxu0
    %v2963 = vadd.f32 %v2889, %v2962
    %2964 = vdwg.mxu0
    %v2965 = vsel %vm1937, %v2961, 0.0
    %v2966 = vsel %vm1937, %v2963, 0.0
    %s2967 = scalar_lea.vmem [#allocation3], 16
    %2968 = vst [vmem:[%s2967] sm:$0xff] %v2965
    %s2969 = scalar_lea.vmem [#allocation3], 24
    %2970 = vst [vmem:[%s2969] sm:$0xff] %v2966
    %v2971 = vrot.slane %v2965, 4
    %v2972 = vmax.f32 %v2965, %v2971
    %v2973 = vrot.slane %v2972, 2
    %v2974 = vmax.f32 %v2972, %v2973
    %v2975 = vrot.slane %v2974, 1
    %v2976 = vmax.f32 %v2974, %v2975
    %v2977 = vrot.slane %v2966, 4
    %v2978 = vmax.f32 %v2966, %v2977
    %v2979 = vrot.slane %v2978, 2
    %v2980 = vmax.f32 %v2978, %v2979
    %v2981 = vrot.slane %v2980, 1
    %v2982 = vmax.f32 %v2980, %v2981
    %v2983 = vsub.f32 %v2965, %v2976
    %v2984 = vsub.f32 %v2966, %v2982
    %v2985 = vmul.f32 %v2983, 1.442695
    %v2986 = vpow.pop %v2985
    %v2987 = vmul.f32 %v2984, 1.442695
    %v2988 = vpow.pop %v2987
    %v2989 = vrot.slane %v2986, 4
    %v2990 = vadd.f32 %v2986, %v2989
    %v2991 = vrot.slane %v2990, 2
    %v2992 = vadd.f32 %v2990, %v2991
    %v2993 = vrot.slane %v2992, 1
    %v2994 = vadd.f32 %v2992, %v2993
    %v2995 = vrot.slane %v2988, 4
    %v2996 = vadd.f32 %v2988, %v2995
    %v2997 = vrot.slane %v2996, 2
    %v2998 = vadd.f32 %v2996, %v2997
    %v2999 = vrot.slane %v2998, 1
    %v3000 = vadd.f32 %v2998, %v2999
    %v3001 = vrcp.pop %v2994
    %v3002 = vmul.f32 %v2986, %v3001
    %v3003 = vrcp.pop %v3000
    %v3004 = vmul.f32 %v2988, %v3003
    %s3005 = scalar_lea.vmem %s9, 32
    %v3006 = vld [vmem:[%s3005] sm:$0xff]
    %v3007 = vld [vmem:[%s3005 + $0x8] sm:$0xff]
    %v3008 = vld [vmem:[%s3005 + $0x10] sm:$0xff]
    %v3009 = vld [vmem:[%s3005 + $0x18] sm:$0xff]
    %s3010 = scalar_lea.vmem %s10, 32
    %v3011 = vld [vmem:[%s3010] sm:$0xff]
    %v3012 = vld [vmem:[%s3010 + $0x8] sm:$0xff]
    %v3013 = vld [vmem:[%s3010 + $0x10] sm:$0xff]
    %v3014 = vld [vmem:[%s3010 + $0x18] sm:$0xff]
    %3016 = vset.pattern.permute.xlu0 0
    %3017 = vperm.xlu0 %3016, %v3011
    %v3018 = vpop.permute.xlu0 %3017
    %3021 = vset.pattern.permute.xlu0 0
    %3022 = vperm.xlu0 %3021, %v3012
    %v3023 = vpop.permute.xlu0 %3022
    %3026 = vset.pattern.permute.xlu0 0
    %3027 = vperm.xlu0 %3026, %v3013
    %v3028 = vpop.permute.xlu0 %3027
    %3031 = vset.pattern.permute.xlu0 0
    %3032 = vperm.xlu0 %3031, %v3014
    %v3033 = vpop.permute.xlu0 %3032
    %v3036 = vsel %vm2005, %v3006, 0
    %v3039 = vsel %vm2005, %v3007, 0
    %v3042 = vsel %vm2005, %v3008, 0
    %v3045 = vsel %vm2005, %v3009, 0
    %3047 = vmatprep.subr.mxu0 0.0
    %3048 = vmatpush1.msra.mxu0 0.0
    %3049 = vmatprep.subr.mxu0 0.0
    %3050 = vmatpush1.msra.mxu0 0.0
    %3051 = vmatprep.subr.mxu0 0.0
    %3052 = vmatpush1.msra.mxu0 0.0
    %3053 = vmatprep.subr.mxu0 0.0
    %3054 = vmatpush1.msra.mxu0 0.0
    %3055 = vmatprep.subr.mxu0 0.0
    %3056 = vmatpush1.msra.mxu0 0.0
    %3057 = vmatprep.subr.mxu0 0.0
    %3058 = vmatpush1.msra.mxu0 0.0
    %3059 = vmatprep.subr.mxu0 0.0
    %3060 = vmatpush1.msra.mxu0 0.0
    %3061 = vmatprep.subr.mxu0 0.0
    %3062 = vmatpush1.msra.mxu0 0.0
    %3063 = vmatprep.subr.mxu0 0.0
    %3064 = vmatpush1.msra.mxu0 0.0
    %3065 = vmatprep.subr.mxu0 0.0
    %3066 = vmatpush1.msra.mxu0 0.0
    %3067 = vmatprep.subr.mxu0 0.0
    %3068 = vmatpush1.msra.mxu0 0.0
    %3069 = vmatprep.subr.mxu0 0.0
    %3070 = vmatpush1.msra.mxu0 0.0
    %3071 = vmatprep.subr.mxu0 0.0
    %3072 = vmatpush1.msra.mxu0 0.0
    %3073 = vmatprep.subr.mxu0 0.0
    %3074 = vmatpush1.msra.mxu0 0.0
    %3075 = vmatprep.subr.mxu0 0.0
    %3076 = vmatpush1.msra.mxu0 0.0
    %3077 = vmatprep.subr.mxu0 %v3004
    %3078 = vmatpush1.msra.mxu0 %v3002
    %3079 = vmatprep.subr.mxu0 0.0
    %3080 = vmatpush2.msra.mxu0 0.0
    %3081 = vmatprep.subr.mxu0 0.0
    %3082 = vmatpush2.msra.mxu0 0.0
    %3083 = vmatprep.subr.mxu0 0.0
    %3084 = vmatpush2.msra.mxu0 0.0
    %3085 = vmatprep.subr.mxu0 0.0
    %3086 = vmatpush2.msra.mxu0 0.0
    %3087 = vmatprep.subr.mxu0 0.0
    %3088 = vmatpush2.msra.mxu0 0.0
    %3089 = vmatprep.subr.mxu0 0.0
    %3090 = vmatpush2.msra.mxu0 0.0
    %3091 = vmatprep.subr.mxu0 0.0
    %3092 = vmatpush2.msra.mxu0 0.0
    %3093 = vmatprep.subr.mxu0 0.0
    %3094 = vmatpush2.msra.mxu0 0.0
    %3095 = vmatprep.subr.mxu0 0.0
    %3096 = vmatpush2.msra.mxu0 0.0
    %3097 = vmatprep.subr.mxu0 0.0
    %3098 = vmatpush2.msra.mxu0 0.0
    %3099 = vmatprep.subr.mxu0 0.0
    %3100 = vmatpush2.msra.mxu0 0.0
    %3101 = vmatprep.subr.mxu0 0.0
    %3102 = vmatpush2.msra.mxu0 0.0
    %3103 = vmatprep.subr.mxu0 0.0
    %3104 = vmatpush2.msra.mxu0 0.0
    %3105 = vmatprep.subr.mxu0 0.0
    %3106 = vmatpush2.msra.mxu0 0.0
    %3107 = vmatprep.subr.mxu0 0.0
    %3108 = vmatpush2.msra.mxu0 0.0
    %3109 = vmatprep.subr.mxu0 0.0
    %3110 = vmatpush2.msra.mxu0 0.0
    %3111 = vmatprep.mubr.f32.mxu0 0.0
    %3112 = vmatmul.mubr.f32.gmra.mxu0 %v3036
    %v3113 = vpop.f32.mrf.mxu0
    %v3114 = vadd.f32 %v3018, %v3113
    %v3115 = vpop.f32.mrf.mxu0
    %v3116 = vadd.f32 %v3018, %v3115
    %3117 = vmatprep.mubr.f32.mxu0 0.0
    %3118 = vmatmul.mubr.f32.gmra.mxu0 %v3039
    %v3119 = vpop.f32.mrf.mxu0
    %v3120 = vadd.f32 %v3023, %v3119
    %v3121 = vpop.f32.mrf.mxu0
    %v3122 = vadd.f32 %v3023, %v3121
    %3123 = vmatprep.mubr.f32.mxu0 0.0
    %3124 = vmatmul.mubr.f32.gmra.mxu0 %v3042
    %v3125 = vpop.f32.mrf.mxu0
    %v3126 = vadd.f32 %v3028, %v3125
    %v3127 = vpop.f32.mrf.mxu0
    %v3128 = vadd.f32 %v3028, %v3127
    %3129 = vmatprep.mubr.f32.mxu0 0.0
    %3130 = vmatmul.mubr.f32.gmra.mxu0 %v3045
    %v3131 = vpop.f32.mrf.mxu0
    %v3132 = vadd.f32 %v3033, %v3131
    %v3133 = vpop.f32.mrf.mxu0
    %v3134 = vadd.f32 %v3033, %v3133
    %3135 = vdwg.mxu0
    %3136 = vrot.lane.b32.xlu0 %v3114, 1
    %v3137 = vpop.permute.xlu0 %3136
    %3138 = vrot.lane.b32.xlu0 %v3120, 1
    %v3139 = vpop.permute.xlu0 %3138
    %3140 = vrot.lane.b32.xlu0 %v3126, 1
    %v3141 = vpop.permute.xlu0 %3140
    %3142 = vrot.lane.b32.xlu0 %v3132, 1
    %v3143 = vpop.permute.xlu0 %3142
    %3144 = vrot.lane.b32.xlu0 %v3116, 1
    %v3145 = vpop.permute.xlu0 %3144
    %3146 = vrot.lane.b32.xlu0 %v3122, 1
    %v3147 = vpop.permute.xlu0 %3146
    %3148 = vrot.lane.b32.xlu0 %v3128, 1
    %v3149 = vpop.permute.xlu0 %3148
    %3150 = vrot.lane.b32.xlu0 %v3134, 1
    %v3151 = vpop.permute.xlu0 %3150
    %v3152 = vsel %vm293, %v3137, %v3145
    %v3153 = vsel %vm293, %v3139, %v3147
    %v3154 = vsel %vm293, %v3141, %v3149
    %v3155 = vsel %vm293, %v3143, %v3151
    %v3156 = vsel %vm293, %v3145, %v3137
    %v3157 = vsel %vm293, %v3147, %v3139
    %v3158 = vsel %vm293, %v3149, %v3141
    %v3159 = vsel %vm293, %v3151, %v3143
    %v3160 = vsel %vm307, %v3156, 0.0
    %v3161 = vsel %vm307, %v3152, 0.0
    %v3162 = vsel %vm307, %v3157, 0.0
    %v3163 = vsel %vm307, %v3153, 0.0
    %v3164 = vsel %vm307, %v3158, 0.0
    %v3165 = vsel %vm307, %v3154, 0.0
    %v3166 = vsel %vm307, %v3159, 0.0
    %v3167 = vsel %vm307, %v3155, 0.0
    %3168 = vrot.lane.b32.xlu0 %v3114, 127
    %v3169 = vpop.permute.xlu0 %3168
    %3170 = vrot.lane.b32.xlu0 %v3120, 127
    %v3171 = vpop.permute.xlu0 %3170
    %3172 = vrot.lane.b32.xlu0 %v3126, 127
    %v3173 = vpop.permute.xlu0 %3172
    %3174 = vrot.lane.b32.xlu0 %v3132, 127
    %v3175 = vpop.permute.xlu0 %3174
    %3176 = vrot.lane.b32.xlu0 %v3116, 127
    %v3177 = vpop.permute.xlu0 %3176
    %3178 = vrot.lane.b32.xlu0 %v3122, 127
    %v3179 = vpop.permute.xlu0 %3178
    %3180 = vrot.lane.b32.xlu0 %v3128, 127
    %v3181 = vpop.permute.xlu0 %3180
    %3182 = vrot.lane.b32.xlu0 %v3134, 127
    %v3183 = vpop.permute.xlu0 %3182
    %v3184 = vsel %vm332, %v3169, %v3177
    %v3185 = vsel %vm332, %v3171, %v3179
    %v3186 = vsel %vm332, %v3173, %v3181
    %v3187 = vsel %vm332, %v3175, %v3183
    %v3188 = vsel %vm332, %v3177, %v3169
    %v3189 = vsel %vm332, %v3179, %v3171
    %v3190 = vsel %vm332, %v3181, %v3173
    %v3191 = vsel %vm332, %v3183, %v3175
    %v3192 = vsel %vm346, %v3184, 0.0
    %v3193 = vsel %vm346, %v3188, 0.0
    %v3194 = vsel %vm346, %v3185, 0.0
    %v3195 = vsel %vm346, %v3189, 0.0
    %v3196 = vsel %vm346, %v3186, 0.0
    %v3197 = vsel %vm346, %v3190, 0.0
    %v3198 = vsel %vm346, %v3187, 0.0
    %v3199 = vsel %vm346, %v3191, 0.0
    %3200 = vst [vmem:[#allocation2] sm:$0xff] %v3160
    %3201 = vst [vmem:[#allocation2 + $0x8] sm:$0xff] %v3161
    %3202 = vst [vmem:[#allocation2 + $0x10] sm:$0xff] %v3162
    %3203 = vst [vmem:[#allocation2 + $0x18] sm:$0xff] %v3163
    %3204 = vst [vmem:[#allocation2 + $0x20] sm:$0xff] %v3164
    %3205 = vst [vmem:[#allocation2 + $0x28] sm:$0xff] %v3165
    %3206 = vst [vmem:[#allocation2 + $0x30] sm:$0xff] %v3166
    %3207 = vst [vmem:[#allocation2 + $0x38] sm:$0xff] %v3167
    %3208 = vst [vmem:[#allocation2 + $0x40] sm:$0xff] %v3114
    %3209 = vst [vmem:[#allocation2 + $0x48] sm:$0xff] %v3116
    %3210 = vst [vmem:[#allocation2 + $0x50] sm:$0xff] %v3120
    %3211 = vst [vmem:[#allocation2 + $0x58] sm:$0xff] %v3122
    %3212 = vst [vmem:[#allocation2 + $0x60] sm:$0xff] %v3126
    %3213 = vst [vmem:[#allocation2 + $0x68] sm:$0xff] %v3128
    %3214 = vst [vmem:[#allocation2 + $0x70] sm:$0xff] %v3132
    %3215 = vst [vmem:[#allocation2 + $0x78] sm:$0xff] %v3134
    %3216 = vst [vmem:[#allocation2 + $0x80] sm:$0xff] %v3192
    %3217 = vst [vmem:[#allocation2 + $0x88] sm:$0xff] %v3193
    %3218 = vst [vmem:[#allocation2 + $0x90] sm:$0xff] %v3194
    %3219 = vst [vmem:[#allocation2 + $0x98] sm:$0xff] %v3195
    %3220 = vst [vmem:[#allocation2 + $0xa0] sm:$0xff] %v3196
    %3221 = vst [vmem:[#allocation2 + $0xa8] sm:$0xff] %v3197
    %3222 = vst [vmem:[#allocation2 + $0xb0] sm:$0xff] %v3198
    %3223 = vst [vmem:[#allocation2 + $0xb8] sm:$0xff] %v3199
    %s3224 = scalar_lea.vmem %s11, 64
    %v3225 = vld [vmem:[%s3224] sm:$0xff]
    %v3226 = vld [vmem:[%s3224 + $0x8] sm:$0xff]
    %v3227 = vld [vmem:[%s3224 + $0x10] sm:$0xff]
    %v3228 = vld [vmem:[%s3224 + $0x18] sm:$0xff]
    %v3229 = vld [vmem:[#allocation2] sm:$0xff]
    %v3230 = vld [vmem:[#allocation2 + $0x8] sm:$0xff]
    %v3231 = vld [vmem:[#allocation2 + $0x10] sm:$0xff]
    %v3232 = vld [vmem:[#allocation2 + $0x18] sm:$0xff]
    %v3233 = vld [vmem:[#allocation2 + $0x20] sm:$0xff]
    %v3234 = vld [vmem:[#allocation2 + $0x28] sm:$0xff]
    %v3235 = vld [vmem:[#allocation2 + $0x30] sm:$0xff]
    %v3236 = vld [vmem:[#allocation2 + $0x38] sm:$0xff]
    %v3237 = vld [vmem:[#allocation2 + $0x40] sm:$0xff]
    %v3238 = vld [vmem:[#allocation2 + $0x48] sm:$0xff]
    %v3239 = vld [vmem:[#allocation2 + $0x50] sm:$0xff]
    %v3240 = vld [vmem:[#allocation2 + $0x58] sm:$0xff]
    %v3241 = vld [vmem:[#allocation2 + $0x60] sm:$0xff]
    %v3242 = vld [vmem:[#allocation2 + $0x68] sm:$0xff]
    %v3243 = vld [vmem:[#allocation2 + $0x70] sm:$0xff]
    %v3244 = vld [vmem:[#allocation2 + $0x78] sm:$0xff]
    %v3245 = vld [vmem:[#allocation2 + $0x80] sm:$0xff]
    %v3246 = vld [vmem:[#allocation2 + $0x88] sm:$0xff]
    %v3247 = vld [vmem:[#allocation2 + $0x90] sm:$0xff]
    %v3248 = vld [vmem:[#allocation2 + $0x98] sm:$0xff]
    %v3249 = vld [vmem:[#allocation2 + $0xa0] sm:$0xff]
    %v3250 = vld [vmem:[#allocation2 + $0xa8] sm:$0xff]
    %v3251 = vld [vmem:[#allocation2 + $0xb0] sm:$0xff]
    %v3252 = vld [vmem:[#allocation2 + $0xb8] sm:$0xff]
    %s3253 = scalar_lea.vmem %s12, 64
    %v3254 = vld [vmem:[%s3253] sm:$0xff]
    %v3255 = vld [vmem:[%s3253 + $0x8] sm:$0xff]
    %v3256 = vld [vmem:[%s3253 + $0x10] sm:$0xff]
    %v3257 = vld [vmem:[%s3253 + $0x18] sm:$0xff]
    %3259 = vset.pattern.permute.xlu0 0
    %3260 = vperm.xlu0 %3259, %v3254
    %v3261 = vpop.permute.xlu0 %3260
    %3264 = vset.pattern.permute.xlu0 0
    %3265 = vperm.xlu0 %3264, %v3255
    %v3266 = vpop.permute.xlu0 %3265
    %3269 = vset.pattern.permute.xlu0 0
    %3270 = vperm.xlu0 %3269, %v3256
    %v3271 = vpop.permute.xlu0 %3270
    %3274 = vset.pattern.permute.xlu0 0
    %3275 = vperm.xlu0 %3274, %v3257
    %v3276 = vpop.permute.xlu0 %3275
    %v3279 = vsel %vm2247, %v3225, 0
    %v3282 = vsel %vm2247, %v3226, 0
    %v3285 = vsel %vm2247, %v3227, 0
    %v3288 = vsel %vm2247, %v3228, 0
    %3290 = vmatprep.subr.mxu0 0.0
    %3291 = vmatpush1.msra.mxu0 0.0
    %3292 = vmatprep.subr.mxu0 0.0
    %3293 = vmatpush1.msra.mxu0 0.0
    %3294 = vmatprep.subr.mxu0 0.0
    %3295 = vmatpush1.msra.mxu0 0.0
    %3296 = vmatprep.subr.mxu0 0.0
    %3297 = vmatpush1.msra.mxu0 0.0
    %3298 = vmatprep.subr.mxu0 %v3252
    %3299 = vmatpush1.msra.mxu0 %v3251
    %3300 = vmatprep.subr.mxu0 %v3250
    %3301 = vmatpush1.msra.mxu0 %v3249
    %3302 = vmatprep.subr.mxu0 %v3248
    %3303 = vmatpush1.msra.mxu0 %v3247
    %3304 = vmatprep.subr.mxu0 %v3246
    %3305 = vmatpush1.msra.mxu0 %v3245
    %3306 = vmatprep.subr.mxu0 %v3244
    %3307 = vmatpush1.msra.mxu0 %v3243
    %3308 = vmatprep.subr.mxu0 %v3242
    %3309 = vmatpush1.msra.mxu0 %v3241
    %3310 = vmatprep.subr.mxu0 %v3240
    %3311 = vmatpush1.msra.mxu0 %v3239
    %3312 = vmatprep.subr.mxu0 %v3238
    %3313 = vmatpush1.msra.mxu0 %v3237
    %3314 = vmatprep.subr.mxu0 %v3236
    %3315 = vmatpush1.msra.mxu0 %v3235
    %3316 = vmatprep.subr.mxu0 %v3234
    %3317 = vmatpush1.msra.mxu0 %v3233
    %3318 = vmatprep.subr.mxu0 %v3232
    %3319 = vmatpush1.msra.mxu0 %v3231
    %3320 = vmatprep.subr.mxu0 %v3230
    %3321 = vmatpush1.msra.mxu0 %v3229
    %3322 = vmatprep.subr.mxu0 0.0
    %3323 = vmatpush2.msra.mxu0 0.0
    %3324 = vmatprep.subr.mxu0 0.0
    %3325 = vmatpush2.msra.mxu0 0.0
    %3326 = vmatprep.subr.mxu0 0.0
    %3327 = vmatpush2.msra.mxu0 0.0
    %3328 = vmatprep.subr.mxu0 0.0
    %3329 = vmatpush2.msra.mxu0 0.0
    %3330 = vmatprep.subr.mxu0 0.0
    %3331 = vmatpush2.msra.mxu0 0.0
    %3332 = vmatprep.subr.mxu0 0.0
    %3333 = vmatpush2.msra.mxu0 0.0
    %3334 = vmatprep.subr.mxu0 0.0
    %3335 = vmatpush2.msra.mxu0 0.0
    %3336 = vmatprep.subr.mxu0 0.0
    %3337 = vmatpush2.msra.mxu0 0.0
    %3338 = vmatprep.subr.mxu0 0.0
    %3339 = vmatpush2.msra.mxu0 0.0
    %3340 = vmatprep.subr.mxu0 0.0
    %3341 = vmatpush2.msra.mxu0 0.0
    %3342 = vmatprep.subr.mxu0 0.0
    %3343 = vmatpush2.msra.mxu0 0.0
    %3344 = vmatprep.subr.mxu0 0.0
    %3345 = vmatpush2.msra.mxu0 0.0
    %3346 = vmatprep.subr.mxu0 0.0
    %3347 = vmatpush2.msra.mxu0 0.0
    %3348 = vmatprep.subr.mxu0 0.0
    %3349 = vmatpush2.msra.mxu0 0.0
    %3350 = vmatprep.subr.mxu0 0.0
    %3351 = vmatpush2.msra.mxu0 0.0
    %3352 = vmatprep.subr.mxu0 0.0
    %3353 = vmatpush2.msra.mxu0 0.0
    %3354 = vmatprep.mubr.f32.mxu0 0.0
    %3355 = vmatmul.mubr.f32.gmra.mxu0 %v3279
    %v3356 = vpop.f32.mrf.mxu0
    %v3357 = vadd.f32 %v3261, %v3356
    %v3358 = vpop.f32.mrf.mxu0
    %v3359 = vadd.f32 %v3261, %v3358
    %3360 = vmatprep.mubr.f32.mxu0 0.0
    %3361 = vmatmul.mubr.f32.gmra.mxu0 %v3282
    %v3362 = vpop.f32.mrf.mxu0
    %v3363 = vadd.f32 %v3266, %v3362
    %v3364 = vpop.f32.mrf.mxu0
    %v3365 = vadd.f32 %v3266, %v3364
    %3366 = vmatprep.mubr.f32.mxu0 0.0
    %3367 = vmatmul.mubr.f32.gmra.mxu0 %v3285
    %v3368 = vpop.f32.mrf.mxu0
    %v3369 = vadd.f32 %v3271, %v3368
    %v3370 = vpop.f32.mrf.mxu0
    %v3371 = vadd.f32 %v3271, %v3370
    %3372 = vmatprep.mubr.f32.mxu0 0.0
    %3373 = vmatmul.mubr.f32.gmra.mxu0 %v3288
    %v3374 = vpop.f32.mrf.mxu0
    %v3375 = vadd.f32 %v3276, %v3374
    %v3376 = vpop.f32.mrf.mxu0
    %v3377 = vadd.f32 %v3276, %v3376
    %3378 = vdwg.mxu0
    %v3379 = vmax.f32 %v3357, 0.0
    %v3380 = vmax.f32 %v3359, 0.0
    %v3381 = vmax.f32 %v3363, 0.0
    %v3382 = vmax.f32 %v3365, 0.0
    %v3383 = vmax.f32 %v3369, 0.0
    %v3384 = vmax.f32 %v3371, 0.0
    %v3385 = vmax.f32 %v3375, 0.0
    %v3386 = vmax.f32 %v3377, 0.0
    %s3387 = scalar_lea.vmem %s13, 64
    %v3388 = vld [vmem:[%s3387] sm:$0xff]
    %v3389 = vld [vmem:[%s3387 + $0x8] sm:$0xff]
    %v3390 = vld [vmem:[%s3387 + $0x10] sm:$0xff]
    %v3391 = vld [vmem:[%s3387 + $0x18] sm:$0xff]
    %s3392 = scalar_lea.vmem %s14, 64
    %v3393 = vld [vmem:[%s3392] sm:$0xff]
    %v3394 = vld [vmem:[%s3392 + $0x8] sm:$0xff]
    %v3395 = vld [vmem:[%s3392 + $0x10] sm:$0xff]
    %v3396 = vld [vmem:[%s3392 + $0x18] sm:$0xff]
    %3398 = vset.pattern.permute.xlu0 0
    %3399 = vperm.xlu0 %3398, %v3393
    %v3400 = vpop.permute.xlu0 %3399
    %3403 = vset.pattern.permute.xlu0 0
    %3404 = vperm.xlu0 %3403, %v3394
    %v3405 = vpop.permute.xlu0 %3404
    %3408 = vset.pattern.permute.xlu0 0
    %3409 = vperm.xlu0 %3408, %v3395
    %v3410 = vpop.permute.xlu0 %3409
    %3413 = vset.pattern.permute.xlu0 0
    %3414 = vperm.xlu0 %3413, %v3396
    %v3415 = vpop.permute.xlu0 %3414
    %v3418 = vsel %vm499, %v3388, 0
    %v3421 = vsel %vm499, %v3389, 0
    %v3424 = vsel %vm499, %v3390, 0
    %v3427 = vsel %vm499, %v3391, 0
    %3429 = vmatprep.subr.mxu0 0.0
    %3430 = vmatpush1.msra.mxu0 0.0
    %3431 = vmatprep.subr.mxu0 0.0
    %3432 = vmatpush1.msra.mxu0 0.0
    %3433 = vmatprep.subr.mxu0 0.0
    %3434 = vmatpush1.msra.mxu0 0.0
    %3435 = vmatprep.subr.mxu0 0.0
    %3436 = vmatpush1.msra.mxu0 0.0
    %3437 = vmatprep.subr.mxu0 0.0
    %3438 = vmatpush1.msra.mxu0 0.0
    %3439 = vmatprep.subr.mxu0 0.0
    %3440 = vmatpush1.msra.mxu0 0.0
    %3441 = vmatprep.subr.mxu0 0.0
    %3442 = vmatpush1.msra.mxu0 0.0
    %3443 = vmatprep.subr.mxu0 0.0
    %3444 = vmatpush1.msra.mxu0 0.0
    %3445 = vmatprep.subr.mxu0 0.0
    %3446 = vmatpush1.msra.mxu0 0.0
    %3447 = vmatprep.subr.mxu0 0.0
    %3448 = vmatpush1.msra.mxu0 0.0
    %3449 = vmatprep.subr.mxu0 0.0
    %3450 = vmatpush1.msra.mxu0 0.0
    %3451 = vmatprep.subr.mxu0 0.0
    %3452 = vmatpush1.msra.mxu0 0.0
    %3453 = vmatprep.subr.mxu0 %v3386
    %3454 = vmatpush1.msra.mxu0 %v3385
    %3455 = vmatprep.subr.mxu0 %v3384
    %3456 = vmatpush1.msra.mxu0 %v3383
    %3457 = vmatprep.subr.mxu0 %v3382
    %3458 = vmatpush1.msra.mxu0 %v3381
    %3459 = vmatprep.subr.mxu0 %v3380
    %3460 = vmatpush1.msra.mxu0 %v3379
    %3461 = vmatprep.subr.mxu0 0.0
    %3462 = vmatpush2.msra.mxu0 0.0
    %3463 = vmatprep.subr.mxu0 0.0
    %3464 = vmatpush2.msra.mxu0 0.0
    %3465 = vmatprep.subr.mxu0 0.0
    %3466 = vmatpush2.msra.mxu0 0.0
    %3467 = vmatprep.subr.mxu0 0.0
    %3468 = vmatpush2.msra.mxu0 0.0
    %3469 = vmatprep.subr.mxu0 0.0
    %3470 = vmatpush2.msra.mxu0 0.0
    %3471 = vmatprep.subr.mxu0 0.0
    %3472 = vmatpush2.msra.mxu0 0.0
    %3473 = vmatprep.subr.mxu0 0.0
    %3474 = vmatpush2.msra.mxu0 0.0
    %3475 = vmatprep.subr.mxu0 0.0
    %3476 = vmatpush2.msra.mxu0 0.0
    %3477 = vmatprep.subr.mxu0 0.0
    %3478 = vmatpush2.msra.mxu0 0.0
    %3479 = vmatprep.subr.mxu0 0.0
    %3480 = vmatpush2.msra.mxu0 0.0
    %3481 = vmatprep.subr.mxu0 0.0
    %3482 = vmatpush2.msra.mxu0 0.0
    %3483 = vmatprep.subr.mxu0 0.0
    %3484 = vmatpush2.msra.mxu0 0.0
    %3485 = vmatprep.subr.mxu0 0.0
    %3486 = vmatpush2.msra.mxu0 0.0
    %3487 = vmatprep.subr.mxu0 0.0
    %3488 = vmatpush2.msra.mxu0 0.0
    %3489 = vmatprep.subr.mxu0 0.0
    %3490 = vmatpush2.msra.mxu0 0.0
    %3491 = vmatprep.subr.mxu0 0.0
    %3492 = vmatpush2.msra.mxu0 0.0
    %3493 = vmatprep.mubr.f32.mxu0 0.0
    %3494 = vmatmul.mubr.f32.gmra.mxu0 %v3418
    %v3495 = vpop.f32.mrf.mxu0
    %v3496 = vadd.f32 %v3400, %v3495
    %v3497 = vpop.f32.mrf.mxu0
    %v3498 = vadd.f32 %v3400, %v3497
    %3499 = vmatprep.mubr.f32.mxu0 0.0
    %3500 = vmatmul.mubr.f32.gmra.mxu0 %v3421
    %v3501 = vpop.f32.mrf.mxu0
    %v3502 = vadd.f32 %v3405, %v3501
    %v3503 = vpop.f32.mrf.mxu0
    %v3504 = vadd.f32 %v3405, %v3503
    %3505 = vmatprep.mubr.f32.mxu0 0.0
    %3506 = vmatmul.mubr.f32.gmra.mxu0 %v3424
    %v3507 = vpop.f32.mrf.mxu0
    %v3508 = vadd.f32 %v3410, %v3507
    %v3509 = vpop.f32.mrf.mxu0
    %v3510 = vadd.f32 %v3410, %v3509
    %3511 = vmatprep.mubr.f32.mxu0 0.0
    %3512 = vmatmul.mubr.f32.gmra.mxu0 %v3427
    %v3513 = vpop.f32.mrf.mxu0
    %v3514 = vadd.f32 %v3415, %v3513
    %v3515 = vpop.f32.mrf.mxu0
    %v3516 = vadd.f32 %v3415, %v3515
    %3517 = vdwg.mxu0
    %v3518 = vadd.f32 %v3114, %v3496
    %v3519 = vadd.f32 %v3116, %v3498
    %v3520 = vadd.f32 %v3120, %v3502
    %v3521 = vadd.f32 %v3122, %v3504
    %v3522 = vadd.f32 %v3126, %v3508
    %v3523 = vadd.f32 %v3128, %v3510
    %v3524 = vadd.f32 %v3132, %v3514
    %v3525 = vadd.f32 %v3134, %v3516
    %3526 = vrot.lane.b32.xlu0 %v3518, 2
    %v3527 = vpop.permute.xlu0 %3526
    %3528 = vrot.lane.b32.xlu0 %v3520, 2
    %v3529 = vpop.permute.xlu0 %3528
    %3530 = vrot.lane.b32.xlu0 %v3522, 2
    %v3531 = vpop.permute.xlu0 %3530
    %3532 = vrot.lane.b32.xlu0 %v3524, 2
    %v3533 = vpop.permute.xlu0 %3532
    %3534 = vrot.lane.b32.xlu0 %v3519, 2
    %v3535 = vpop.permute.xlu0 %3534
    %3536 = vrot.lane.b32.xlu0 %v3521, 2
    %v3537 = vpop.permute.xlu0 %3536
    %3538 = vrot.lane.b32.xlu0 %v3523, 2
    %v3539 = vpop.permute.xlu0 %3538
    %3540 = vrot.lane.b32.xlu0 %v3525, 2
    %v3541 = vpop.permute.xlu0 %3540
    %v3542 = vsel %vm801, %v3527, %v3535
    %v3543 = vsel %vm801, %v3529, %v3537
    %v3544 = vsel %vm801, %v3531, %v3539
    %v3545 = vsel %vm801, %v3533, %v3541
    %v3546 = vsel %vm801, %v3535, %v3527
    %v3547 = vsel %vm801, %v3537, %v3529
    %v3548 = vsel %vm801, %v3539, %v3531
    %v3549 = vsel %vm801, %v3541, %v3533
    %v3550 = vsel %vm815, %v3546, 0.0
    %v3551 = vsel %vm815, %v3542, 0.0
    %v3552 = vsel %vm815, %v3547, 0.0
    %v3553 = vsel %vm815, %v3543, 0.0
    %v3554 = vsel %vm815, %v3548, 0.0
    %v3555 = vsel %vm815, %v3544, 0.0
    %v3556 = vsel %vm815, %v3549, 0.0
    %v3557 = vsel %vm815, %v3545, 0.0
    %3558 = vrot.lane.b32.xlu0 %v3518, 126
    %v3559 = vpop.permute.xlu0 %3558
    %3560 = vrot.lane.b32.xlu0 %v3520, 126
    %v3561 = vpop.permute.xlu0 %3560
    %3562 = vrot.lane.b32.xlu0 %v3522, 126
    %v3563 = vpop.permute.xlu0 %3562
    %3564 = vrot.lane.b32.xlu0 %v3524, 126
    %v3565 = vpop.permute.xlu0 %3564
    %3566 = vrot.lane.b32.xlu0 %v3519, 126
    %v3567 = vpop.permute.xlu0 %3566
    %3568 = vrot.lane.b32.xlu0 %v3521, 126
    %v3569 = vpop.permute.xlu0 %3568
    %3570 = vrot.lane.b32.xlu0 %v3523, 126
    %v3571 = vpop.permute.xlu0 %3570
    %3572 = vrot.lane.b32.xlu0 %v3525, 126
    %v3573 = vpop.permute.xlu0 %3572
    %v3574 = vsel %vm840, %v3559, %v3567
    %v3575 = vsel %vm840, %v3561, %v3569
    %v3576 = vsel %vm840, %v3563, %v3571
    %v3577 = vsel %vm840, %v3565, %v3573
    %v3578 = vsel %vm840, %v3567, %v3559
    %v3579 = vsel %vm840, %v3569, %v3561
    %v3580 = vsel %vm840, %v3571, %v3563
    %v3581 = vsel %vm840, %v3573, %v3565
    %v3582 = vsel %vm854, %v3574, 0.0
    %v3583 = vsel %vm854, %v3578, 0.0
    %v3584 = vsel %vm854, %v3575, 0.0
    %v3585 = vsel %vm854, %v3579, 0.0
    %v3586 = vsel %vm854, %v3576, 0.0
    %v3587 = vsel %vm854, %v3580, 0.0
    %v3588 = vsel %vm854, %v3577, 0.0
    %v3589 = vsel %vm854, %v3581, 0.0
    %3590 = vst [vmem:[#allocation2] sm:$0xff] %v3550
    %3591 = vst [vmem:[#allocation2 + $0x8] sm:$0xff] %v3551
    %3592 = vst [vmem:[#allocation2 + $0x10] sm:$0xff] %v3552
    %3593 = vst [vmem:[#allocation2 + $0x18] sm:$0xff] %v3553
    %3594 = vst [vmem:[#allocation2 + $0x20] sm:$0xff] %v3554
    %3595 = vst [vmem:[#allocation2 + $0x28] sm:$0xff] %v3555
    %3596 = vst [vmem:[#allocation2 + $0x30] sm:$0xff] %v3556
    %3597 = vst [vmem:[#allocation2 + $0x38] sm:$0xff] %v3557
    %3598 = vst [vmem:[#allocation2 + $0x40] sm:$0xff] %v3518
    %3599 = vst [vmem:[#allocation2 + $0x48] sm:$0xff] %v3519
    %3600 = vst [vmem:[#allocation2 + $0x50] sm:$0xff] %v3520
    %3601 = vst [vmem:[#allocation2 + $0x58] sm:$0xff] %v3521
    %3602 = vst [vmem:[#allocation2 + $0x60] sm:$0xff] %v3522
    %3603 = vst [vmem:[#allocation2 + $0x68] sm:$0xff] %v3523
    %3604 = vst [vmem:[#allocation2 + $0x70] sm:$0xff] %v3524
    %3605 = vst [vmem:[#allocation2 + $0x78] sm:$0xff] %v3525
    %3606 = vst [vmem:[#allocation2 + $0x80] sm:$0xff] %v3582
    %3607 = vst [vmem:[#allocation2 + $0x88] sm:$0xff] %v3583
    %3608 = vst [vmem:[#allocation2 + $0x90] sm:$0xff] %v3584
    %3609 = vst [vmem:[#allocation2 + $0x98] sm:$0xff] %v3585
    %3610 = vst [vmem:[#allocation2 + $0xa0] sm:$0xff] %v3586
    %3611 = vst [vmem:[#allocation2 + $0xa8] sm:$0xff] %v3587
    %3612 = vst [vmem:[#allocation2 + $0xb0] sm:$0xff] %v3588
    %3613 = vst [vmem:[#allocation2 + $0xb8] sm:$0xff] %v3589
    %s3614 = scalar_lea.vmem %s11, 96
    %v3615 = vld [vmem:[%s3614] sm:$0xff]
    %v3616 = vld [vmem:[%s3614 + $0x8] sm:$0xff]
    %v3617 = vld [vmem:[%s3614 + $0x10] sm:$0xff]
    %v3618 = vld [vmem:[%s3614 + $0x18] sm:$0xff]
    %v3619 = vld [vmem:[#allocation2] sm:$0xff]
    %v3620 = vld [vmem:[#allocation2 + $0x8] sm:$0xff]
    %v3621 = vld [vmem:[#allocation2 + $0x10] sm:$0xff]
    %v3622 = vld [vmem:[#allocation2 + $0x18] sm:$0xff]
    %v3623 = vld [vmem:[#allocation2 + $0x20] sm:$0xff]
    %v3624 = vld [vmem:[#allocation2 + $0x28] sm:$0xff]
    %v3625 = vld [vmem:[#allocation2 + $0x30] sm:$0xff]
    %v3626 = vld [vmem:[#allocation2 + $0x38] sm:$0xff]
    %v3627 = vld [vmem:[#allocation2 + $0x40] sm:$0xff]
    %v3628 = vld [vmem:[#allocation2 + $0x48] sm:$0xff]
    %v3629 = vld [vmem:[#allocation2 + $0x50] sm:$0xff]
    %v3630 = vld [vmem:[#allocation2 + $0x58] sm:$0xff]
    %v3631 = vld [vmem:[#allocation2 + $0x60] sm:$0xff]
    %v3632 = vld [vmem:[#allocation2 + $0x68] sm:$0xff]
    %v3633 = vld [vmem:[#allocation2 + $0x70] sm:$0xff]
    %v3634 = vld [vmem:[#allocation2 + $0x78] sm:$0xff]
    %v3635 = vld [vmem:[#allocation2 + $0x80] sm:$0xff]
    %v3636 = vld [vmem:[#allocation2 + $0x88] sm:$0xff]
    %v3637 = vld [vmem:[#allocation2 + $0x90] sm:$0xff]
    %v3638 = vld [vmem:[#allocation2 + $0x98] sm:$0xff]
    %v3639 = vld [vmem:[#allocation2 + $0xa0] sm:$0xff]
    %v3640 = vld [vmem:[#allocation2 + $0xa8] sm:$0xff]
    %v3641 = vld [vmem:[#allocation2 + $0xb0] sm:$0xff]
    %v3642 = vld [vmem:[#allocation2 + $0xb8] sm:$0xff]
    %s3643 = scalar_lea.vmem %s12, 96
    %v3644 = vld [vmem:[%s3643] sm:$0xff]
    %v3645 = vld [vmem:[%s3643 + $0x8] sm:$0xff]
    %v3646 = vld [vmem:[%s3643 + $0x10] sm:$0xff]
    %v3647 = vld [vmem:[%s3643 + $0x18] sm:$0xff]
    %3649 = vset.pattern.permute.xlu0 0
    %3650 = vperm.xlu0 %3649, %v3644
    %v3651 = vpop.permute.xlu0 %3650
    %3654 = vset.pattern.permute.xlu0 0
    %3655 = vperm.xlu0 %3654, %v3645
    %v3656 = vpop.permute.xlu0 %3655
    %3659 = vset.pattern.permute.xlu0 0
    %3660 = vperm.xlu0 %3659, %v3646
    %v3661 = vpop.permute.xlu0 %3660
    %3664 = vset.pattern.permute.xlu0 0
    %3665 = vperm.xlu0 %3664, %v3647
    %v3666 = vpop.permute.xlu0 %3665
    %v3669 = vsel %vm2247, %v3615, 0
    %v3672 = vsel %vm2247, %v3616, 0
    %v3675 = vsel %vm2247, %v3617, 0
    %v3678 = vsel %vm2247, %v3618, 0
    %3680 = vmatprep.subr.mxu0 0.0
    %3681 = vmatpush1.msra.mxu0 0.0
    %3682 = vmatprep.subr.mxu0 0.0
    %3683 = vmatpush1.msra.mxu0 0.0
    %3684 = vmatprep.subr.mxu0 0.0
    %3685 = vmatpush1.msra.mxu0 0.0
    %3686 = vmatprep.subr.mxu0 0.0
    %3687 = vmatpush1.msra.mxu0 0.0
    %3688 = vmatprep.subr.mxu0 %v3642
    %3689 = vmatpush1.msra.mxu0 %v3641
    %3690 = vmatprep.subr.mxu0 %v3640
    %3691 = vmatpush1.msra.mxu0 %v3639
    %3692 = vmatprep.subr.mxu0 %v3638
    %3693 = vmatpush1.msra.mxu0 %v3637
    %3694 = vmatprep.subr.mxu0 %v3636
    %3695 = vmatpush1.msra.mxu0 %v3635
    %3696 = vmatprep.subr.mxu0 %v3634
    %3697 = vmatpush1.msra.mxu0 %v3633
    %3698 = vmatprep.subr.mxu0 %v3632
    %3699 = vmatpush1.msra.mxu0 %v3631
    %3700 = vmatprep.subr.mxu0 %v3630
    %3701 = vmatpush1.msra.mxu0 %v3629
    %3702 = vmatprep.subr.mxu0 %v3628
    %3703 = vmatpush1.msra.mxu0 %v3627
    %3704 = vmatprep.subr.mxu0 %v3626
    %3705 = vmatpush1.msra.mxu0 %v3625
    %3706 = vmatprep.subr.mxu0 %v3624
    %3707 = vmatpush1.msra.mxu0 %v3623
    %3708 = vmatprep.subr.mxu0 %v3622
    %3709 = vmatpush1.msra.mxu0 %v3621
    %3710 = vmatprep.subr.mxu0 %v3620
    %3711 = vmatpush1.msra.mxu0 %v3619
    %3712 = vmatprep.subr.mxu0 0.0
    %3713 = vmatpush2.msra.mxu0 0.0
    %3714 = vmatprep.subr.mxu0 0.0
    %3715 = vmatpush2.msra.mxu0 0.0
    %3716 = vmatprep.subr.mxu0 0.0
    %3717 = vmatpush2.msra.mxu0 0.0
    %3718 = vmatprep.subr.mxu0 0.0
    %3719 = vmatpush2.msra.mxu0 0.0
    %3720 = vmatprep.subr.mxu0 0.0
    %3721 = vmatpush2.msra.mxu0 0.0
    %3722 = vmatprep.subr.mxu0 0.0
    %3723 = vmatpush2.msra.mxu0 0.0
    %3724 = vmatprep.subr.mxu0 0.0
    %3725 = vmatpush2.msra.mxu0 0.0
    %3726 = vmatprep.subr.mxu0 0.0
    %3727 = vmatpush2.msra.mxu0 0.0
    %3728 = vmatprep.subr.mxu0 0.0
    %3729 = vmatpush2.msra.mxu0 0.0
    %3730 = vmatprep.subr.mxu0 0.0
    %3731 = vmatpush2.msra.mxu0 0.0
    %3732 = vmatprep.subr.mxu0 0.0
    %3733 = vmatpush2.msra.mxu0 0.0
    %3734 = vmatprep.subr.mxu0 0.0
    %3735 = vmatpush2.msra.mxu0 0.0
    %3736 = vmatprep.subr.mxu0 0.0
    %3737 = vmatpush2.msra.mxu0 0.0
    %3738 = vmatprep.subr.mxu0 0.0
    %3739 = vmatpush2.msra.mxu0 0.0
    %3740 = vmatprep.subr.mxu0 0.0
    %3741 = vmatpush2.msra.mxu0 0.0
    %3742 = vmatprep.subr.mxu0 0.0
    %3743 = vmatpush2.msra.mxu0 0.0
    %3744 = vmatprep.mubr.f32.mxu0 0.0
    %3745 = vmatmul.mubr.f32.gmra.mxu0 %v3669
    %v3746 = vpop.f32.mrf.mxu0
    %v3747 = vadd.f32 %v3651, %v3746
    %v3748 = vpop.f32.mrf.mxu0
    %v3749 = vadd.f32 %v3651, %v3748
    %3750 = vmatprep.mubr.f32.mxu0 0.0
    %3751 = vmatmul.mubr.f32.gmra.mxu0 %v3672
    %v3752 = vpop.f32.mrf.mxu0
    %v3753 = vadd.f32 %v3656, %v3752
    %v3754 = vpop.f32.mrf.mxu0
    %v3755 = vadd.f32 %v3656, %v3754
    %3756 = vmatprep.mubr.f32.mxu0 0.0
    %3757 = vmatmul.mubr.f32.gmra.mxu0 %v3675
    %v3758 = vpop.f32.mrf.mxu0
    %v3759 = vadd.f32 %v3661, %v3758
    %v3760 = vpop.f32.mrf.mxu0
    %v3761 = vadd.f32 %v3661, %v3760
    %3762 = vmatprep.mubr.f32.mxu0 0.0
    %3763 = vmatmul.mubr.f32.gmra.mxu0 %v3678
    %v3764 = vpop.f32.mrf.mxu0
    %v3765 = vadd.f32 %v3666, %v3764
    %v3766 = vpop.f32.mrf.mxu0
    %v3767 = vadd.f32 %v3666, %v3766
    %3768 = vdwg.mxu0
    %v3769 = vmax.f32 %v3747, 0.0
    %v3770 = vmax.f32 %v3749, 0.0
    %v3771 = vmax.f32 %v3753, 0.0
    %v3772 = vmax.f32 %v3755, 0.0
    %v3773 = vmax.f32 %v3759, 0.0
    %v3774 = vmax.f32 %v3761, 0.0
    %v3775 = vmax.f32 %v3765, 0.0
    %v3776 = vmax.f32 %v3767, 0.0
    %s3777 = scalar_lea.vmem %s13, 96
    %v3778 = vld [vmem:[%s3777] sm:$0xff]
    %v3779 = vld [vmem:[%s3777 + $0x8] sm:$0xff]
    %v3780 = vld [vmem:[%s3777 + $0x10] sm:$0xff]
    %v3781 = vld [vmem:[%s3777 + $0x18] sm:$0xff]
    %s3782 = scalar_lea.vmem %s14, 96
    %v3783 = vld [vmem:[%s3782] sm:$0xff]
    %v3784 = vld [vmem:[%s3782 + $0x8] sm:$0xff]
    %v3785 = vld [vmem:[%s3782 + $0x10] sm:$0xff]
    %v3786 = vld [vmem:[%s3782 + $0x18] sm:$0xff]
    %3788 = vset.pattern.permute.xlu0 0
    %3789 = vperm.xlu0 %3788, %v3783
    %v3790 = vpop.permute.xlu0 %3789
    %3793 = vset.pattern.permute.xlu0 0
    %3794 = vperm.xlu0 %3793, %v3784
    %v3795 = vpop.permute.xlu0 %3794
    %3798 = vset.pattern.permute.xlu0 0
    %3799 = vperm.xlu0 %3798, %v3785
    %v3800 = vpop.permute.xlu0 %3799
    %3803 = vset.pattern.permute.xlu0 0
    %3804 = vperm.xlu0 %3803, %v3786
    %v3805 = vpop.permute.xlu0 %3804
    %v3808 = vsel %vm499, %v3778, 0
    %v3811 = vsel %vm499, %v3779, 0
    %v3814 = vsel %vm499, %v3780, 0
    %v3817 = vsel %vm499, %v3781, 0
    %3819 = vmatprep.subr.mxu0 0.0
    %3820 = vmatpush1.msra.mxu0 0.0
    %3821 = vmatprep.subr.mxu0 0.0
    %3822 = vmatpush1.msra.mxu0 0.0
    %3823 = vmatprep.subr.mxu0 0.0
    %3824 = vmatpush1.msra.mxu0 0.0
    %3825 = vmatprep.subr.mxu0 0.0
    %3826 = vmatpush1.msra.mxu0 0.0
    %3827 = vmatprep.subr.mxu0 0.0
    %3828 = vmatpush1.msra.mxu0 0.0
    %3829 = vmatprep.subr.mxu0 0.0
    %3830 = vmatpush1.msra.mxu0 0.0
    %3831 = vmatprep.subr.mxu0 0.0
    %3832 = vmatpush1.msra.mxu0 0.0
    %3833 = vmatprep.subr.mxu0 0.0
    %3834 = vmatpush1.msra.mxu0 0.0
    %3835 = vmatprep.subr.mxu0 0.0
    %3836 = vmatpush1.msra.mxu0 0.0
    %3837 = vmatprep.subr.mxu0 0.0
    %3838 = vmatpush1.msra.mxu0 0.0
    %3839 = vmatprep.subr.mxu0 0.0
    %3840 = vmatpush1.msra.mxu0 0.0
    %3841 = vmatprep.subr.mxu0 0.0
    %3842 = vmatpush1.msra.mxu0 0.0
    %3843 = vmatprep.subr.mxu0 %v3776
    %3844 = vmatpush1.msra.mxu0 %v3775
    %3845 = vmatprep.subr.mxu0 %v3774
    %3846 = vmatpush1.msra.mxu0 %v3773
    %3847 = vmatprep.subr.mxu0 %v3772
    %3848 = vmatpush1.msra.mxu0 %v3771
    %3849 = vmatprep.subr.mxu0 %v3770
    %3850 = vmatpush1.msra.mxu0 %v3769
    %3851 = vmatprep.subr.mxu0 0.0
    %3852 = vmatpush2.msra.mxu0 0.0
    %3853 = vmatprep.subr.mxu0 0.0
    %3854 = vmatpush2.msra.mxu0 0.0
    %3855 = vmatprep.subr.mxu0 0.0
    %3856 = vmatpush2.msra.mxu0 0.0
    %3857 = vmatprep.subr.mxu0 0.0
    %3858 = vmatpush2.msra.mxu0 0.0
    %3859 = vmatprep.subr.mxu0 0.0
    %3860 = vmatpush2.msra.mxu0 0.0
    %3861 = vmatprep.subr.mxu0 0.0
    %3862 = vmatpush2.msra.mxu0 0.0
    %3863 = vmatprep.subr.mxu0 0.0
    %3864 = vmatpush2.msra.mxu0 0.0
    %3865 = vmatprep.subr.mxu0 0.0
    %3866 = vmatpush2.msra.mxu0 0.0
    %3867 = vmatprep.subr.mxu0 0.0
    %3868 = vmatpush2.msra.mxu0 0.0
    %3869 = vmatprep.subr.mxu0 0.0
    %3870 = vmatpush2.msra.mxu0 0.0
    %3871 = vmatprep.subr.mxu0 0.0
    %3872 = vmatpush2.msra.mxu0 0.0
    %3873 = vmatprep.subr.mxu0 0.0
    %3874 = vmatpush2.msra.mxu0 0.0
    %3875 = vmatprep.subr.mxu0 0.0
    %3876 = vmatpush2.msra.mxu0 0.0
    %3877 = vmatprep.subr.mxu0 0.0
    %3878 = vmatpush2.msra.mxu0 0.0
    %3879 = vmatprep.subr.mxu0 0.0
    %3880 = vmatpush2.msra.mxu0 0.0
    %3881 = vmatprep.subr.mxu0 0.0
    %3882 = vmatpush2.msra.mxu0 0.0
    %3883 = vmatprep.mubr.f32.mxu0 0.0
    %3884 = vmatmul.mubr.f32.gmra.mxu0 %v3808
    %v3885 = vpop.f32.mrf.mxu0
    %v3886 = vadd.f32 %v3790, %v3885
    %v3887 = vpop.f32.mrf.mxu0
    %v3888 = vadd.f32 %v3790, %v3887
    %3889 = vmatprep.mubr.f32.mxu0 0.0
    %3890 = vmatmul.mubr.f32.gmra.mxu0 %v3811
    %v3891 = vpop.f32.mrf.mxu0
    %v3892 = vadd.f32 %v3795, %v3891
    %v3893 = vpop.f32.mrf.mxu0
    %v3894 = vadd.f32 %v3795, %v3893
    %3895 = vmatprep.mubr.f32.mxu0 0.0
    %3896 = vmatmul.mubr.f32.gmra.mxu0 %v3814
    %v3897 = vpop.f32.mrf.mxu0
    %v3898 = vadd.f32 %v3800, %v3897
    %v3899 = vpop.f32.mrf.mxu0
    %v3900 = vadd.f32 %v3800, %v3899
    %3901 = vmatprep.mubr.f32.mxu0 0.0
    %3902 = vmatmul.mubr.f32.gmra.mxu0 %v3817
    %v3903 = vpop.f32.mrf.mxu0
    %v3904 = vadd.f32 %v3805, %v3903
    %v3905 = vpop.f32.mrf.mxu0
    %v3906 = vadd.f32 %v3805, %v3905
    %3907 = vdwg.mxu0
    %v3908 = vadd.f32 %v3518, %v3886
    %v3909 = vadd.f32 %v3519, %v3888
    %v3910 = vadd.f32 %v3520, %v3892
    %v3911 = vadd.f32 %v3521, %v3894
    %v3912 = vadd.f32 %v3522, %v3898
    %v3913 = vadd.f32 %v3523, %v3900
    %v3914 = vadd.f32 %v3524, %v3904
    %v3915 = vadd.f32 %v3525, %v3906
    %s3916 = scalar_lea.vmem %s15, 8
    %v3917 = vld [vmem:[%s3916] sm:$0xff]
    %s3918 = scalar_lea.vmem %s16, 8
    %v3919 = vld [vmem:[%s3918] sm:$0xff]
    %3921 = vset.pattern.permute.xlu0 0
    %3922 = vperm.xlu0 %3921, %v3919
    %v3923 = vpop.permute.xlu0 %3922
    %v3926 = vsel %vm499, %v3917, 0
    %3928 = vmatprep.subr.mxu0 0.0
    %3929 = vmatpush1.msra.mxu0 0.0
    %3930 = vmatprep.subr.mxu0 0.0
    %3931 = vmatpush1.msra.mxu0 0.0
    %3932 = vmatprep.subr.mxu0 0.0
    %3933 = vmatpush1.msra.mxu0 0.0
    %3934 = vmatprep.subr.mxu0 0.0
    %3935 = vmatpush1.msra.mxu0 0.0
    %3936 = vmatprep.subr.mxu0 0.0
    %3937 = vmatpush1.msra.mxu0 0.0
    %3938 = vmatprep.subr.mxu0 0.0
    %3939 = vmatpush1.msra.mxu0 0.0
    %3940 = vmatprep.subr.mxu0 0.0
    %3941 = vmatpush1.msra.mxu0 0.0
    %3942 = vmatprep.subr.mxu0 0.0
    %3943 = vmatpush1.msra.mxu0 0.0
    %3944 = vmatprep.subr.mxu0 0.0
    %3945 = vmatpush1.msra.mxu0 0.0
    %3946 = vmatprep.subr.mxu0 0.0
    %3947 = vmatpush1.msra.mxu0 0.0
    %3948 = vmatprep.subr.mxu0 0.0
    %3949 = vmatpush1.msra.mxu0 0.0
    %3950 = vmatprep.subr.mxu0 0.0
    %3951 = vmatpush1.msra.mxu0 0.0
    %3952 = vmatprep.subr.mxu0 %v3915
    %3953 = vmatpush1.msra.mxu0 %v3914
    %3954 = vmatprep.subr.mxu0 %v3913
    %3955 = vmatpush1.msra.mxu0 %v3912
    %3956 = vmatprep.subr.mxu0 %v3911
    %3957 = vmatpush1.msra.mxu0 %v3910
    %3958 = vmatprep.subr.mxu0 %v3909
    %3959 = vmatpush1.msra.mxu0 %v3908
    %3960 = vmatprep.subr.mxu0 0.0
    %3961 = vmatpush2.msra.mxu0 0.0
    %3962 = vmatprep.subr.mxu0 0.0
    %3963 = vmatpush2.msra.mxu0 0.0
    %3964 = vmatprep.subr.mxu0 0.0
    %3965 = vmatpush2.msra.mxu0 0.0
    %3966 = vmatprep.subr.mxu0 0.0
    %3967 = vmatpush2.msra.mxu0 0.0
    %3968 = vmatprep.subr.mxu0 0.0
    %3969 = vmatpush2.msra.mxu0 0.0
    %3970 = vmatprep.subr.mxu0 0.0
    %3971 = vmatpush2.msra.mxu0 0.0
    %3972 = vmatprep.subr.mxu0 0.0
    %3973 = vmatpush2.msra.mxu0 0.0
    %3974 = vmatprep.subr.mxu0 0.0
    %3975 = vmatpush2.msra.mxu0 0.0
    %3976 = vmatprep.subr.mxu0 0.0
    %3977 = vmatpush2.msra.mxu0 0.0
    %3978 = vmatprep.subr.mxu0 0.0
    %3979 = vmatpush2.msra.mxu0 0.0
    %3980 = vmatprep.subr.mxu0 0.0
    %3981 = vmatpush2.msra.mxu0 0.0
    %3982 = vmatprep.subr.mxu0 0.0
    %3983 = vmatpush2.msra.mxu0 0.0
    %3984 = vmatprep.subr.mxu0 0.0
    %3985 = vmatpush2.msra.mxu0 0.0
    %3986 = vmatprep.subr.mxu0 0.0
    %3987 = vmatpush2.msra.mxu0 0.0
    %3988 = vmatprep.subr.mxu0 0.0
    %3989 = vmatpush2.msra.mxu0 0.0
    %3990 = vmatprep.subr.mxu0 0.0
    %3991 = vmatpush2.msra.mxu0 0.0
    %3992 = vmatprep.mubr.f32.mxu0 0.0
    %3993 = vmatmul.mubr.f32.gmra.mxu0 %v3926
    %v3994 = vpop.f32.mrf.mxu0
    %v3995 = vadd.f32 %v3923, %v3994
    %v3996 = vpop.f32.mrf.mxu0
    %v3997 = vadd.f32 %v3923, %v3996
    %3998 = vdwg.mxu0
    %v3999 = vsel %vm1937, %v3995, 0.0
    %v4000 = vsel %vm1937, %v3997, 0.0
    %s4001 = scalar_lea.vmem [#allocation3], 32
    %4002 = vst [vmem:[%s4001] sm:$0xff] %v3999
    %s4003 = scalar_lea.vmem [#allocation3], 40
    %4004 = vst [vmem:[%s4003] sm:$0xff] %v4000
    // Predicated region
    $region70: #{multi_stage_refined_tcn.1} parent=1 // pred_check
      _
    $region71: #{multi_stage_refined_tcn.1} parent=1 // pred_check_branch
      %4006 = sbr.rel (0) target = $region73
    $region72: #{multi_stage_refined_tcn.1} parent=1 // pred_region
      %s4008 = ssub.s32 768, 768
      %4009 = vsyncadd [#allocation4], %s4008
      %s4010 = sshll.u32 [#allocation3], 4
      %s4011 = int_to_ptr.vmem [resolvable:$true] %s4010
      %4016 = dma.vmem_to_hbm [thread:$0]  %s4011, 768, %s17, [#allocation4], 128, 128, 8
    $region73: #{multi_stage_refined_tcn.1} parent=1 // pred_fallthru
      _
    // Predicated region
    $region74: #{multi_stage_refined_tcn.1} parent=1 // pred_check
      _
    $region75: #{multi_stage_refined_tcn.1} parent=1 // pred_check_branch
      %4018 = sbr.rel (0) target = $region77
    $region76: #{multi_stage_refined_tcn.1} parent=1 // pred_region
      %4019 = dma.done [#allocation4], 768
    $region77: #{multi_stage_refined_tcn.1} parent=1 // pred_fallthru
      _
    %4020 = vsyncpa [#allocation4], 1

</llo_original>
